<compile_context>
chip_gen: v5e
topology: v5e:2x2
jax: 0.10.0
libtpu: 0.0.40
codegen_flags: <defaults>
</compile_context>

<pallas_src>
import jax
import jax.numpy as jnp
import numpy as np
from jax import lax
from jax.experimental import pallas as pl
from jax.experimental.pallas import tpu as pltpu


def fused_cnn_kernel(x_ref, wq_ref, bconv_ref, wfc_ref, bfc_ref, out_ref):
    """Fused conv(3x3) + ReLU + maxpool(2x2) + Linear for one batch tile.

    x_ref    : (B_TILE, C*H*W)        flattened input images
    wq_ref   : (4, C*H*W, F)          conv-as-matmul weights, one per pool quadrant
    bconv_ref: (1, F)                 conv bias broadcast to the (ip, jp, o) layout
    wfc_ref  : (F, 128)               FC weight, permuted + lane-padded
    bfc_ref  : (1, 128)               FC bias, lane-padded
    out_ref  : (B_TILE, 128)          logits (columns >= num_classes are zero)
    """
    x = x_ref[...]                                                     # (B, CHW)
    # conv at the 4 pooling quadrant positions + running max  (all MXU work).
    m = jnp.dot(x, wq_ref[0], preferred_element_type=jnp.float32)      # (B, F)
    for q in range(1, 4):
        m = jnp.maximum(m, jnp.dot(x, wq_ref[q],
                                   preferred_element_type=jnp.float32))
    # bias + ReLU (ReLU commutes with the max over quadrants).
    pooled = jnp.maximum(m + bconv_ref[...], 0.0)                      # (B, F)
    # fused fully-connected layer, lane-dense 128-wide output block.
    out_ref[...] = (jnp.dot(pooled, wfc_ref[...],
                            preferred_element_type=jnp.float32)
                    + bfc_ref[...])


def _conv_pool_quadrant_matrices(w_conv, C, H, W):
    """Weight preprocessing (activation-independent, done once per weights).

    Builds, for each 2x2-pool quadrant (qi, qj), a dense matrix Wq of shape
    (C*H*W, Hp*Wp*Cout) with
        (x.reshape(B, C*H*W) @ Wq)[b, (ip*Wp + jp)*Cout + o]
            == conv2d_valid(x, w_conv)[b, o, 2*ip + qi, 2*jp + qj].
    Built by pushing the identity basis through the (linear) convolution.
    """
    Cout, _, KH, KW = w_conv.shape
    Ho, Wo = H - KH + 1, W - KW + 1
    Hp, Wp = Ho // 2, Wo // 2
    eye = jnp.eye(C * H * W, dtype=jnp.float32).reshape(C * H * W, C, H, W)
    basis = lax.conv_general_dilated(
        eye, w_conv.astype(jnp.float32), window_strides=(1, 1), padding="VALID",
        dimension_numbers=("NCHW", "OIHW", "NCHW"))       # (CHW, Cout, Ho, Wo)
    mats = []
    for qi in range(2):
        for qj in range(2):
            q = basis[:, :, qi:qi + 2 * Hp:2, qj:qj + 2 * Wp:2]  # (CHW, Cout, Hp, Wp)
            q = jnp.transpose(q, (0, 2, 3, 1)).reshape(C * H * W, Hp * Wp * Cout)
            mats.append(q)
    return jnp.stack(mats, axis=0), Hp, Wp                # (4, CHW, Hp*Wp*Cout)


def cnn_forward(x, w_conv, b_conv, w_fc, b_fc, *, b_tile=128):
    """Pallas implementation of CNN.forward (conv -> relu -> maxpool -> linear).

    x      : (N, C, H, W)               float32, NCHW (PyTorch convention)
    w_conv : (Cout, C, KH, KW)          PyTorch OIHW conv weight
    b_conv : (Cout,)
    w_fc   : (num_classes, Cout*Hp*Wp)  PyTorch Linear weight (NCHW flatten order)
    b_fc   : (num_classes,)
    returns: (N, num_classes) logits
    """
    N, C, H, W = x.shape
    Cout = w_conv.shape[0]
    num_classes = w_fc.shape[0]

    wq, Hp, Wp = _conv_pool_quadrant_matrices(w_conv, C, H, W)
    CHW = C * H * W
    F = Hp * Wp * Cout
    NC_PAD = 128          # lane-dense logits block; sliced to num_classes below

    # conv bias broadcast to the pooled-flat (ip, jp, o) layout (o fastest).
    b_conv_flat = jnp.tile(b_conv.astype(jnp.float32), Hp * Wp).reshape(1, F)

    # FC weight: PyTorch flattens NCHW i.e. (o, ip, jp); ours is (ip, jp, o).
    w_fc_perm = (w_fc.astype(jnp.float32)
                 .reshape(num_classes, Cout, Hp, Wp)
                 .transpose(0, 2, 3, 1)
                 .reshape(num_classes, F)).T                      # (F, num_classes)
    w_fc_pad = jnp.zeros((F, NC_PAD), jnp.float32).at[:, :num_classes].set(w_fc_perm)
    b_fc_pad = jnp.zeros((1, NC_PAD), jnp.float32).at[:, :num_classes].set(
        b_fc.astype(jnp.float32)[None, :])

    # Batch tiling: multiple-of-8 sublanes, up to 128 images per grid step.
    B_TILE = min(b_tile, ((N + 7) // 8) * 8)
    B_TILE = max(8, (B_TILE // 8) * 8)
    N_pad = ((N + B_TILE - 1) // B_TILE) * B_TILE
    x_flat = x.astype(jnp.float32).reshape(N, CHW)
    if N_pad != N:
        x_flat = jnp.pad(x_flat, ((0, N_pad - N), (0, 0)))

    out_pad = pl.pallas_call(
        fused_cnn_kernel,
        out_shape=jax.ShapeDtypeStruct((N_pad, NC_PAD), jnp.float32),
        grid_spec=pltpu.PrefetchScalarGridSpec(
            num_scalar_prefetch=0,
            grid=(N_pad // B_TILE,),
            in_specs=[
                pl.BlockSpec((B_TILE, CHW), lambda n: (n, 0)),
                pl.BlockSpec((4, CHW, F), lambda n: (0, 0, 0)),   # block-invariant
                pl.BlockSpec((1, F), lambda n: (0, 0)),
                pl.BlockSpec((F, NC_PAD), lambda n: (0, 0)),
                pl.BlockSpec((1, NC_PAD), lambda n: (0, 0)),
            ],
            out_specs=pl.BlockSpec((B_TILE, NC_PAD), lambda n: (n, 0)),
        ),
        compiler_params=pltpu.CompilerParams(
            dimension_semantics=("parallel",),        # batch axis -> both TCs on v7x
            vmem_limit_bytes=48 * 1024 * 1024),
    )(x_flat, wq, b_conv_flat, w_fc_pad, b_fc_pad)

    return out_pad[:N, :num_classes]


def cnn_forward_reference(x, w_conv, b_conv, w_fc, b_fc):
    """Pure-JAX reference mirroring the PyTorch module."""
    conv = lax.conv_general_dilated(
        x, w_conv, window_strides=(1, 1), padding="VALID",
        dimension_numbers=("NCHW", "OIHW", "NCHW"))
    conv = conv + b_conv[None, :, None, None]
    relu = jnp.maximum(conv, 0.0)
    pooled = lax.reduce_window(relu, -jnp.inf, lax.max,
                               (1, 1, 2, 2), (1, 1, 2, 2), "VALID")
    flat = pooled.reshape(x.shape[0], -1)          # NCHW flatten, like PyTorch
    return flat @ w_fc.T + b_fc[None, :]


if __name__ == "__main__":
    # Small shapes consistent with the module: CNN(image_size=16, in_channels=1)
    N, C, H = 2, 1, 16
    Cout, K = 32, 3
    Ho = H - K + 1                 # 14
    Hp = Ho // 2                   # 7
    num_classes = 10
    F = Cout * Hp * Hp             # flattened_size = 32 * 7 * 7 = 1568

    key = jax.random.PRNGKey(0)
    kx, kw1, kb1, kw2, kb2 = jax.random.split(key, 5)
    x = jax.random.normal(kx, (N, C, H, H), dtype=jnp.float32)
    w_conv = 0.1 * jax.random.normal(kw1, (Cout, C, K, K), dtype=jnp.float32)
    b_conv = 0.1 * jax.random.normal(kb1, (Cout,), dtype=jnp.float32)
    w_fc = 0.05 * jax.random.normal(kw2, (num_classes, F), dtype=jnp.float32)
    b_fc = 0.05 * jax.random.normal(kb2, (num_classes,), dtype=jnp.float32)

    fwd = jax.jit(cnn_forward)
    out = jax.block_until_ready(fwd(x, w_conv, b_conv, w_fc, b_fc))

    ref = jax.block_until_ready(
        cnn_forward_reference(x, w_conv, b_conv, w_fc, b_fc))
    np.testing.assert_allclose(np.asarray(out), np.asarray(ref),
                               rtol=1e-3, atol=1e-3)
    assert out.shape == (N, num_classes)

    print("KERNEL_OK")
</pallas_src>

<mosaic_0001>
module attributes {stable_mosaic.version = 11 : i64} {
  func.func @fused_cnn_kernel(%arg0: i32, %arg1: memref<8x256xf32, #tpu.memory_space<vmem>>, %arg2: memref<4x256x1568xf32, #tpu.memory_space<vmem>>, %arg3: memref<1x1568xf32, #tpu.memory_space<vmem>>, %arg4: memref<1568x128xf32, #tpu.memory_space<vmem>>, %arg5: memref<1x128xf32, #tpu.memory_space<vmem>>, %arg6: memref<8x128xf32, #tpu.memory_space<vmem>>) attributes {dimension_semantics = [#tpu.dimension_semantics<parallel>], iteration_bounds = array<i64: 1>, scalar_prefetch = 0 : i64, scratch_operands = 0 : i64, tpu.core_type = #tpu.core_type<tc>, window_params = [{transform_indices = @transform_0, window_bounds = array<i64: 8, 256>}, {pipeline_mode = #tpu.pipeline_mode<synchronous>, transform_indices = @transform_1, window_bounds = array<i64: 4, 256, 1568>}, {pipeline_mode = #tpu.pipeline_mode<synchronous>, transform_indices = @transform_2, window_bounds = array<i64: 1, 1568>}, {pipeline_mode = #tpu.pipeline_mode<synchronous>, transform_indices = @transform_3, window_bounds = array<i64: 1568, 128>}, {pipeline_mode = #tpu.pipeline_mode<synchronous>, transform_indices = @transform_4, window_bounds = array<i64: 1, 128>}, {transform_indices = @transform_5, window_bounds = array<i64: 8, 128>}]} {
    %c0 = arith.constant 0 : index
    %c0_0 = arith.constant 0 : index
    %0 = vector.load %arg1[%c0, %c0_0] : memref<8x256xf32, #tpu.memory_space<vmem>>, vector<8x256xf32>
    %c0_1 = arith.constant 0 : index
    %c0_2 = arith.constant 0 : index
    %c0_3 = arith.constant 0 : index
    %1 = vector.load %arg2[%c0_1, %c0_2, %c0_3] : memref<4x256x1568xf32, #tpu.memory_space<vmem>>, vector<1x256x1568xf32>
    %2 = vector.shape_cast %1 : vector<1x256x1568xf32> to vector<256x1568xf32>
    %cst = arith.constant dense<0.000000e+00> : vector<8x1568xf32>
    %3 = tpu.matmul %0, %2, %cst {dimension_numbers = #tpu.dot_dimension_numbers<[1], [0], [0], [1], [0, 0, 1, 1], [], []>} : vector<8x256xf32>, vector<256x1568xf32>, vector<8x1568xf32> -> vector<8x1568xf32>
    %c1 = arith.constant 1 : index
    %c0_4 = arith.constant 0 : index
    %c0_5 = arith.constant 0 : index
    %4 = vector.load %arg2[%c1, %c0_4, %c0_5] : memref<4x256x1568xf32, #tpu.memory_space<vmem>>, vector<1x256x1568xf32>
    %5 = vector.shape_cast %4 : vector<1x256x1568xf32> to vector<256x1568xf32>
    %cst_6 = arith.constant dense<0.000000e+00> : vector<8x1568xf32>
    %6 = tpu.matmul %0, %5, %cst_6 {dimension_numbers = #tpu.dot_dimension_numbers<[1], [0], [0], [1], [0, 0, 1, 1], [], []>} : vector<8x256xf32>, vector<256x1568xf32>, vector<8x1568xf32> -> vector<8x1568xf32>
    %7 = arith.maximumf %3, %6 : vector<8x1568xf32>
    %c2 = arith.constant 2 : index
    %c0_7 = arith.constant 0 : index
    %c0_8 = arith.constant 0 : index
    %8 = vector.load %arg2[%c2, %c0_7, %c0_8] : memref<4x256x1568xf32, #tpu.memory_space<vmem>>, vector<1x256x1568xf32>
    %9 = vector.shape_cast %8 : vector<1x256x1568xf32> to vector<256x1568xf32>
    %cst_9 = arith.constant dense<0.000000e+00> : vector<8x1568xf32>
    %10 = tpu.matmul %0, %9, %cst_9 {dimension_numbers = #tpu.dot_dimension_numbers<[1], [0], [0], [1], [0, 0, 1, 1], [], []>} : vector<8x256xf32>, vector<256x1568xf32>, vector<8x1568xf32> -> vector<8x1568xf32>
    %11 = arith.maximumf %7, %10 : vector<8x1568xf32>
    %c3 = arith.constant 3 : index
    %c0_10 = arith.constant 0 : index
    %c0_11 = arith.constant 0 : index
    %12 = vector.load %arg2[%c3, %c0_10, %c0_11] : memref<4x256x1568xf32, #tpu.memory_space<vmem>>, vector<1x256x1568xf32>
    %13 = vector.shape_cast %12 : vector<1x256x1568xf32> to vector<256x1568xf32>
    %cst_12 = arith.constant dense<0.000000e+00> : vector<8x1568xf32>
    %14 = tpu.matmul %0, %13, %cst_12 {dimension_numbers = #tpu.dot_dimension_numbers<[1], [0], [0], [1], [0, 0, 1, 1], [], []>} : vector<8x256xf32>, vector<256x1568xf32>, vector<8x1568xf32> -> vector<8x1568xf32>
    %15 = arith.maximumf %11, %14 : vector<8x1568xf32>
    %c0_13 = arith.constant 0 : index
    %c0_14 = arith.constant 0 : index
    %16 = vector.load %arg3[%c0_13, %c0_14] : memref<1x1568xf32, #tpu.memory_space<vmem>>, vector<1x1568xf32>
    %17 = vector.broadcast %16 : vector<1x1568xf32> to vector<8x1568xf32>
    %18 = arith.addf %15, %17 : vector<8x1568xf32>
    %cst_15 = arith.constant 0.000000e+00 : f32
    %19 = vector.broadcast %cst_15 : f32 to vector<8x1568xf32>
    %20 = arith.maximumf %18, %19 : vector<8x1568xf32>
    %c0_16 = arith.constant 0 : index
    %c0_17 = arith.constant 0 : index
    %21 = vector.load %arg4[%c0_16, %c0_17] : memref<1568x128xf32, #tpu.memory_space<vmem>>, vector<1568x128xf32>
    %cst_18 = arith.constant dense<0.000000e+00> : vector<8x128xf32>
    %22 = tpu.matmul %20, %21, %cst_18 {dimension_numbers = #tpu.dot_dimension_numbers<[1], [0], [0], [1], [0, 0, 1, 1], [], []>} : vector<8x1568xf32>, vector<1568x128xf32>, vector<8x128xf32> -> vector<8x128xf32>
    %c0_19 = arith.constant 0 : index
    %c0_20 = arith.constant 0 : index
    %23 = vector.load %arg5[%c0_19, %c0_20] : memref<1x128xf32, #tpu.memory_space<vmem>>, vector<1x128xf32>
    %24 = vector.broadcast %23 : vector<1x128xf32> to vector<8x128xf32>
    %25 = arith.addf %22, %24 : vector<8x128xf32>
    %c0_21 = arith.constant 0 : index
    %c0_22 = arith.constant 0 : index
    %26 = vector.load %arg6[%c0_21, %c0_22] : memref<8x128xf32, #tpu.memory_space<vmem>>, vector<8x128xf32>
    tpu.vector_store %arg6[%c0_21, %c0_22], %25 {strides = array<i32>} : memref<8x128xf32, #tpu.memory_space<vmem>>, vector<8x128xf32>,
    return
  }
  func.func @transform_0(%arg0: i32) -> (i32, i32) {
    %c0_i32 = arith.constant 0 : i32
    %c0_i32_0 = arith.constant 0 : i32
    return %arg0, %c0_i32 : i32, i32
  }
  func.func @transform_1(%arg0: i32) -> (i32, i32, i32) {
    %c0_i32 = arith.constant 0 : i32
    %c0_i32_0 = arith.constant 0 : i32
    %c0_i32_1 = arith.constant 0 : i32
    %c0_i32_2 = arith.constant 0 : i32
    return %c0_i32, %c0_i32_0, %c0_i32_1 : i32, i32, i32
  }
  func.func @transform_2(%arg0: i32) -> (i32, i32) {
    %c0_i32 = arith.constant 0 : i32
    %c0_i32_0 = arith.constant 0 : i32
    %c0_i32_1 = arith.constant 0 : i32
    return %c0_i32, %c0_i32_0 : i32, i32
  }
  func.func @transform_3(%arg0: i32) -> (i32, i32) {
    %c0_i32 = arith.constant 0 : i32
    %c0_i32_0 = arith.constant 0 : i32
    %c0_i32_1 = arith.constant 0 : i32
    return %c0_i32, %c0_i32_0 : i32, i32
  }
  func.func @transform_4(%arg0: i32) -> (i32, i32) {
    %c0_i32 = arith.constant 0 : i32
    %c0_i32_0 = arith.constant 0 : i32
    %c0_i32_1 = arith.constant 0 : i32
    return %c0_i32, %c0_i32_0 : i32, i32
  }
  func.func @transform_5(%arg0: i32) -> (i32, i32) {
    %c0_i32 = arith.constant 0 : i32
    %c0_i32_0 = arith.constant 0 : i32
    return %arg0, %c0_i32 : i32, i32
  }
}

</mosaic_0001>

<llo_original>
// kernel: tile.8
$region0: #{tile.8}
  #allocation0 [shape = 's32[1]{0}', space=sflag, size = 0x4, scoped, tag = 'scoped memory for tile.8']
  %s0 = inlined_call_operand.vmem [shape: f32[32], index: 0, kind: input, shape index: {}]
  %s1 = inlined_call_operand.vmem [shape: f32[49,32], index: 1, kind: output, shape index: {}]
  // Predicated region
  $region2: #{tile.8} parent=0 // pred_check
    _
  $region3: #{tile.8} parent=0 // pred_check_branch
    %3 = sbr.rel (0) target = $region5
  $region4: #{tile.8} parent=0 // pred_region
    _
  $region5: #{tile.8} parent=0 // pred_fallthru
    _
  %v4 = vld [vmem:[%s0] ss:$0 sm:$0xff]
  %5 = vst [vmem:[%s1] sm:$0xff] %v4
  %s6 = scalar_lea.vmem %s1, 8
  %7 = vst [vmem:[%s6] sm:$0xff] %v4
  %s8 = scalar_lea.vmem %s1, 16
  %9 = vst [vmem:[%s8] sm:$0xff] %v4
  %s10 = scalar_lea.vmem %s1, 24
  %11 = vst [vmem:[%s10] sm:$0xff] %v4
  %s12 = scalar_lea.vmem %s1, 32
  %13 = vst [vmem:[%s12] sm:$0xff] %v4
  %s14 = scalar_lea.vmem %s1, 40
  %15 = vst [vmem:[%s14] sm:$0xff] %v4
  %s16 = scalar_lea.vmem %s1, 48
  %17 = vst [vmem:[%s16] sm:$0xff] %v4

// kernel: tile.9
$region0: #{tile.9}
  %s0 = inlined_call_operand.vmem [shape: f32[49,32], index: 0, kind: input, shape index: {}]
  %s1 = inlined_call_operand.vmem [shape: f32[1,1568], index: 1, kind: output, shape index: {}]
  $region1: #{tile.9} parent=0
    #allocation0 [shape = 'u8[53248]{0}', space=vmem, size = 0xd000, scoped, tag = 'scoped mem for output reshape']
    %v2 = vld [vmem:[%s0] ss:$4 sm:$0xff]
    %vm3 = vcmask 261120
    %4 = vst.msk [vmem:[#allocation0] ss:$8 sm:$0xf] %vm3, %v2
    %5 = vst.msk [vmem:[#allocation0] ss:$8 sm:$0xf0] %vm3, %v2
    %s6 = scalar_lea.vmem %s0, 32
    %v7 = vld [vmem:[%s6] ss:$4 sm:$0x1f]
    %vm8 = vcmask 261120
    %s9 = scalar_lea.vmem [#allocation0], 64
    %10 = vst.msk [vmem:[%s9] ss:$8 sm:$0xf] %vm8, %v7
    %s11 = scalar_lea.vmem [#allocation0], 92
    %12 = vst.msk [vmem:[%s11] sm:$0x10] %vm8, %v7
    %s13 = scalar_lea.vmem %s0, 3
    %v14 = vld [vmem:[%s13] ss:$4 sm:$0xff]
    %15 = vrot.lane.b32.xlu0 %v14, 96
    %v16 = vpop.permute.xlu0 %15
    %vm17 = vcmask 1048320
    %18 = vst.msk [vmem:[#allocation0] ss:$8 sm:$0xf] %vm17, %v16
    %19 = vst.msk [vmem:[#allocation0] ss:$8 sm:$0xf0] %vm17, %v16
    %s20 = scalar_lea.vmem %s0, 35
    %v21 = vld [vmem:[%s20] ss:$4 sm:$0xf]
    %22 = vrot.lane.b32.xlu0 %v21, 96
    %v23 = vpop.permute.xlu0 %22
    %vm24 = vcmask 1048320
    %s25 = scalar_lea.vmem [#allocation0], 64
    %26 = vst.msk [vmem:[%s25] ss:$8 sm:$0xf] %vm24, %v23
    %s27 = scalar_lea.vmem %s0, 2
    %v28 = vld [vmem:[%s27] ss:$4 sm:$0xff]
    %29 = vrot.lane.b32.xlu0 %v28, 64
    %v30 = vpop.permute.xlu0 %29
    %vm31 = vcmask 785920
    %32 = vst.msk [vmem:[#allocation0] ss:$8 sm:$0xf] %vm31, %v30
    %33 = vst.msk [vmem:[#allocation0] ss:$8 sm:$0xf0] %vm31, %v30
    %s34 = scalar_lea.vmem %s0, 34
    %v35 = vld [vmem:[%s34] ss:$4 sm:$0xf]
    %36 = vrot.lane.b32.xlu0 %v35, 64
    %v37 = vpop.permute.xlu0 %36
    %vm38 = vcmask 785920
    %s39 = scalar_lea.vmem [#allocation0], 64
    %40 = vst.msk [vmem:[%s39] ss:$8 sm:$0xf] %vm38, %v37
    %s41 = scalar_lea.vmem %s0, 1
    %v42 = vld [vmem:[%s41] ss:$4 sm:$0xff]
    %43 = vrot.lane.b32.xlu0 %v42, 32
    %v44 = vpop.permute.xlu0 %43
    %vm45 = vcmask 523520
    %46 = vst.msk [vmem:[#allocation0] ss:$8 sm:$0xf] %vm45, %v44
    %47 = vst.msk [vmem:[#allocation0] ss:$8 sm:$0xf0] %vm45, %v44
    %s48 = scalar_lea.vmem %s0, 33
    %v49 = vld [vmem:[%s48] ss:$4 sm:$0xf]
    %50 = vrot.lane.b32.xlu0 %v49, 32
    %v51 = vpop.permute.xlu0 %50
    %vm52 = vcmask 523520
    %s53 = scalar_lea.vmem [#allocation0], 64
    %54 = vst.msk [vmem:[%s53] ss:$8 sm:$0xf] %vm52, %v51
    %s56 = ssub.s32 2, 1
    %v57 = vld [vmem:[#allocation0] sm:%s56]
    %s59 = ssub.s32 2, 1
    %60 = vst [vmem:[%s1] sm:%s59] %v57
    %s61 = scalar_lea.vmem [#allocation0], 8
    %v62 = vld [vmem:[%s61] sm:%s56]
    %s64 = ssub.s32 2, 1
    %s65 = scalar_lea.vmem %s1, 1
    %66 = vst [vmem:[%s65] sm:%s64] %v62
    %s67 = scalar_lea.vmem [#allocation0], 16
    %v68 = vld [vmem:[%s67] sm:%s56]
    %s70 = ssub.s32 2, 1
    %s71 = scalar_lea.vmem %s1, 2
    %72 = vst [vmem:[%s71] sm:%s70] %v68
    %s73 = scalar_lea.vmem [#allocation0], 24
    %v74 = vld [vmem:[%s73] sm:%s56]
    %s76 = ssub.s32 2, 1
    %s77 = scalar_lea.vmem %s1, 3
    %78 = vst [vmem:[%s77] sm:%s76] %v74
    %s79 = scalar_lea.vmem [#allocation0], 32
    %v80 = vld [vmem:[%s79] sm:%s56]
    %s82 = ssub.s32 2, 1
    %s83 = scalar_lea.vmem %s1, 4
    %84 = vst [vmem:[%s83] sm:%s82] %v80
    %s85 = scalar_lea.vmem [#allocation0], 40
    %v86 = vld [vmem:[%s85] sm:%s56]
    %s88 = ssub.s32 2, 1
    %s89 = scalar_lea.vmem %s1, 5
    %90 = vst [vmem:[%s89] sm:%s88] %v86
    %s91 = scalar_lea.vmem [#allocation0], 48
    %v92 = vld [vmem:[%s91] sm:%s56]
    %s94 = ssub.s32 2, 1
    %s95 = scalar_lea.vmem %s1, 6
    %96 = vst [vmem:[%s95] sm:%s94] %v92
    %s97 = scalar_lea.vmem [#allocation0], 56
    %v98 = vld [vmem:[%s97] sm:%s56]
    %s100 = ssub.s32 2, 1
    %s101 = scalar_lea.vmem %s1, 7
    %102 = vst [vmem:[%s101] sm:%s100] %v98
    %s103 = scalar_lea.vmem [#allocation0], 64
    %v104 = vld [vmem:[%s103] sm:%s56]
    %s106 = ssub.s32 2, 1
    %s107 = scalar_lea.vmem %s1, 8
    %108 = vst [vmem:[%s107] sm:%s106] %v104
    %s109 = scalar_lea.vmem [#allocation0], 72
    %v110 = vld [vmem:[%s109] sm:%s56]
    %s112 = ssub.s32 2, 1
    %s113 = scalar_lea.vmem %s1, 9
    %114 = vst [vmem:[%s113] sm:%s112] %v110
    %s115 = scalar_lea.vmem [#allocation0], 80
    %v116 = vld [vmem:[%s115] sm:%s56]
    %s118 = ssub.s32 2, 1
    %s119 = scalar_lea.vmem %s1, 10
    %120 = vst [vmem:[%s119] sm:%s118] %v116
    %s121 = scalar_lea.vmem [#allocation0], 88
    %v122 = vld [vmem:[%s121] sm:%s56]
    %s124 = ssub.s32 2, 1
    %s125 = scalar_lea.vmem %s1, 11
    %126 = vst [vmem:[%s125] sm:%s124] %v122
    %s127 = scalar_lea.vmem [#allocation0], 96
    %v128 = vld [vmem:[%s127] sm:%s56]
    %s130 = ssub.s32 2, 1
    %s131 = scalar_lea.vmem %s1, 12
    %132 = vst [vmem:[%s131] sm:%s130] %v128

// kernel: cnn_forward.1
$region0: #{cnn_forward.1}
  #allocation0 [shape = 'u32[]', space=smem, size = 0x4, offset = 0x4, fixed_abs, tag = 'smem constant byte address 0x4 - core index']
  #allocation1 [shape = 'u32[72,128]{1,0:T(1,128)}', space=vmem, size = 0x9000, scoped, tag = 'internal scratch']
  %s0 = inlined_call_operand.vmem [shape: f32[8,256], index: 0, kind: input, shape index: {}]
  %s1 = inlined_call_operand.vmem [shape: f32[4,256,1568], index: 1, kind: input, shape index: {}]
  %s2 = inlined_call_operand.vmem [shape: f32[1,1568], index: 2, kind: input, shape index: {}]
  %s3 = inlined_call_operand.vmem [shape: f32[1568,128], index: 3, kind: input, shape index: {}]
  %s4 = inlined_call_operand.vmem [shape: f32[1,128], index: 4, kind: input, shape index: {}]
  %s5 = inlined_call_operand.vmem [shape: f32[8,128], index: 5, kind: output, shape index: {}]
  %s6 = sld [smem:[#allocation0]]
  $region30: #{cnn_forward.1} parent=0
    _
  %s8 = ssub.s32 1, %s6
  %s9 = scalar_select 0, %s8, %s6
  // Predicated region
  $region2: #{cnn_forward.1} parent=0 // pred_check
    _
  $region3: #{cnn_forward.1} parent=0 // pred_check_branch
    %11 = sbr.rel (0) target = $region5
  $region4: #{cnn_forward.1} parent=0 // pred_region
    _
  $region5: #{cnn_forward.1} parent=0 // pred_fallthru
    _
  // Predicated region
  $region6: #{cnn_forward.1} parent=0 // pred_check
    _
  $region7: #{cnn_forward.1} parent=0 // pred_check_branch
    %13 = sbr.rel (0) target = $region9
  $region8: #{cnn_forward.1} parent=0 // pred_region
    _
  $region9: #{cnn_forward.1} parent=0 // pred_fallthru
    _
  // Predicated region
  $region10: #{cnn_forward.1} parent=0 // pred_check
    _
  $region11: #{cnn_forward.1} parent=0 // pred_check_branch
    %15 = sbr.rel (0) target = $region13
  $region12: #{cnn_forward.1} parent=0 // pred_region
    _
  $region13: #{cnn_forward.1} parent=0 // pred_fallthru
    _
  // Predicated region
  $region14: #{cnn_forward.1} parent=0 // pred_check
    _
  $region15: #{cnn_forward.1} parent=0 // pred_check_branch
    %17 = sbr.rel (0) target = $region17
  $region16: #{cnn_forward.1} parent=0 // pred_region
    _
  $region17: #{cnn_forward.1} parent=0 // pred_fallthru
    _
  // Predicated region
  $region18: #{cnn_forward.1} parent=0 // pred_check
    _
  $region19: #{cnn_forward.1} parent=0 // pred_check_branch
    %19 = sbr.rel (0) target = $region21
  $region20: #{cnn_forward.1} parent=0 // pred_region
    _
  $region21: #{cnn_forward.1} parent=0 // pred_fallthru
    _
  %v20 = vld [vmem:[%s0] sm:$0xff]
  %v21 = vld [vmem:[%s0 + $0x8] sm:$0xff]
  %v22 = vld [vmem:[%s1] sm:$0xff]
  %v23 = vld [vmem:[%s1 + $0x8] sm:$0xff]
  %v24 = vld [vmem:[%s1 + $0x10] sm:$0xff]
  %v25 = vld [vmem:[%s1 + $0x18] sm:$0xff]
  %v26 = vld [vmem:[%s1 + $0x20] sm:$0xff]
  %v27 = vld [vmem:[%s1 + $0x28] sm:$0xff]
  %v28 = vld [vmem:[%s1 + $0x30] sm:$0xff]
  %v29 = vld [vmem:[%s1 + $0x38] sm:$0xff]
  %v30 = vld [vmem:[%s1 + $0x40] sm:$0xff]
  %v31 = vld [vmem:[%s1 + $0x48] sm:$0xff]
  %v32 = vld [vmem:[%s1 + $0x50] sm:$0xff]
  %v33 = vld [vmem:[%s1 + $0x58] sm:$0xff]
  %v34 = vld [vmem:[%s1 + $0x60] sm:$0xff]
  %v35 = vld [vmem:[%s1 + $0x68] sm:$0xff]
  %v36 = vld [vmem:[%s1 + $0x70] sm:$0xff]
  %v37 = vld [vmem:[%s1 + $0x78] sm:$0xff]
  %v38 = vld [vmem:[%s1 + $0x80] sm:$0xff]
  %v39 = vld [vmem:[%s1 + $0x88] sm:$0xff]
  %v40 = vld [vmem:[%s1 + $0x90] sm:$0xff]
  %v41 = vld [vmem:[%s1 + $0x98] sm:$0xff]
  %v42 = vld [vmem:[%s1 + $0xa0] sm:$0xff]
  %v43 = vld [vmem:[%s1 + $0xa8] sm:$0xff]
  %v44 = vld [vmem:[%s1 + $0xb0] sm:$0xff]
  %v45 = vld [vmem:[%s1 + $0xb8] sm:$0xff]
  %v46 = vld [vmem:[%s1 + $0xc0] sm:$0xff]
  %v47 = vld [vmem:[%s1 + $0xc8] sm:$0xff]
  %v48 = vld [vmem:[%s1 + $0xd0] sm:$0xff]
  %v49 = vld [vmem:[%s1 + $0xd8] sm:$0xff]
  %v50 = vld [vmem:[%s1 + $0xe0] sm:$0xff]
  %v51 = vld [vmem:[%s1 + $0xe8] sm:$0xff]
  %v52 = vld [vmem:[%s1 + $0xf0] sm:$0xff]
  %v53 = vld [vmem:[%s1 + $0xf8] sm:$0xff]
  %v54 = vld [vmem:[%s1 + $0x100] sm:$0xff]
  %v55 = vld [vmem:[%s1 + $0x108] sm:$0xff]
  %v56 = vld [vmem:[%s1 + $0x110] sm:$0xff]
  %v57 = vld [vmem:[%s1 + $0x118] sm:$0xff]
  %v58 = vld [vmem:[%s1 + $0x120] sm:$0xff]
  %v59 = vld [vmem:[%s1 + $0x128] sm:$0xff]
  %v60 = vld [vmem:[%s1 + $0x130] sm:$0xff]
  %v61 = vld [vmem:[%s1 + $0x138] sm:$0xff]
  %v62 = vld [vmem:[%s1 + $0x140] sm:$0xff]
  %v63 = vld [vmem:[%s1 + $0x148] sm:$0xff]
  %v64 = vld [vmem:[%s1 + $0x150] sm:$0xff]
  %v65 = vld [vmem:[%s1 + $0x158] sm:$0xff]
  %v66 = vld [vmem:[%s1 + $0x160] sm:$0xff]
  %v67 = vld [vmem:[%s1 + $0x168] sm:$0xff]
  %v68 = vld [vmem:[%s1 + $0x170] sm:$0xff]
  %v69 = vld [vmem:[%s1 + $0x178] sm:$0xff]
  %v70 = vld [vmem:[%s1 + $0x180] sm:$0xff]
  %v71 = vld [vmem:[%s1 + $0x188] sm:$0xff]
  %v72 = vld [vmem:[%s1 + $0x190] sm:$0xff]
  %v73 = vld [vmem:[%s1 + $0x198] sm:$0xff]
  %v74 = vld [vmem:[%s1 + $0x1a0] sm:$0xff]
  %v75 = vld [vmem:[%s1 + $0x1a8] sm:$0xff]
  %v76 = vld [vmem:[%s1 + $0x1b0] sm:$0xff]
  %v77 = vld [vmem:[%s1 + $0x1b8] sm:$0xff]
  %v78 = vld [vmem:[%s1 + $0x1c0] sm:$0xff]
  %v79 = vld [vmem:[%s1 + $0x1c8] sm:$0xff]
  %v80 = vld [vmem:[%s1 + $0x1d0] sm:$0xff]
  %v81 = vld [vmem:[%s1 + $0x1d8] sm:$0xff]
  %v82 = vld [vmem:[%s1 + $0x1e0] sm:$0xff]
  %v83 = vld [vmem:[%s1 + $0x1e8] sm:$0xff]
  %v84 = vld [vmem:[%s1 + $0x1f0] sm:$0xff]
  %v85 = vld [vmem:[%s1 + $0x1f8] sm:$0xff]
  %v86 = vld [vmem:[%s1 + $0x200] sm:$0xff]
  %v87 = vld [vmem:[%s1 + $0x208] sm:$0xff]
  %v88 = vld [vmem:[%s1 + $0x210] sm:$0xff]
  %v89 = vld [vmem:[%s1 + $0x218] sm:$0xff]
  %v90 = vld [vmem:[%s1 + $0x220] sm:$0xff]
  %v91 = vld [vmem:[%s1 + $0x228] sm:$0xff]
  %v92 = vld [vmem:[%s1 + $0x230] sm:$0xff]
  %v93 = vld [vmem:[%s1 + $0x238] sm:$0xff]
  %v94 = vld [vmem:[%s1 + $0x240] sm:$0xff]
  %v95 = vld [vmem:[%s1 + $0x248] sm:$0xff]
  %v96 = vld [vmem:[%s1 + $0x250] sm:$0xff]
  %v97 = vld [vmem:[%s1 + $0x258] sm:$0xff]
  %v98 = vld [vmem:[%s1 + $0x260] sm:$0xff]
  %v99 = vld [vmem:[%s1 + $0x268] sm:$0xff]
  %v100 = vld [vmem:[%s1 + $0x270] sm:$0xff]
  %v101 = vld [vmem:[%s1 + $0x278] sm:$0xff]
  %v102 = vld [vmem:[%s1 + $0x280] sm:$0xff]
  %v103 = vld [vmem:[%s1 + $0x288] sm:$0xff]
  %v104 = vld [vmem:[%s1 + $0x290] sm:$0xff]
  %v105 = vld [vmem:[%s1 + $0x298] sm:$0xff]
  %v106 = vld [vmem:[%s1 + $0x2a0] sm:$0xff]
  %v107 = vld [vmem:[%s1 + $0x2a8] sm:$0xff]
  %v108 = vld [vmem:[%s1 + $0x2b0] sm:$0xff]
  %v109 = vld [vmem:[%s1 + $0x2b8] sm:$0xff]
  %v110 = vld [vmem:[%s1 + $0x2c0] sm:$0xff]
  %v111 = vld [vmem:[%s1 + $0x2c8] sm:$0xff]
  %v112 = vld [vmem:[%s1 + $0x2d0] sm:$0xff]
  %v113 = vld [vmem:[%s1 + $0x2d8] sm:$0xff]
  %v114 = vld [vmem:[%s1 + $0x2e0] sm:$0xff]
  %v115 = vld [vmem:[%s1 + $0x2e8] sm:$0xff]
  %v116 = vld [vmem:[%s1 + $0x2f0] sm:$0xff]
  %v117 = vld [vmem:[%s1 + $0x2f8] sm:$0xff]
  %v118 = vld [vmem:[%s1 + $0x300] sm:$0xff]
  %v119 = vld [vmem:[%s1 + $0x308] sm:$0xff]
  %v120 = vld [vmem:[%s1 + $0x310] sm:$0xff]
  %v121 = vld [vmem:[%s1 + $0x318] sm:$0xff]
  %v122 = vld [vmem:[%s1 + $0x320] sm:$0xff]
  %v123 = vld [vmem:[%s1 + $0x328] sm:$0xff]
  %v124 = vld [vmem:[%s1 + $0x330] sm:$0xff]
  %v125 = vld [vmem:[%s1 + $0x338] sm:$0xff]
  %v126 = vld [vmem:[%s1 + $0x340] sm:$0xff]
  %v127 = vld [vmem:[%s1 + $0x348] sm:$0xff]
  %v128 = vld [vmem:[%s1 + $0x350] sm:$0xff]
  %v129 = vld [vmem:[%s1 + $0x358] sm:$0xff]
  %v130 = vld [vmem:[%s1 + $0x360] sm:$0xff]
  %v131 = vld [vmem:[%s1 + $0x368] sm:$0xff]
  %v132 = vld [vmem:[%s1 + $0x370] sm:$0xff]
  %v133 = vld [vmem:[%s1 + $0x378] sm:$0xff]
  %v134 = vld [vmem:[%s1 + $0x380] sm:$0xff]
  %v135 = vld [vmem:[%s1 + $0x388] sm:$0xff]
  %v136 = vld [vmem:[%s1 + $0x390] sm:$0xff]
  %v137 = vld [vmem:[%s1 + $0x398] sm:$0xff]
  %v138 = vld [vmem:[%s1 + $0x3a0] sm:$0xff]
  %v139 = vld [vmem:[%s1 + $0x3a8] sm:$0xff]
  %v140 = vld [vmem:[%s1 + $0x3b0] sm:$0xff]
  %v141 = vld [vmem:[%s1 + $0x3b8] sm:$0xff]
  %v142 = vld [vmem:[%s1 + $0x3c0] sm:$0xff]
  %v143 = vld [vmem:[%s1 + $0x3c8] sm:$0xff]
  %v144 = vld [vmem:[%s1 + $0x3d0] sm:$0xff]
  %v145 = vld [vmem:[%s1 + $0x3d8] sm:$0xff]
  %v146 = vld [vmem:[%s1 + $0x3e0] sm:$0xff]
  %v147 = vld [vmem:[%s1 + $0x3e8] sm:$0xff]
  %v148 = vld [vmem:[%s1 + $0x3f0] sm:$0xff]
  %v149 = vld [vmem:[%s1 + $0x3f8] sm:$0xff]
  %v150 = vld [vmem:[%s1 + $0x400] sm:$0xff]
  %v151 = vld [vmem:[%s1 + $0x408] sm:$0xff]
  %v152 = vld [vmem:[%s1 + $0x410] sm:$0xff]
  %v153 = vld [vmem:[%s1 + $0x418] sm:$0xff]
  %v154 = vld [vmem:[%s1 + $0x420] sm:$0xff]
  %v155 = vld [vmem:[%s1 + $0x428] sm:$0xff]
  %v156 = vld [vmem:[%s1 + $0x430] sm:$0xff]
  %v157 = vld [vmem:[%s1 + $0x438] sm:$0xff]
  %v158 = vld [vmem:[%s1 + $0x440] sm:$0xff]
  %v159 = vld [vmem:[%s1 + $0x448] sm:$0xff]
  %v160 = vld [vmem:[%s1 + $0x450] sm:$0xff]
  %v161 = vld [vmem:[%s1 + $0x458] sm:$0xff]
  %v162 = vld [vmem:[%s1 + $0x460] sm:$0xff]
  %v163 = vld [vmem:[%s1 + $0x468] sm:$0xff]
  %v164 = vld [vmem:[%s1 + $0x470] sm:$0xff]
  %v165 = vld [vmem:[%s1 + $0x478] sm:$0xff]
  %v166 = vld [vmem:[%s1 + $0x480] sm:$0xff]
  %v167 = vld [vmem:[%s1 + $0x488] sm:$0xff]
  %v168 = vld [vmem:[%s1 + $0x490] sm:$0xff]
  %v169 = vld [vmem:[%s1 + $0x498] sm:$0xff]
  %v170 = vld [vmem:[%s1 + $0x4a0] sm:$0xff]
  %v171 = vld [vmem:[%s1 + $0x4a8] sm:$0xff]
  %v172 = vld [vmem:[%s1 + $0x4b0] sm:$0xff]
  %v173 = vld [vmem:[%s1 + $0x4b8] sm:$0xff]
  %v174 = vld [vmem:[%s1 + $0x4c0] sm:$0xff]
  %v175 = vld [vmem:[%s1 + $0x4c8] sm:$0xff]
  %v176 = vld [vmem:[%s1 + $0x4d0] sm:$0xff]
  %v177 = vld [vmem:[%s1 + $0x4d8] sm:$0xff]
  %v178 = vld [vmem:[%s1 + $0x4e0] sm:$0xff]
  %v179 = vld [vmem:[%s1 + $0x4e8] sm:$0xff]
  %v180 = vld [vmem:[%s1 + $0x4f0] sm:$0xff]
  %v181 = vld [vmem:[%s1 + $0x4f8] sm:$0xff]
  %v182 = vld [vmem:[%s1 + $0x500] sm:$0xff]
  %v183 = vld [vmem:[%s1 + $0x508] sm:$0xff]
  %v184 = vld [vmem:[%s1 + $0x510] sm:$0xff]
  %v185 = vld [vmem:[%s1 + $0x518] sm:$0xff]
  %v186 = vld [vmem:[%s1 + $0x520] sm:$0xff]
  %v187 = vld [vmem:[%s1 + $0x528] sm:$0xff]
  %v188 = vld [vmem:[%s1 + $0x530] sm:$0xff]
  %v189 = vld [vmem:[%s1 + $0x538] sm:$0xff]
  %v190 = vld [vmem:[%s1 + $0x540] sm:$0xff]
  %v191 = vld [vmem:[%s1 + $0x548] sm:$0xff]
  %v192 = vld [vmem:[%s1 + $0x550] sm:$0xff]
  %v193 = vld [vmem:[%s1 + $0x558] sm:$0xff]
  %v194 = vld [vmem:[%s1 + $0x560] sm:$0xff]
  %v195 = vld [vmem:[%s1 + $0x568] sm:$0xff]
  %v196 = vld [vmem:[%s1 + $0x570] sm:$0xff]
  %v197 = vld [vmem:[%s1 + $0x578] sm:$0xff]
  %v198 = vld [vmem:[%s1 + $0x580] sm:$0xff]
  %v199 = vld [vmem:[%s1 + $0x588] sm:$0xff]
  %v200 = vld [vmem:[%s1 + $0x590] sm:$0xff]
  %v201 = vld [vmem:[%s1 + $0x598] sm:$0xff]
  %v202 = vld [vmem:[%s1 + $0x5a0] sm:$0xff]
  %v203 = vld [vmem:[%s1 + $0x5a8] sm:$0xff]
  %v204 = vld [vmem:[%s1 + $0x5b0] sm:$0xff]
  %v205 = vld [vmem:[%s1 + $0x5b8] sm:$0xff]
  %v206 = vld [vmem:[%s1 + $0x5c0] sm:$0xff]
  %v207 = vld [vmem:[%s1 + $0x5c8] sm:$0xff]
  %v208 = vld [vmem:[%s1 + $0x5d0] sm:$0xff]
  %v209 = vld [vmem:[%s1 + $0x5d8] sm:$0xff]
  %v210 = vld [vmem:[%s1 + $0x5e0] sm:$0xff]
  %v211 = vld [vmem:[%s1 + $0x5e8] sm:$0xff]
  %v212 = vld [vmem:[%s1 + $0x5f0] sm:$0xff]
  %v213 = vld [vmem:[%s1 + $0x5f8] sm:$0xff]
  %v214 = vld [vmem:[%s1 + $0x600] sm:$0xff]
  %v215 = vld [vmem:[%s1 + $0x608] sm:$0xff]
  %v216 = vld [vmem:[%s1 + $0x610] sm:$0xff]
  %v217 = vld [vmem:[%s1 + $0x618] sm:$0xff]
  %v218 = vld [vmem:[%s1 + $0x620] sm:$0xff]
  %v219 = vld [vmem:[%s1 + $0x628] sm:$0xff]
  %v220 = vld [vmem:[%s1 + $0x630] sm:$0xff]
  %v221 = vld [vmem:[%s1 + $0x638] sm:$0xff]
  %v222 = vld [vmem:[%s1 + $0x640] sm:$0xff]
  %v223 = vld [vmem:[%s1 + $0x648] sm:$0xff]
  %v224 = vld [vmem:[%s1 + $0x650] sm:$0xff]
  %v225 = vld [vmem:[%s1 + $0x658] sm:$0xff]
  %v226 = vld [vmem:[%s1 + $0x660] sm:$0xff]
  %v227 = vld [vmem:[%s1 + $0x668] sm:$0xff]
  %v228 = vld [vmem:[%s1 + $0x670] sm:$0xff]
  %v229 = vld [vmem:[%s1 + $0x678] sm:$0xff]
  %v230 = vld [vmem:[%s1 + $0x680] sm:$0xff]
  %v231 = vld [vmem:[%s1 + $0x688] sm:$0xff]
  %v232 = vld [vmem:[%s1 + $0x690] sm:$0xff]
  %v233 = vld [vmem:[%s1 + $0x698] sm:$0xff]
  %v234 = vld [vmem:[%s1 + $0x6a0] sm:$0xff]
  %v235 = vld [vmem:[%s1 + $0x6a8] sm:$0xff]
  %v236 = vld [vmem:[%s1 + $0x6b0] sm:$0xff]
  %v237 = vld [vmem:[%s1 + $0x6b8] sm:$0xff]
  %v238 = vld [vmem:[%s1 + $0x6c0] sm:$0xff]
  %v239 = vld [vmem:[%s1 + $0x6c8] sm:$0xff]
  %v240 = vld [vmem:[%s1 + $0x6d0] sm:$0xff]
  %v241 = vld [vmem:[%s1 + $0x6d8] sm:$0xff]
  %v242 = vld [vmem:[%s1 + $0x6e0] sm:$0xff]
  %v243 = vld [vmem:[%s1 + $0x6e8] sm:$0xff]
  %v244 = vld [vmem:[%s1 + $0x6f0] sm:$0xff]
  %v245 = vld [vmem:[%s1 + $0x6f8] sm:$0xff]
  %v246 = vld [vmem:[%s1 + $0x700] sm:$0xff]
  %v247 = vld [vmem:[%s1 + $0x708] sm:$0xff]
  %v248 = vld [vmem:[%s1 + $0x710] sm:$0xff]
  %v249 = vld [vmem:[%s1 + $0x718] sm:$0xff]
  %v250 = vld [vmem:[%s1 + $0x720] sm:$0xff]
  %v251 = vld [vmem:[%s1 + $0x728] sm:$0xff]
  %v252 = vld [vmem:[%s1 + $0x730] sm:$0xff]
  %v253 = vld [vmem:[%s1 + $0x738] sm:$0xff]
  %v254 = vld [vmem:[%s1 + $0x740] sm:$0xff]
  %v255 = vld [vmem:[%s1 + $0x748] sm:$0xff]
  %v256 = vld [vmem:[%s1 + $0x750] sm:$0xff]
  %v257 = vld [vmem:[%s1 + $0x758] sm:$0xff]
  %v258 = vld [vmem:[%s1 + $0x760] sm:$0xff]
  %v259 = vld [vmem:[%s1 + $0x768] sm:$0xff]
  %v260 = vld [vmem:[%s1 + $0x770] sm:$0xff]
  %v261 = vld [vmem:[%s1 + $0x778] sm:$0xff]
  %v262 = vld [vmem:[%s1 + $0x780] sm:$0xff]
  %v263 = vld [vmem:[%s1 + $0x788] sm:$0xff]
  %v264 = vld [vmem:[%s1 + $0x790] sm:$0xff]
  %v265 = vld [vmem:[%s1 + $0x798] sm:$0xff]
  %v266 = vld [vmem:[%s1 + $0x7a0] sm:$0xff]
  %v267 = vld [vmem:[%s1 + $0x7a8] sm:$0xff]
  %v268 = vld [vmem:[%s1 + $0x7b0] sm:$0xff]
  %v269 = vld [vmem:[%s1 + $0x7b8] sm:$0xff]
  %v270 = vld [vmem:[%s1 + $0x7c0] sm:$0xff]
  %v271 = vld [vmem:[%s1 + $0x7c8] sm:$0xff]
  %v272 = vld [vmem:[%s1 + $0x7d0] sm:$0xff]
  %v273 = vld [vmem:[%s1 + $0x7d8] sm:$0xff]
  %v274 = vld [vmem:[%s1 + $0x7e0] sm:$0xff]
  %v275 = vld [vmem:[%s1 + $0x7e8] sm:$0xff]
  %v276 = vld [vmem:[%s1 + $0x7f0] sm:$0xff]
  %v277 = vld [vmem:[%s1 + $0x7f8] sm:$0xff]
  %v278 = vld [vmem:[%s1 + $0x800] sm:$0xff]
  %v279 = vld [vmem:[%s1 + $0x808] sm:$0xff]
  %v280 = vld [vmem:[%s1 + $0x810] sm:$0xff]
  %v281 = vld [vmem:[%s1 + $0x818] sm:$0xff]
  %v282 = vld [vmem:[%s1 + $0x820] sm:$0xff]
  %v283 = vld [vmem:[%s1 + $0x828] sm:$0xff]
  %v284 = vld [vmem:[%s1 + $0x830] sm:$0xff]
  %v285 = vld [vmem:[%s1 + $0x838] sm:$0xff]
  %v286 = vld [vmem:[%s1 + $0x840] sm:$0xff]
  %v287 = vld [vmem:[%s1 + $0x848] sm:$0xff]
  %v288 = vld [vmem:[%s1 + $0x850] sm:$0xff]
  %v289 = vld [vmem:[%s1 + $0x858] sm:$0xff]
  %v290 = vld [vmem:[%s1 + $0x860] sm:$0xff]
  %v291 = vld [vmem:[%s1 + $0x868] sm:$0xff]
  %v292 = vld [vmem:[%s1 + $0x870] sm:$0xff]
  %v293 = vld [vmem:[%s1 + $0x878] sm:$0xff]
  %v294 = vld [vmem:[%s1 + $0x880] sm:$0xff]
  %v295 = vld [vmem:[%s1 + $0x888] sm:$0xff]
  %v296 = vld [vmem:[%s1 + $0x890] sm:$0xff]
  %v297 = vld [vmem:[%s1 + $0x898] sm:$0xff]
  %v298 = vld [vmem:[%s1 + $0x8a0] sm:$0xff]
  %v299 = vld [vmem:[%s1 + $0x8a8] sm:$0xff]
  %v300 = vld [vmem:[%s1 + $0x8b0] sm:$0xff]
  %v301 = vld [vmem:[%s1 + $0x8b8] sm:$0xff]
  %v302 = vld [vmem:[%s1 + $0x8c0] sm:$0xff]
  %v303 = vld [vmem:[%s1 + $0x8c8] sm:$0xff]
  %v304 = vld [vmem:[%s1 + $0x8d0] sm:$0xff]
  %v305 = vld [vmem:[%s1 + $0x8d8] sm:$0xff]
  %v306 = vld [vmem:[%s1 + $0x8e0] sm:$0xff]
  %v307 = vld [vmem:[%s1 + $0x8e8] sm:$0xff]
  %v308 = vld [vmem:[%s1 + $0x8f0] sm:$0xff]
  %v309 = vld [vmem:[%s1 + $0x8f8] sm:$0xff]
  %v310 = vld [vmem:[%s1 + $0x900] sm:$0xff]
  %v311 = vld [vmem:[%s1 + $0x908] sm:$0xff]
  %v312 = vld [vmem:[%s1 + $0x910] sm:$0xff]
  %v313 = vld [vmem:[%s1 + $0x918] sm:$0xff]
  %v314 = vld [vmem:[%s1 + $0x920] sm:$0xff]
  %v315 = vld [vmem:[%s1 + $0x928] sm:$0xff]
  %v316 = vld [vmem:[%s1 + $0x930] sm:$0xff]
  %v317 = vld [vmem:[%s1 + $0x938] sm:$0xff]
  %v318 = vld [vmem:[%s1 + $0x940] sm:$0xff]
  %v319 = vld [vmem:[%s1 + $0x948] sm:$0xff]
  %v320 = vld [vmem:[%s1 + $0x950] sm:$0xff]
  %v321 = vld [vmem:[%s1 + $0x958] sm:$0xff]
  %v322 = vld [vmem:[%s1 + $0x960] sm:$0xff]
  %v323 = vld [vmem:[%s1 + $0x968] sm:$0xff]
  %v324 = vld [vmem:[%s1 + $0x970] sm:$0xff]
  %v325 = vld [vmem:[%s1 + $0x978] sm:$0xff]
  %v326 = vld [vmem:[%s1 + $0x980] sm:$0xff]
  %v327 = vld [vmem:[%s1 + $0x988] sm:$0xff]
  %v328 = vld [vmem:[%s1 + $0x990] sm:$0xff]
  %v329 = vld [vmem:[%s1 + $0x998] sm:$0xff]
  %v330 = vld [vmem:[%s1 + $0x9a0] sm:$0xff]
  %v331 = vld [vmem:[%s1 + $0x9a8] sm:$0xff]
  %v332 = vld [vmem:[%s1 + $0x9b0] sm:$0xff]
  %v333 = vld [vmem:[%s1 + $0x9b8] sm:$0xff]
  %v334 = vld [vmem:[%s1 + $0x9c0] sm:$0xff]
  %v335 = vld [vmem:[%s1 + $0x9c8] sm:$0xff]
  %v336 = vld [vmem:[%s1 + $0x9d0] sm:$0xff]
  %v337 = vld [vmem:[%s1 + $0x9d8] sm:$0xff]
  %v338 = vld [vmem:[%s1 + $0x9e0] sm:$0xff]
  %v339 = vld [vmem:[%s1 + $0x9e8] sm:$0xff]
  %v340 = vld [vmem:[%s1 + $0x9f0] sm:$0xff]
  %v341 = vld [vmem:[%s1 + $0x9f8] sm:$0xff]
  %v342 = vld [vmem:[%s1 + $0xa00] sm:$0xff]
  %v343 = vld [vmem:[%s1 + $0xa08] sm:$0xff]
  %v344 = vld [vmem:[%s1 + $0xa10] sm:$0xff]
  %v345 = vld [vmem:[%s1 + $0xa18] sm:$0xff]
  %v346 = vld [vmem:[%s1 + $0xa20] sm:$0xff]
  %v347 = vld [vmem:[%s1 + $0xa28] sm:$0xff]
  %v348 = vld [vmem:[%s1 + $0xa30] sm:$0xff]
  %v349 = vld [vmem:[%s1 + $0xa38] sm:$0xff]
  %v350 = vld [vmem:[%s1 + $0xa40] sm:$0xff]
  %v351 = vld [vmem:[%s1 + $0xa48] sm:$0xff]
  %v352 = vld [vmem:[%s1 + $0xa50] sm:$0xff]
  %v353 = vld [vmem:[%s1 + $0xa58] sm:$0xff]
  %v354 = vld [vmem:[%s1 + $0xa60] sm:$0xff]
  %v355 = vld [vmem:[%s1 + $0xa68] sm:$0xff]
  %v356 = vld [vmem:[%s1 + $0xa70] sm:$0xff]
  %v357 = vld [vmem:[%s1 + $0xa78] sm:$0xff]
  %v358 = vld [vmem:[%s1 + $0xa80] sm:$0xff]
  %v359 = vld [vmem:[%s1 + $0xa88] sm:$0xff]
  %v360 = vld [vmem:[%s1 + $0xa90] sm:$0xff]
  %v361 = vld [vmem:[%s1 + $0xa98] sm:$0xff]
  %v362 = vld [vmem:[%s1 + $0xaa0] sm:$0xff]
  %v363 = vld [vmem:[%s1 + $0xaa8] sm:$0xff]
  %v364 = vld [vmem:[%s1 + $0xab0] sm:$0xff]
  %v365 = vld [vmem:[%s1 + $0xab8] sm:$0xff]
  %v366 = vld [vmem:[%s1 + $0xac0] sm:$0xff]
  %v367 = vld [vmem:[%s1 + $0xac8] sm:$0xff]
  %v368 = vld [vmem:[%s1 + $0xad0] sm:$0xff]
  %v369 = vld [vmem:[%s1 + $0xad8] sm:$0xff]
  %v370 = vld [vmem:[%s1 + $0xae0] sm:$0xff]
  %v371 = vld [vmem:[%s1 + $0xae8] sm:$0xff]
  %v372 = vld [vmem:[%s1 + $0xaf0] sm:$0xff]
  %v373 = vld [vmem:[%s1 + $0xaf8] sm:$0xff]
  %v374 = vld [vmem:[%s1 + $0xb00] sm:$0xff]
  %v375 = vld [vmem:[%s1 + $0xb08] sm:$0xff]
  %v376 = vld [vmem:[%s1 + $0xb10] sm:$0xff]
  %v377 = vld [vmem:[%s1 + $0xb18] sm:$0xff]
  %v378 = vld [vmem:[%s1 + $0xb20] sm:$0xff]
  %v379 = vld [vmem:[%s1 + $0xb28] sm:$0xff]
  %v380 = vld [vmem:[%s1 + $0xb30] sm:$0xff]
  %v381 = vld [vmem:[%s1 + $0xb38] sm:$0xff]
  %v382 = vld [vmem:[%s1 + $0xb40] sm:$0xff]
  %v383 = vld [vmem:[%s1 + $0xb48] sm:$0xff]
  %v384 = vld [vmem:[%s1 + $0xb50] sm:$0xff]
  %v385 = vld [vmem:[%s1 + $0xb58] sm:$0xff]
  %v386 = vld [vmem:[%s1 + $0xb60] sm:$0xff]
  %v387 = vld [vmem:[%s1 + $0xb68] sm:$0xff]
  %v388 = vld [vmem:[%s1 + $0xb70] sm:$0xff]
  %v389 = vld [vmem:[%s1 + $0xb78] sm:$0xff]
  %v390 = vld [vmem:[%s1 + $0xb80] sm:$0xff]
  %v391 = vld [vmem:[%s1 + $0xb88] sm:$0xff]
  %v392 = vld [vmem:[%s1 + $0xb90] sm:$0xff]
  %v393 = vld [vmem:[%s1 + $0xb98] sm:$0xff]
  %v394 = vld [vmem:[%s1 + $0xba0] sm:$0xff]
  %v395 = vld [vmem:[%s1 + $0xba8] sm:$0xff]
  %v396 = vld [vmem:[%s1 + $0xbb0] sm:$0xff]
  %v397 = vld [vmem:[%s1 + $0xbb8] sm:$0xff]
  %v398 = vld [vmem:[%s1 + $0xbc0] sm:$0xff]
  %v399 = vld [vmem:[%s1 + $0xbc8] sm:$0xff]
  %v400 = vld [vmem:[%s1 + $0xbd0] sm:$0xff]
  %v401 = vld [vmem:[%s1 + $0xbd8] sm:$0xff]
  %v402 = vld [vmem:[%s1 + $0xbe0] sm:$0xff]
  %v403 = vld [vmem:[%s1 + $0xbe8] sm:$0xff]
  %v404 = vld [vmem:[%s1 + $0xbf0] sm:$0xff]
  %v405 = vld [vmem:[%s1 + $0xbf8] sm:$0xff]
  %v406 = vld [vmem:[%s1 + $0xc00] sm:$0xff]
  %v407 = vld [vmem:[%s1 + $0xc08] sm:$0xff]
  %v408 = vld [vmem:[%s1 + $0xc10] sm:$0xff]
  %v409 = vld [vmem:[%s1 + $0xc18] sm:$0xff]
  %v410 = vld [vmem:[%s1 + $0xc20] sm:$0xff]
  %v411 = vld [vmem:[%s1 + $0xc28] sm:$0xff]
  %v412 = vld [vmem:[%s1 + $0xc30] sm:$0xff]
  %v413 = vld [vmem:[%s1 + $0xc38] sm:$0xff]
  %v414 = vld [vmem:[%s1 + $0xc40] sm:$0xff]
  %v415 = vld [vmem:[%s1 + $0xc48] sm:$0xff]
  %v416 = vld [vmem:[%s1 + $0xc50] sm:$0xff]
  %v417 = vld [vmem:[%s1 + $0xc58] sm:$0xff]
  %v418 = vld [vmem:[%s1 + $0xc60] sm:$0xff]
  %v419 = vld [vmem:[%s1 + $0xc68] sm:$0xff]
  %v420 = vld [vmem:[%s1 + $0xc70] sm:$0xff]
  %v421 = vld [vmem:[%s1 + $0xc78] sm:$0xff]
  %v422 = vld [vmem:[%s1 + $0xc80] sm:$0xff]
  %v423 = vld [vmem:[%s1 + $0xc88] sm:$0xff]
  %v424 = vld [vmem:[%s1 + $0xc90] sm:$0xff]
  %v425 = vld [vmem:[%s1 + $0xc98] sm:$0xff]
  %v426 = vld [vmem:[%s1 + $0xca0] sm:$0xff]
  %v427 = vld [vmem:[%s1 + $0xca8] sm:$0xff]
  %v428 = vld [vmem:[%s1 + $0xcb0] sm:$0xff]
  %v429 = vld [vmem:[%s1 + $0xcb8] sm:$0xff]
  %v430 = vld [vmem:[%s1 + $0xcc0] sm:$0xff]
  %v431 = vld [vmem:[%s1 + $0xcc8] sm:$0xff]
  %v432 = vld [vmem:[%s1 + $0xcd0] sm:$0xff]
  %v433 = vld [vmem:[%s1 + $0xcd8] sm:$0xff]
  %v434 = vld [vmem:[%s1 + $0xce0] sm:$0xff]
  %v435 = vld [vmem:[%s1 + $0xce8] sm:$0xff]
  %v436 = vld [vmem:[%s1 + $0xcf0] sm:$0xff]
  %v437 = vld [vmem:[%s1 + $0xcf8] sm:$0xff]
  %438 = vmatpush.msra.mxu0 %v217
  %439 = vmatpush.msra.mxu0 %v204
  %440 = vmatpush.msra.mxu0 %v191
  %441 = vmatpush.msra.mxu0 %v178
  %442 = vmatpush.msra.mxu0 %v165
  %443 = vmatpush.msra.mxu0 %v152
  %444 = vmatpush.msra.mxu0 %v139
  %445 = vmatpush.msra.mxu0 %v126
  %446 = vmatpush.msra.mxu0 %v113
  %447 = vmatpush.msra.mxu0 %v100
  %448 = vmatpush.msra.mxu0 %v87
  %449 = vmatpush.msra.mxu0 %v74
  %450 = vmatpush.msra.mxu0 %v61
  %451 = vmatpush.msra.mxu0 %v48
  %452 = vmatpush.msra.mxu0 %v35
  %453 = vmatpush.msra.mxu0 %v22
  %454 = vmatmul.f32.gmra.mxu0 %v20
  %v455 = vpop.f32.mrf.mxu0
  %v456 = vadd.f32 0.0, %v455
  %457 = vdwg.mxu0
  %458 = vmatpush.msra.mxu0 %v425
  %459 = vmatpush.msra.mxu0 %v412
  %460 = vmatpush.msra.mxu0 %v399
  %461 = vmatpush.msra.mxu0 %v386
  %462 = vmatpush.msra.mxu0 %v373
  %463 = vmatpush.msra.mxu0 %v360
  %464 = vmatpush.msra.mxu0 %v347
  %465 = vmatpush.msra.mxu0 %v334
  %466 = vmatpush.msra.mxu0 %v321
  %467 = vmatpush.msra.mxu0 %v308
  %468 = vmatpush.msra.mxu0 %v295
  %469 = vmatpush.msra.mxu0 %v282
  %470 = vmatpush.msra.mxu0 %v269
  %471 = vmatpush.msra.mxu0 %v256
  %472 = vmatpush.msra.mxu0 %v243
  %473 = vmatpush.msra.mxu0 %v230
  %474 = vmatmul.f32.gmra.mxu0 %v21
  %v475 = vpop.f32.mrf.mxu0
  %v476 = vadd.f32 %v456, %v475
  %477 = vdwg.mxu0
  %478 = vmatpush.msra.mxu0 %v218
  %479 = vmatpush.msra.mxu0 %v205
  %480 = vmatpush.msra.mxu0 %v192
  %481 = vmatpush.msra.mxu0 %v179
  %482 = vmatpush.msra.mxu0 %v166
  %483 = vmatpush.msra.mxu0 %v153
  %484 = vmatpush.msra.mxu0 %v140
  %485 = vmatpush.msra.mxu0 %v127
  %486 = vmatpush.msra.mxu0 %v114
  %487 = vmatpush.msra.mxu0 %v101
  %488 = vmatpush.msra.mxu0 %v88
  %489 = vmatpush.msra.mxu0 %v75
  %490 = vmatpush.msra.mxu0 %v62
  %491 = vmatpush.msra.mxu0 %v49
  %492 = vmatpush.msra.mxu0 %v36
  %493 = vmatpush.msra.mxu0 %v23
  %494 = vmatmul.f32.gmra.mxu0 %v20
  %v495 = vpop.f32.mrf.mxu0
  %v496 = vadd.f32 0.0, %v495
  %497 = vdwg.mxu0
  %498 = vmatpush.msra.mxu0 %v426
  %499 = vmatpush.msra.mxu0 %v413
  %500 = vmatpush.msra.mxu0 %v400
  %501 = vmatpush.msra.mxu0 %v387
  %502 = vmatpush.msra.mxu0 %v374
  %503 = vmatpush.msra.mxu0 %v361
  %504 = vmatpush.msra.mxu0 %v348
  %505 = vmatpush.msra.mxu0 %v335
  %506 = vmatpush.msra.mxu0 %v322
  %507 = vmatpush.msra.mxu0 %v309
  %508 = vmatpush.msra.mxu0 %v296
  %509 = vmatpush.msra.mxu0 %v283
  %510 = vmatpush.msra.mxu0 %v270
  %511 = vmatpush.msra.mxu0 %v257
  %512 = vmatpush.msra.mxu0 %v244
  %513 = vmatpush.msra.mxu0 %v231
  %514 = vmatmul.f32.gmra.mxu0 %v21
  %v515 = vpop.f32.mrf.mxu0
  %v516 = vadd.f32 %v496, %v515
  %517 = vdwg.mxu0
  %518 = vmatpush.msra.mxu0 %v219
  %519 = vmatpush.msra.mxu0 %v206
  %520 = vmatpush.msra.mxu0 %v193
  %521 = vmatpush.msra.mxu0 %v180
  %522 = vmatpush.msra.mxu0 %v167
  %523 = vmatpush.msra.mxu0 %v154
  %524 = vmatpush.msra.mxu0 %v141
  %525 = vmatpush.msra.mxu0 %v128
  %526 = vmatpush.msra.mxu0 %v115
  %527 = vmatpush.msra.mxu0 %v102
  %528 = vmatpush.msra.mxu0 %v89
  %529 = vmatpush.msra.mxu0 %v76
  %530 = vmatpush.msra.mxu0 %v63
  %531 = vmatpush.msra.mxu0 %v50
  %532 = vmatpush.msra.mxu0 %v37
  %533 = vmatpush.msra.mxu0 %v24
  %534 = vmatmul.f32.gmra.mxu0 %v20
  %v535 = vpop.f32.mrf.mxu0
  %v536 = vadd.f32 0.0, %v535
  %537 = vdwg.mxu0
  %538 = vmatpush.msra.mxu0 %v427
  %539 = vmatpush.msra.mxu0 %v414
  %540 = vmatpush.msra.mxu0 %v401
  %541 = vmatpush.msra.mxu0 %v388
  %542 = vmatpush.msra.mxu0 %v375
  %543 = vmatpush.msra.mxu0 %v362
  %544 = vmatpush.msra.mxu0 %v349
  %545 = vmatpush.msra.mxu0 %v336
  %546 = vmatpush.msra.mxu0 %v323
  %547 = vmatpush.msra.mxu0 %v310
  %548 = vmatpush.msra.mxu0 %v297
  %549 = vmatpush.msra.mxu0 %v284
  %550 = vmatpush.msra.mxu0 %v271
  %551 = vmatpush.msra.mxu0 %v258
  %552 = vmatpush.msra.mxu0 %v245
  %553 = vmatpush.msra.mxu0 %v232
  %554 = vmatmul.f32.gmra.mxu0 %v21
  %v555 = vpop.f32.mrf.mxu0
  %v556 = vadd.f32 %v536, %v555
  %557 = vdwg.mxu0
  %558 = vmatpush.msra.mxu0 %v220
  %559 = vmatpush.msra.mxu0 %v207
  %560 = vmatpush.msra.mxu0 %v194
  %561 = vmatpush.msra.mxu0 %v181
  %562 = vmatpush.msra.mxu0 %v168
  %563 = vmatpush.msra.mxu0 %v155
  %564 = vmatpush.msra.mxu0 %v142
  %565 = vmatpush.msra.mxu0 %v129
  %566 = vmatpush.msra.mxu0 %v116
  %567 = vmatpush.msra.mxu0 %v103
  %568 = vmatpush.msra.mxu0 %v90
  %569 = vmatpush.msra.mxu0 %v77
  %570 = vmatpush.msra.mxu0 %v64
  %571 = vmatpush.msra.mxu0 %v51
  %572 = vmatpush.msra.mxu0 %v38
  %573 = vmatpush.msra.mxu0 %v25
  %574 = vmatmul.f32.gmra.mxu0 %v20
  %v575 = vpop.f32.mrf.mxu0
  %v576 = vadd.f32 0.0, %v575
  %577 = vdwg.mxu0
  %578 = vmatpush.msra.mxu0 %v428
  %579 = vmatpush.msra.mxu0 %v415
  %580 = vmatpush.msra.mxu0 %v402
  %581 = vmatpush.msra.mxu0 %v389
  %582 = vmatpush.msra.mxu0 %v376
  %583 = vmatpush.msra.mxu0 %v363
  %584 = vmatpush.msra.mxu0 %v350
  %585 = vmatpush.msra.mxu0 %v337
  %586 = vmatpush.msra.mxu0 %v324
  %587 = vmatpush.msra.mxu0 %v311
  %588 = vmatpush.msra.mxu0 %v298
  %589 = vmatpush.msra.mxu0 %v285
  %590 = vmatpush.msra.mxu0 %v272
  %591 = vmatpush.msra.mxu0 %v259
  %592 = vmatpush.msra.mxu0 %v246
  %593 = vmatpush.msra.mxu0 %v233
  %594 = vmatmul.f32.gmra.mxu0 %v21
  %v595 = vpop.f32.mrf.mxu0
  %v596 = vadd.f32 %v576, %v595
  %597 = vdwg.mxu0
  %598 = vmatpush.msra.mxu0 %v221
  %599 = vmatpush.msra.mxu0 %v208
  %600 = vmatpush.msra.mxu0 %v195
  %601 = vmatpush.msra.mxu0 %v182
  %602 = vmatpush.msra.mxu0 %v169
  %603 = vmatpush.msra.mxu0 %v156
  %604 = vmatpush.msra.mxu0 %v143
  %605 = vmatpush.msra.mxu0 %v130
  %606 = vmatpush.msra.mxu0 %v117
  %607 = vmatpush.msra.mxu0 %v104
  %608 = vmatpush.msra.mxu0 %v91
  %609 = vmatpush.msra.mxu0 %v78
  %610 = vmatpush.msra.mxu0 %v65
  %611 = vmatpush.msra.mxu0 %v52
  %612 = vmatpush.msra.mxu0 %v39
  %613 = vmatpush.msra.mxu0 %v26
  %614 = vmatmul.f32.gmra.mxu0 %v20
  %v615 = vpop.f32.mrf.mxu0
  %v616 = vadd.f32 0.0, %v615
  %617 = vdwg.mxu0
  %618 = vmatpush.msra.mxu0 %v429
  %619 = vmatpush.msra.mxu0 %v416
  %620 = vmatpush.msra.mxu0 %v403
  %621 = vmatpush.msra.mxu0 %v390
  %622 = vmatpush.msra.mxu0 %v377
  %623 = vmatpush.msra.mxu0 %v364
  %624 = vmatpush.msra.mxu0 %v351
  %625 = vmatpush.msra.mxu0 %v338
  %626 = vmatpush.msra.mxu0 %v325
  %627 = vmatpush.msra.mxu0 %v312
  %628 = vmatpush.msra.mxu0 %v299
  %629 = vmatpush.msra.mxu0 %v286
  %630 = vmatpush.msra.mxu0 %v273
  %631 = vmatpush.msra.mxu0 %v260
  %632 = vmatpush.msra.mxu0 %v247
  %633 = vmatpush.msra.mxu0 %v234
  %634 = vmatmul.f32.gmra.mxu0 %v21
  %v635 = vpop.f32.mrf.mxu0
  %v636 = vadd.f32 %v616, %v635
  %637 = vdwg.mxu0
  %638 = vmatpush.msra.mxu0 %v222
  %639 = vmatpush.msra.mxu0 %v209
  %640 = vmatpush.msra.mxu0 %v196
  %641 = vmatpush.msra.mxu0 %v183
  %642 = vmatpush.msra.mxu0 %v170
  %643 = vmatpush.msra.mxu0 %v157
  %644 = vmatpush.msra.mxu0 %v144
  %645 = vmatpush.msra.mxu0 %v131
  %646 = vmatpush.msra.mxu0 %v118
  %647 = vmatpush.msra.mxu0 %v105
  %648 = vmatpush.msra.mxu0 %v92
  %649 = vmatpush.msra.mxu0 %v79
  %650 = vmatpush.msra.mxu0 %v66
  %651 = vmatpush.msra.mxu0 %v53
  %652 = vmatpush.msra.mxu0 %v40
  %653 = vmatpush.msra.mxu0 %v27
  %654 = vmatmul.f32.gmra.mxu0 %v20
  %v655 = vpop.f32.mrf.mxu0
  %v656 = vadd.f32 0.0, %v655
  %657 = vdwg.mxu0
  %658 = vmatpush.msra.mxu0 %v430
  %659 = vmatpush.msra.mxu0 %v417
  %660 = vmatpush.msra.mxu0 %v404
  %661 = vmatpush.msra.mxu0 %v391
  %662 = vmatpush.msra.mxu0 %v378
  %663 = vmatpush.msra.mxu0 %v365
  %664 = vmatpush.msra.mxu0 %v352
  %665 = vmatpush.msra.mxu0 %v339
  %666 = vmatpush.msra.mxu0 %v326
  %667 = vmatpush.msra.mxu0 %v313
  %668 = vmatpush.msra.mxu0 %v300
  %669 = vmatpush.msra.mxu0 %v287
  %670 = vmatpush.msra.mxu0 %v274
  %671 = vmatpush.msra.mxu0 %v261
  %672 = vmatpush.msra.mxu0 %v248
  %673 = vmatpush.msra.mxu0 %v235
  %674 = vmatmul.f32.gmra.mxu0 %v21
  %v675 = vpop.f32.mrf.mxu0
  %v676 = vadd.f32 %v656, %v675
  %677 = vdwg.mxu0
  %678 = vmatpush.msra.mxu0 %v223
  %679 = vmatpush.msra.mxu0 %v210
  %680 = vmatpush.msra.mxu0 %v197
  %681 = vmatpush.msra.mxu0 %v184
  %682 = vmatpush.msra.mxu0 %v171
  %683 = vmatpush.msra.mxu0 %v158
  %684 = vmatpush.msra.mxu0 %v145
  %685 = vmatpush.msra.mxu0 %v132
  %686 = vmatpush.msra.mxu0 %v119
  %687 = vmatpush.msra.mxu0 %v106
  %688 = vmatpush.msra.mxu0 %v93
  %689 = vmatpush.msra.mxu0 %v80
  %690 = vmatpush.msra.mxu0 %v67
  %691 = vmatpush.msra.mxu0 %v54
  %692 = vmatpush.msra.mxu0 %v41
  %693 = vmatpush.msra.mxu0 %v28
  %694 = vmatmul.f32.gmra.mxu0 %v20
  %v695 = vpop.f32.mrf.mxu0
  %v696 = vadd.f32 0.0, %v695
  %697 = vdwg.mxu0
  %698 = vmatpush.msra.mxu0 %v431
  %699 = vmatpush.msra.mxu0 %v418
  %700 = vmatpush.msra.mxu0 %v405
  %701 = vmatpush.msra.mxu0 %v392
  %702 = vmatpush.msra.mxu0 %v379
  %703 = vmatpush.msra.mxu0 %v366
  %704 = vmatpush.msra.mxu0 %v353
  %705 = vmatpush.msra.mxu0 %v340
  %706 = vmatpush.msra.mxu0 %v327
  %707 = vmatpush.msra.mxu0 %v314
  %708 = vmatpush.msra.mxu0 %v301
  %709 = vmatpush.msra.mxu0 %v288
  %710 = vmatpush.msra.mxu0 %v275
  %711 = vmatpush.msra.mxu0 %v262
  %712 = vmatpush.msra.mxu0 %v249
  %713 = vmatpush.msra.mxu0 %v236
  %714 = vmatmul.f32.gmra.mxu0 %v21
  %v715 = vpop.f32.mrf.mxu0
  %v716 = vadd.f32 %v696, %v715
  %717 = vdwg.mxu0
  %718 = vmatpush.msra.mxu0 %v224
  %719 = vmatpush.msra.mxu0 %v211
  %720 = vmatpush.msra.mxu0 %v198
  %721 = vmatpush.msra.mxu0 %v185
  %722 = vmatpush.msra.mxu0 %v172
  %723 = vmatpush.msra.mxu0 %v159
  %724 = vmatpush.msra.mxu0 %v146
  %725 = vmatpush.msra.mxu0 %v133
  %726 = vmatpush.msra.mxu0 %v120
  %727 = vmatpush.msra.mxu0 %v107
  %728 = vmatpush.msra.mxu0 %v94
  %729 = vmatpush.msra.mxu0 %v81
  %730 = vmatpush.msra.mxu0 %v68
  %731 = vmatpush.msra.mxu0 %v55
  %732 = vmatpush.msra.mxu0 %v42
  %733 = vmatpush.msra.mxu0 %v29
  %734 = vmatmul.f32.gmra.mxu0 %v20
  %v735 = vpop.f32.mrf.mxu0
  %v736 = vadd.f32 0.0, %v735
  %737 = vdwg.mxu0
  %738 = vmatpush.msra.mxu0 %v432
  %739 = vmatpush.msra.mxu0 %v419
  %740 = vmatpush.msra.mxu0 %v406
  %741 = vmatpush.msra.mxu0 %v393
  %742 = vmatpush.msra.mxu0 %v380
  %743 = vmatpush.msra.mxu0 %v367
  %744 = vmatpush.msra.mxu0 %v354
  %745 = vmatpush.msra.mxu0 %v341
  %746 = vmatpush.msra.mxu0 %v328
  %747 = vmatpush.msra.mxu0 %v315
  %748 = vmatpush.msra.mxu0 %v302
  %749 = vmatpush.msra.mxu0 %v289
  %750 = vmatpush.msra.mxu0 %v276
  %751 = vmatpush.msra.mxu0 %v263
  %752 = vmatpush.msra.mxu0 %v250
  %753 = vmatpush.msra.mxu0 %v237
  %754 = vmatmul.f32.gmra.mxu0 %v21
  %v755 = vpop.f32.mrf.mxu0
  %v756 = vadd.f32 %v736, %v755
  %757 = vdwg.mxu0
  %758 = vmatpush.msra.mxu0 %v225
  %759 = vmatpush.msra.mxu0 %v212
  %760 = vmatpush.msra.mxu0 %v199
  %761 = vmatpush.msra.mxu0 %v186
  %762 = vmatpush.msra.mxu0 %v173
  %763 = vmatpush.msra.mxu0 %v160
  %764 = vmatpush.msra.mxu0 %v147
  %765 = vmatpush.msra.mxu0 %v134
  %766 = vmatpush.msra.mxu0 %v121
  %767 = vmatpush.msra.mxu0 %v108
  %768 = vmatpush.msra.mxu0 %v95
  %769 = vmatpush.msra.mxu0 %v82
  %770 = vmatpush.msra.mxu0 %v69
  %771 = vmatpush.msra.mxu0 %v56
  %772 = vmatpush.msra.mxu0 %v43
  %773 = vmatpush.msra.mxu0 %v30
  %774 = vmatmul.f32.gmra.mxu0 %v20
  %v775 = vpop.f32.mrf.mxu0
  %v776 = vadd.f32 0.0, %v775
  %777 = vdwg.mxu0
  %778 = vmatpush.msra.mxu0 %v433
  %779 = vmatpush.msra.mxu0 %v420
  %780 = vmatpush.msra.mxu0 %v407
  %781 = vmatpush.msra.mxu0 %v394
  %782 = vmatpush.msra.mxu0 %v381
  %783 = vmatpush.msra.mxu0 %v368
  %784 = vmatpush.msra.mxu0 %v355
  %785 = vmatpush.msra.mxu0 %v342
  %786 = vmatpush.msra.mxu0 %v329
  %787 = vmatpush.msra.mxu0 %v316
  %788 = vmatpush.msra.mxu0 %v303
  %789 = vmatpush.msra.mxu0 %v290
  %790 = vmatpush.msra.mxu0 %v277
  %791 = vmatpush.msra.mxu0 %v264
  %792 = vmatpush.msra.mxu0 %v251
  %793 = vmatpush.msra.mxu0 %v238
  %794 = vmatmul.f32.gmra.mxu0 %v21
  %v795 = vpop.f32.mrf.mxu0
  %v796 = vadd.f32 %v776, %v795
  %797 = vdwg.mxu0
  %798 = vmatpush.msra.mxu0 %v226
  %799 = vmatpush.msra.mxu0 %v213
  %800 = vmatpush.msra.mxu0 %v200
  %801 = vmatpush.msra.mxu0 %v187
  %802 = vmatpush.msra.mxu0 %v174
  %803 = vmatpush.msra.mxu0 %v161
  %804 = vmatpush.msra.mxu0 %v148
  %805 = vmatpush.msra.mxu0 %v135
  %806 = vmatpush.msra.mxu0 %v122
  %807 = vmatpush.msra.mxu0 %v109
  %808 = vmatpush.msra.mxu0 %v96
  %809 = vmatpush.msra.mxu0 %v83
  %810 = vmatpush.msra.mxu0 %v70
  %811 = vmatpush.msra.mxu0 %v57
  %812 = vmatpush.msra.mxu0 %v44
  %813 = vmatpush.msra.mxu0 %v31
  %814 = vmatmul.f32.gmra.mxu0 %v20
  %v815 = vpop.f32.mrf.mxu0
  %v816 = vadd.f32 0.0, %v815
  %817 = vdwg.mxu0
  %818 = vmatpush.msra.mxu0 %v434
  %819 = vmatpush.msra.mxu0 %v421
  %820 = vmatpush.msra.mxu0 %v408
  %821 = vmatpush.msra.mxu0 %v395
  %822 = vmatpush.msra.mxu0 %v382
  %823 = vmatpush.msra.mxu0 %v369
  %824 = vmatpush.msra.mxu0 %v356
  %825 = vmatpush.msra.mxu0 %v343
  %826 = vmatpush.msra.mxu0 %v330
  %827 = vmatpush.msra.mxu0 %v317
  %828 = vmatpush.msra.mxu0 %v304
  %829 = vmatpush.msra.mxu0 %v291
  %830 = vmatpush.msra.mxu0 %v278
  %831 = vmatpush.msra.mxu0 %v265
  %832 = vmatpush.msra.mxu0 %v252
  %833 = vmatpush.msra.mxu0 %v239
  %834 = vmatmul.f32.gmra.mxu0 %v21
  %v835 = vpop.f32.mrf.mxu0
  %v836 = vadd.f32 %v816, %v835
  %837 = vdwg.mxu0
  %838 = vmatpush.msra.mxu0 %v227
  %839 = vmatpush.msra.mxu0 %v214
  %840 = vmatpush.msra.mxu0 %v201
  %841 = vmatpush.msra.mxu0 %v188
  %842 = vmatpush.msra.mxu0 %v175
  %843 = vmatpush.msra.mxu0 %v162
  %844 = vmatpush.msra.mxu0 %v149
  %845 = vmatpush.msra.mxu0 %v136
  %846 = vmatpush.msra.mxu0 %v123
  %847 = vmatpush.msra.mxu0 %v110
  %848 = vmatpush.msra.mxu0 %v97
  %849 = vmatpush.msra.mxu0 %v84
  %850 = vmatpush.msra.mxu0 %v71
  %851 = vmatpush.msra.mxu0 %v58
  %852 = vmatpush.msra.mxu0 %v45
  %853 = vmatpush.msra.mxu0 %v32
  %854 = vmatmul.f32.gmra.mxu0 %v20
  %v855 = vpop.f32.mrf.mxu0
  %v856 = vadd.f32 0.0, %v855
  %857 = vdwg.mxu0
  %858 = vmatpush.msra.mxu0 %v435
  %859 = vmatpush.msra.mxu0 %v422
  %860 = vmatpush.msra.mxu0 %v409
  %861 = vmatpush.msra.mxu0 %v396
  %862 = vmatpush.msra.mxu0 %v383
  %863 = vmatpush.msra.mxu0 %v370
  %864 = vmatpush.msra.mxu0 %v357
  %865 = vmatpush.msra.mxu0 %v344
  %866 = vmatpush.msra.mxu0 %v331
  %867 = vmatpush.msra.mxu0 %v318
  %868 = vmatpush.msra.mxu0 %v305
  %869 = vmatpush.msra.mxu0 %v292
  %870 = vmatpush.msra.mxu0 %v279
  %871 = vmatpush.msra.mxu0 %v266
  %872 = vmatpush.msra.mxu0 %v253
  %873 = vmatpush.msra.mxu0 %v240
  %874 = vmatmul.f32.gmra.mxu0 %v21
  %v875 = vpop.f32.mrf.mxu0
  %v876 = vadd.f32 %v856, %v875
  %877 = vdwg.mxu0
  %878 = vmatpush.msra.mxu0 %v228
  %879 = vmatpush.msra.mxu0 %v215
  %880 = vmatpush.msra.mxu0 %v202
  %881 = vmatpush.msra.mxu0 %v189
  %882 = vmatpush.msra.mxu0 %v176
  %883 = vmatpush.msra.mxu0 %v163
  %884 = vmatpush.msra.mxu0 %v150
  %885 = vmatpush.msra.mxu0 %v137
  %886 = vmatpush.msra.mxu0 %v124
  %887 = vmatpush.msra.mxu0 %v111
  %888 = vmatpush.msra.mxu0 %v98
  %889 = vmatpush.msra.mxu0 %v85
  %890 = vmatpush.msra.mxu0 %v72
  %891 = vmatpush.msra.mxu0 %v59
  %892 = vmatpush.msra.mxu0 %v46
  %893 = vmatpush.msra.mxu0 %v33
  %894 = vmatmul.f32.gmra.mxu0 %v20
  %v895 = vpop.f32.mrf.mxu0
  %v896 = vadd.f32 0.0, %v895
  %897 = vdwg.mxu0
  %898 = vmatpush.msra.mxu0 %v436
  %899 = vmatpush.msra.mxu0 %v423
  %900 = vmatpush.msra.mxu0 %v410
  %901 = vmatpush.msra.mxu0 %v397
  %902 = vmatpush.msra.mxu0 %v384
  %903 = vmatpush.msra.mxu0 %v371
  %904 = vmatpush.msra.mxu0 %v358
  %905 = vmatpush.msra.mxu0 %v345
  %906 = vmatpush.msra.mxu0 %v332
  %907 = vmatpush.msra.mxu0 %v319
  %908 = vmatpush.msra.mxu0 %v306
  %909 = vmatpush.msra.mxu0 %v293
  %910 = vmatpush.msra.mxu0 %v280
  %911 = vmatpush.msra.mxu0 %v267
  %912 = vmatpush.msra.mxu0 %v254
  %913 = vmatpush.msra.mxu0 %v241
  %914 = vmatmul.f32.gmra.mxu0 %v21
  %v915 = vpop.f32.mrf.mxu0
  %v916 = vadd.f32 %v896, %v915
  %917 = vdwg.mxu0
  %918 = vmatpush.msra.mxu0 %v229
  %919 = vmatpush.msra.mxu0 %v216
  %920 = vmatpush.msra.mxu0 %v203
  %921 = vmatpush.msra.mxu0 %v190
  %922 = vmatpush.msra.mxu0 %v177
  %923 = vmatpush.msra.mxu0 %v164
  %924 = vmatpush.msra.mxu0 %v151
  %925 = vmatpush.msra.mxu0 %v138
  %926 = vmatpush.msra.mxu0 %v125
  %927 = vmatpush.msra.mxu0 %v112
  %928 = vmatpush.msra.mxu0 %v99
  %929 = vmatpush.msra.mxu0 %v86
  %930 = vmatpush.msra.mxu0 %v73
  %931 = vmatpush.msra.mxu0 %v60
  %932 = vmatpush.msra.mxu0 %v47
  %933 = vmatpush.msra.mxu0 %v34
  %934 = vmatmul.f32.gmra.mxu0 %v20
  %v935 = vpop.f32.mrf.mxu0
  %v936 = vadd.f32 0.0, %v935
  %937 = vdwg.mxu0
  %938 = vmatpush.msra.mxu0 %v437
  %939 = vmatpush.msra.mxu0 %v424
  %940 = vmatpush.msra.mxu0 %v411
  %941 = vmatpush.msra.mxu0 %v398
  %942 = vmatpush.msra.mxu0 %v385
  %943 = vmatpush.msra.mxu0 %v372
  %944 = vmatpush.msra.mxu0 %v359
  %945 = vmatpush.msra.mxu0 %v346
  %946 = vmatpush.msra.mxu0 %v333
  %947 = vmatpush.msra.mxu0 %v320
  %948 = vmatpush.msra.mxu0 %v307
  %949 = vmatpush.msra.mxu0 %v294
  %950 = vmatpush.msra.mxu0 %v281
  %951 = vmatpush.msra.mxu0 %v268
  %952 = vmatpush.msra.mxu0 %v255
  %953 = vmatpush.msra.mxu0 %v242
  %954 = vmatmul.f32.gmra.mxu0 %v21
  %v955 = vpop.f32.mrf.mxu0
  %v956 = vadd.f32 %v936, %v955
  %957 = vdwg.mxu0
  %s958 = scalar_lea.vmem %s1, 3328
  %v959 = vld [vmem:[%s958] sm:$0xff]
  %v960 = vld [vmem:[%s958 + $0x8] sm:$0xff]
  %v961 = vld [vmem:[%s958 + $0x10] sm:$0xff]
  %v962 = vld [vmem:[%s958 + $0x18] sm:$0xff]
  %v963 = vld [vmem:[%s958 + $0x20] sm:$0xff]
  %v964 = vld [vmem:[%s958 + $0x28] sm:$0xff]
  %v965 = vld [vmem:[%s958 + $0x30] sm:$0xff]
  %v966 = vld [vmem:[%s958 + $0x38] sm:$0xff]
  %v967 = vld [vmem:[%s958 + $0x40] sm:$0xff]
  %v968 = vld [vmem:[%s958 + $0x48] sm:$0xff]
  %v969 = vld [vmem:[%s958 + $0x50] sm:$0xff]
  %v970 = vld [vmem:[%s958 + $0x58] sm:$0xff]
  %v971 = vld [vmem:[%s958 + $0x60] sm:$0xff]
  %v972 = vld [vmem:[%s958 + $0x68] sm:$0xff]
  %v973 = vld [vmem:[%s958 + $0x70] sm:$0xff]
  %v974 = vld [vmem:[%s958 + $0x78] sm:$0xff]
  %v975 = vld [vmem:[%s958 + $0x80] sm:$0xff]
  %v976 = vld [vmem:[%s958 + $0x88] sm:$0xff]
  %v977 = vld [vmem:[%s958 + $0x90] sm:$0xff]
  %v978 = vld [vmem:[%s958 + $0x98] sm:$0xff]
  %v979 = vld [vmem:[%s958 + $0xa0] sm:$0xff]
  %v980 = vld [vmem:[%s958 + $0xa8] sm:$0xff]
  %v981 = vld [vmem:[%s958 + $0xb0] sm:$0xff]
  %v982 = vld [vmem:[%s958 + $0xb8] sm:$0xff]
  %v983 = vld [vmem:[%s958 + $0xc0] sm:$0xff]
  %v984 = vld [vmem:[%s958 + $0xc8] sm:$0xff]
  %v985 = vld [vmem:[%s958 + $0xd0] sm:$0xff]
  %v986 = vld [vmem:[%s958 + $0xd8] sm:$0xff]
  %v987 = vld [vmem:[%s958 + $0xe0] sm:$0xff]
  %v988 = vld [vmem:[%s958 + $0xe8] sm:$0xff]
  %v989 = vld [vmem:[%s958 + $0xf0] sm:$0xff]
  %v990 = vld [vmem:[%s958 + $0xf8] sm:$0xff]
  %v991 = vld [vmem:[%s958 + $0x100] sm:$0xff]
  %v992 = vld [vmem:[%s958 + $0x108] sm:$0xff]
  %v993 = vld [vmem:[%s958 + $0x110] sm:$0xff]
  %v994 = vld [vmem:[%s958 + $0x118] sm:$0xff]
  %v995 = vld [vmem:[%s958 + $0x120] sm:$0xff]
  %v996 = vld [vmem:[%s958 + $0x128] sm:$0xff]
  %v997 = vld [vmem:[%s958 + $0x130] sm:$0xff]
  %v998 = vld [vmem:[%s958 + $0x138] sm:$0xff]
  %v999 = vld [vmem:[%s958 + $0x140] sm:$0xff]
  %v1000 = vld [vmem:[%s958 + $0x148] sm:$0xff]
  %v1001 = vld [vmem:[%s958 + $0x150] sm:$0xff]
  %v1002 = vld [vmem:[%s958 + $0x158] sm:$0xff]
  %v1003 = vld [vmem:[%s958 + $0x160] sm:$0xff]
  %v1004 = vld [vmem:[%s958 + $0x168] sm:$0xff]
  %v1005 = vld [vmem:[%s958 + $0x170] sm:$0xff]
  %v1006 = vld [vmem:[%s958 + $0x178] sm:$0xff]
  %v1007 = vld [vmem:[%s958 + $0x180] sm:$0xff]
  %v1008 = vld [vmem:[%s958 + $0x188] sm:$0xff]
  %v1009 = vld [vmem:[%s958 + $0x190] sm:$0xff]
  %v1010 = vld [vmem:[%s958 + $0x198] sm:$0xff]
  %v1011 = vld [vmem:[%s958 + $0x1a0] sm:$0xff]
  %v1012 = vld [vmem:[%s958 + $0x1a8] sm:$0xff]
  %v1013 = vld [vmem:[%s958 + $0x1b0] sm:$0xff]
  %v1014 = vld [vmem:[%s958 + $0x1b8] sm:$0xff]
  %v1015 = vld [vmem:[%s958 + $0x1c0] sm:$0xff]
  %v1016 = vld [vmem:[%s958 + $0x1c8] sm:$0xff]
  %v1017 = vld [vmem:[%s958 + $0x1d0] sm:$0xff]
  %v1018 = vld [vmem:[%s958 + $0x1d8] sm:$0xff]
  %v1019 = vld [vmem:[%s958 + $0x1e0] sm:$0xff]
  %v1020 = vld [vmem:[%s958 + $0x1e8] sm:$0xff]
  %v1021 = vld [vmem:[%s958 + $0x1f0] sm:$0xff]
  %v1022 = vld [vmem:[%s958 + $0x1f8] sm:$0xff]
  %v1023 = vld [vmem:[%s958 + $0x200] sm:$0xff]
  %v1024 = vld [vmem:[%s958 + $0x208] sm:$0xff]
  %v1025 = vld [vmem:[%s958 + $0x210] sm:$0xff]
  %v1026 = vld [vmem:[%s958 + $0x218] sm:$0xff]
  %v1027 = vld [vmem:[%s958 + $0x220] sm:$0xff]
  %v1028 = vld [vmem:[%s958 + $0x228] sm:$0xff]
  %v1029 = vld [vmem:[%s958 + $0x230] sm:$0xff]
  %v1030 = vld [vmem:[%s958 + $0x238] sm:$0xff]
  %v1031 = vld [vmem:[%s958 + $0x240] sm:$0xff]
  %v1032 = vld [vmem:[%s958 + $0x248] sm:$0xff]
  %v1033 = vld [vmem:[%s958 + $0x250] sm:$0xff]
  %v1034 = vld [vmem:[%s958 + $0x258] sm:$0xff]
  %v1035 = vld [vmem:[%s958 + $0x260] sm:$0xff]
  %v1036 = vld [vmem:[%s958 + $0x268] sm:$0xff]
  %v1037 = vld [vmem:[%s958 + $0x270] sm:$0xff]
  %v1038 = vld [vmem:[%s958 + $0x278] sm:$0xff]
  %v1039 = vld [vmem:[%s958 + $0x280] sm:$0xff]
  %v1040 = vld [vmem:[%s958 + $0x288] sm:$0xff]
  %v1041 = vld [vmem:[%s958 + $0x290] sm:$0xff]
  %v1042 = vld [vmem:[%s958 + $0x298] sm:$0xff]
  %v1043 = vld [vmem:[%s958 + $0x2a0] sm:$0xff]
  %v1044 = vld [vmem:[%s958 + $0x2a8] sm:$0xff]
  %v1045 = vld [vmem:[%s958 + $0x2b0] sm:$0xff]
  %v1046 = vld [vmem:[%s958 + $0x2b8] sm:$0xff]
  %v1047 = vld [vmem:[%s958 + $0x2c0] sm:$0xff]
  %v1048 = vld [vmem:[%s958 + $0x2c8] sm:$0xff]
  %v1049 = vld [vmem:[%s958 + $0x2d0] sm:$0xff]
  %v1050 = vld [vmem:[%s958 + $0x2d8] sm:$0xff]
  %v1051 = vld [vmem:[%s958 + $0x2e0] sm:$0xff]
  %v1052 = vld [vmem:[%s958 + $0x2e8] sm:$0xff]
  %v1053 = vld [vmem:[%s958 + $0x2f0] sm:$0xff]
  %v1054 = vld [vmem:[%s958 + $0x2f8] sm:$0xff]
  %v1055 = vld [vmem:[%s958 + $0x300] sm:$0xff]
  %v1056 = vld [vmem:[%s958 + $0x308] sm:$0xff]
  %v1057 = vld [vmem:[%s958 + $0x310] sm:$0xff]
  %v1058 = vld [vmem:[%s958 + $0x318] sm:$0xff]
  %v1059 = vld [vmem:[%s958 + $0x320] sm:$0xff]
  %v1060 = vld [vmem:[%s958 + $0x328] sm:$0xff]
  %v1061 = vld [vmem:[%s958 + $0x330] sm:$0xff]
  %v1062 = vld [vmem:[%s958 + $0x338] sm:$0xff]
  %v1063 = vld [vmem:[%s958 + $0x340] sm:$0xff]
  %v1064 = vld [vmem:[%s958 + $0x348] sm:$0xff]
  %v1065 = vld [vmem:[%s958 + $0x350] sm:$0xff]
  %v1066 = vld [vmem:[%s958 + $0x358] sm:$0xff]
  %v1067 = vld [vmem:[%s958 + $0x360] sm:$0xff]
  %v1068 = vld [vmem:[%s958 + $0x368] sm:$0xff]
  %v1069 = vld [vmem:[%s958 + $0x370] sm:$0xff]
  %v1070 = vld [vmem:[%s958 + $0x378] sm:$0xff]
  %v1071 = vld [vmem:[%s958 + $0x380] sm:$0xff]
  %v1072 = vld [vmem:[%s958 + $0x388] sm:$0xff]
  %v1073 = vld [vmem:[%s958 + $0x390] sm:$0xff]
  %v1074 = vld [vmem:[%s958 + $0x398] sm:$0xff]
  %v1075 = vld [vmem:[%s958 + $0x3a0] sm:$0xff]
  %v1076 = vld [vmem:[%s958 + $0x3a8] sm:$0xff]
  %v1077 = vld [vmem:[%s958 + $0x3b0] sm:$0xff]
  %v1078 = vld [vmem:[%s958 + $0x3b8] sm:$0xff]
  %v1079 = vld [vmem:[%s958 + $0x3c0] sm:$0xff]
  %v1080 = vld [vmem:[%s958 + $0x3c8] sm:$0xff]
  %v1081 = vld [vmem:[%s958 + $0x3d0] sm:$0xff]
  %v1082 = vld [vmem:[%s958 + $0x3d8] sm:$0xff]
  %v1083 = vld [vmem:[%s958 + $0x3e0] sm:$0xff]
  %v1084 = vld [vmem:[%s958 + $0x3e8] sm:$0xff]
  %v1085 = vld [vmem:[%s958 + $0x3f0] sm:$0xff]
  %v1086 = vld [vmem:[%s958 + $0x3f8] sm:$0xff]
  %v1087 = vld [vmem:[%s958 + $0x400] sm:$0xff]
  %v1088 = vld [vmem:[%s958 + $0x408] sm:$0xff]
  %v1089 = vld [vmem:[%s958 + $0x410] sm:$0xff]
  %v1090 = vld [vmem:[%s958 + $0x418] sm:$0xff]
  %v1091 = vld [vmem:[%s958 + $0x420] sm:$0xff]
  %v1092 = vld [vmem:[%s958 + $0x428] sm:$0xff]
  %v1093 = vld [vmem:[%s958 + $0x430] sm:$0xff]
  %v1094 = vld [vmem:[%s958 + $0x438] sm:$0xff]
  %v1095 = vld [vmem:[%s958 + $0x440] sm:$0xff]
  %v1096 = vld [vmem:[%s958 + $0x448] sm:$0xff]
  %v1097 = vld [vmem:[%s958 + $0x450] sm:$0xff]
  %v1098 = vld [vmem:[%s958 + $0x458] sm:$0xff]
  %v1099 = vld [vmem:[%s958 + $0x460] sm:$0xff]
  %v1100 = vld [vmem:[%s958 + $0x468] sm:$0xff]
  %v1101 = vld [vmem:[%s958 + $0x470] sm:$0xff]
  %v1102 = vld [vmem:[%s958 + $0x478] sm:$0xff]
  %v1103 = vld [vmem:[%s958 + $0x480] sm:$0xff]
  %v1104 = vld [vmem:[%s958 + $0x488] sm:$0xff]
  %v1105 = vld [vmem:[%s958 + $0x490] sm:$0xff]
  %v1106 = vld [vmem:[%s958 + $0x498] sm:$0xff]
  %v1107 = vld [vmem:[%s958 + $0x4a0] sm:$0xff]
  %v1108 = vld [vmem:[%s958 + $0x4a8] sm:$0xff]
  %v1109 = vld [vmem:[%s958 + $0x4b0] sm:$0xff]
  %v1110 = vld [vmem:[%s958 + $0x4b8] sm:$0xff]
  %v1111 = vld [vmem:[%s958 + $0x4c0] sm:$0xff]
  %v1112 = vld [vmem:[%s958 + $0x4c8] sm:$0xff]
  %v1113 = vld [vmem:[%s958 + $0x4d0] sm:$0xff]
  %v1114 = vld [vmem:[%s958 + $0x4d8] sm:$0xff]
  %v1115 = vld [vmem:[%s958 + $0x4e0] sm:$0xff]
  %v1116 = vld [vmem:[%s958 + $0x4e8] sm:$0xff]
  %v1117 = vld [vmem:[%s958 + $0x4f0] sm:$0xff]
  %v1118 = vld [vmem:[%s958 + $0x4f8] sm:$0xff]
  %v1119 = vld [vmem:[%s958 + $0x500] sm:$0xff]
  %v1120 = vld [vmem:[%s958 + $0x508] sm:$0xff]
  %v1121 = vld [vmem:[%s958 + $0x510] sm:$0xff]
  %v1122 = vld [vmem:[%s958 + $0x518] sm:$0xff]
  %v1123 = vld [vmem:[%s958 + $0x520] sm:$0xff]
  %v1124 = vld [vmem:[%s958 + $0x528] sm:$0xff]
  %v1125 = vld [vmem:[%s958 + $0x530] sm:$0xff]
  %v1126 = vld [vmem:[%s958 + $0x538] sm:$0xff]
  %v1127 = vld [vmem:[%s958 + $0x540] sm:$0xff]
  %v1128 = vld [vmem:[%s958 + $0x548] sm:$0xff]
  %v1129 = vld [vmem:[%s958 + $0x550] sm:$0xff]
  %v1130 = vld [vmem:[%s958 + $0x558] sm:$0xff]
  %v1131 = vld [vmem:[%s958 + $0x560] sm:$0xff]
  %v1132 = vld [vmem:[%s958 + $0x568] sm:$0xff]
  %v1133 = vld [vmem:[%s958 + $0x570] sm:$0xff]
  %v1134 = vld [vmem:[%s958 + $0x578] sm:$0xff]
  %v1135 = vld [vmem:[%s958 + $0x580] sm:$0xff]
  %v1136 = vld [vmem:[%s958 + $0x588] sm:$0xff]
  %v1137 = vld [vmem:[%s958 + $0x590] sm:$0xff]
  %v1138 = vld [vmem:[%s958 + $0x598] sm:$0xff]
  %v1139 = vld [vmem:[%s958 + $0x5a0] sm:$0xff]
  %v1140 = vld [vmem:[%s958 + $0x5a8] sm:$0xff]
  %v1141 = vld [vmem:[%s958 + $0x5b0] sm:$0xff]
  %v1142 = vld [vmem:[%s958 + $0x5b8] sm:$0xff]
  %v1143 = vld [vmem:[%s958 + $0x5c0] sm:$0xff]
  %v1144 = vld [vmem:[%s958 + $0x5c8] sm:$0xff]
  %v1145 = vld [vmem:[%s958 + $0x5d0] sm:$0xff]
  %v1146 = vld [vmem:[%s958 + $0x5d8] sm:$0xff]
  %v1147 = vld [vmem:[%s958 + $0x5e0] sm:$0xff]
  %v1148 = vld [vmem:[%s958 + $0x5e8] sm:$0xff]
  %v1149 = vld [vmem:[%s958 + $0x5f0] sm:$0xff]
  %v1150 = vld [vmem:[%s958 + $0x5f8] sm:$0xff]
  %v1151 = vld [vmem:[%s958 + $0x600] sm:$0xff]
  %v1152 = vld [vmem:[%s958 + $0x608] sm:$0xff]
  %v1153 = vld [vmem:[%s958 + $0x610] sm:$0xff]
  %v1154 = vld [vmem:[%s958 + $0x618] sm:$0xff]
  %v1155 = vld [vmem:[%s958 + $0x620] sm:$0xff]
  %v1156 = vld [vmem:[%s958 + $0x628] sm:$0xff]
  %v1157 = vld [vmem:[%s958 + $0x630] sm:$0xff]
  %v1158 = vld [vmem:[%s958 + $0x638] sm:$0xff]
  %v1159 = vld [vmem:[%s958 + $0x640] sm:$0xff]
  %v1160 = vld [vmem:[%s958 + $0x648] sm:$0xff]
  %v1161 = vld [vmem:[%s958 + $0x650] sm:$0xff]
  %v1162 = vld [vmem:[%s958 + $0x658] sm:$0xff]
  %v1163 = vld [vmem:[%s958 + $0x660] sm:$0xff]
  %v1164 = vld [vmem:[%s958 + $0x668] sm:$0xff]
  %v1165 = vld [vmem:[%s958 + $0x670] sm:$0xff]
  %v1166 = vld [vmem:[%s958 + $0x678] sm:$0xff]
  %v1167 = vld [vmem:[%s958 + $0x680] sm:$0xff]
  %v1168 = vld [vmem:[%s958 + $0x688] sm:$0xff]
  %v1169 = vld [vmem:[%s958 + $0x690] sm:$0xff]
  %v1170 = vld [vmem:[%s958 + $0x698] sm:$0xff]
  %v1171 = vld [vmem:[%s958 + $0x6a0] sm:$0xff]
  %v1172 = vld [vmem:[%s958 + $0x6a8] sm:$0xff]
  %v1173 = vld [vmem:[%s958 + $0x6b0] sm:$0xff]
  %v1174 = vld [vmem:[%s958 + $0x6b8] sm:$0xff]
  %v1175 = vld [vmem:[%s958 + $0x6c0] sm:$0xff]
  %v1176 = vld [vmem:[%s958 + $0x6c8] sm:$0xff]
  %v1177 = vld [vmem:[%s958 + $0x6d0] sm:$0xff]
  %v1178 = vld [vmem:[%s958 + $0x6d8] sm:$0xff]
  %v1179 = vld [vmem:[%s958 + $0x6e0] sm:$0xff]
  %v1180 = vld [vmem:[%s958 + $0x6e8] sm:$0xff]
  %v1181 = vld [vmem:[%s958 + $0x6f0] sm:$0xff]
  %v1182 = vld [vmem:[%s958 + $0x6f8] sm:$0xff]
  %v1183 = vld [vmem:[%s958 + $0x700] sm:$0xff]
  %v1184 = vld [vmem:[%s958 + $0x708] sm:$0xff]
  %v1185 = vld [vmem:[%s958 + $0x710] sm:$0xff]
  %v1186 = vld [vmem:[%s958 + $0x718] sm:$0xff]
  %v1187 = vld [vmem:[%s958 + $0x720] sm:$0xff]
  %v1188 = vld [vmem:[%s958 + $0x728] sm:$0xff]
  %v1189 = vld [vmem:[%s958 + $0x730] sm:$0xff]
  %v1190 = vld [vmem:[%s958 + $0x738] sm:$0xff]
  %v1191 = vld [vmem:[%s958 + $0x740] sm:$0xff]
  %v1192 = vld [vmem:[%s958 + $0x748] sm:$0xff]
  %v1193 = vld [vmem:[%s958 + $0x750] sm:$0xff]
  %v1194 = vld [vmem:[%s958 + $0x758] sm:$0xff]
  %v1195 = vld [vmem:[%s958 + $0x760] sm:$0xff]
  %v1196 = vld [vmem:[%s958 + $0x768] sm:$0xff]
  %v1197 = vld [vmem:[%s958 + $0x770] sm:$0xff]
  %v1198 = vld [vmem:[%s958 + $0x778] sm:$0xff]
  %v1199 = vld [vmem:[%s958 + $0x780] sm:$0xff]
  %v1200 = vld [vmem:[%s958 + $0x788] sm:$0xff]
  %v1201 = vld [vmem:[%s958 + $0x790] sm:$0xff]
  %v1202 = vld [vmem:[%s958 + $0x798] sm:$0xff]
  %v1203 = vld [vmem:[%s958 + $0x7a0] sm:$0xff]
  %v1204 = vld [vmem:[%s958 + $0x7a8] sm:$0xff]
  %v1205 = vld [vmem:[%s958 + $0x7b0] sm:$0xff]
  %v1206 = vld [vmem:[%s958 + $0x7b8] sm:$0xff]
  %v1207 = vld [vmem:[%s958 + $0x7c0] sm:$0xff]
  %v1208 = vld [vmem:[%s958 + $0x7c8] sm:$0xff]
  %v1209 = vld [vmem:[%s958 + $0x7d0] sm:$0xff]
  %v1210 = vld [vmem:[%s958 + $0x7d8] sm:$0xff]
  %v1211 = vld [vmem:[%s958 + $0x7e0] sm:$0xff]
  %v1212 = vld [vmem:[%s958 + $0x7e8] sm:$0xff]
  %v1213 = vld [vmem:[%s958 + $0x7f0] sm:$0xff]
  %v1214 = vld [vmem:[%s958 + $0x7f8] sm:$0xff]
  %v1215 = vld [vmem:[%s958 + $0x800] sm:$0xff]
  %v1216 = vld [vmem:[%s958 + $0x808] sm:$0xff]
  %v1217 = vld [vmem:[%s958 + $0x810] sm:$0xff]
  %v1218 = vld [vmem:[%s958 + $0x818] sm:$0xff]
  %v1219 = vld [vmem:[%s958 + $0x820] sm:$0xff]
  %v1220 = vld [vmem:[%s958 + $0x828] sm:$0xff]
  %v1221 = vld [vmem:[%s958 + $0x830] sm:$0xff]
  %v1222 = vld [vmem:[%s958 + $0x838] sm:$0xff]
  %v1223 = vld [vmem:[%s958 + $0x840] sm:$0xff]
  %v1224 = vld [vmem:[%s958 + $0x848] sm:$0xff]
  %v1225 = vld [vmem:[%s958 + $0x850] sm:$0xff]
  %v1226 = vld [vmem:[%s958 + $0x858] sm:$0xff]
  %v1227 = vld [vmem:[%s958 + $0x860] sm:$0xff]
  %v1228 = vld [vmem:[%s958 + $0x868] sm:$0xff]
  %v1229 = vld [vmem:[%s958 + $0x870] sm:$0xff]
  %v1230 = vld [vmem:[%s958 + $0x878] sm:$0xff]
  %v1231 = vld [vmem:[%s958 + $0x880] sm:$0xff]
  %v1232 = vld [vmem:[%s958 + $0x888] sm:$0xff]
  %v1233 = vld [vmem:[%s958 + $0x890] sm:$0xff]
  %v1234 = vld [vmem:[%s958 + $0x898] sm:$0xff]
  %v1235 = vld [vmem:[%s958 + $0x8a0] sm:$0xff]
  %v1236 = vld [vmem:[%s958 + $0x8a8] sm:$0xff]
  %v1237 = vld [vmem:[%s958 + $0x8b0] sm:$0xff]
  %v1238 = vld [vmem:[%s958 + $0x8b8] sm:$0xff]
  %v1239 = vld [vmem:[%s958 + $0x8c0] sm:$0xff]
  %v1240 = vld [vmem:[%s958 + $0x8c8] sm:$0xff]
  %v1241 = vld [vmem:[%s958 + $0x8d0] sm:$0xff]
  %v1242 = vld [vmem:[%s958 + $0x8d8] sm:$0xff]
  %v1243 = vld [vmem:[%s958 + $0x8e0] sm:$0xff]
  %v1244 = vld [vmem:[%s958 + $0x8e8] sm:$0xff]
  %v1245 = vld [vmem:[%s958 + $0x8f0] sm:$0xff]
  %v1246 = vld [vmem:[%s958 + $0x8f8] sm:$0xff]
  %v1247 = vld [vmem:[%s958 + $0x900] sm:$0xff]
  %v1248 = vld [vmem:[%s958 + $0x908] sm:$0xff]
  %v1249 = vld [vmem:[%s958 + $0x910] sm:$0xff]
  %v1250 = vld [vmem:[%s958 + $0x918] sm:$0xff]
  %v1251 = vld [vmem:[%s958 + $0x920] sm:$0xff]
  %v1252 = vld [vmem:[%s958 + $0x928] sm:$0xff]
  %v1253 = vld [vmem:[%s958 + $0x930] sm:$0xff]
  %v1254 = vld [vmem:[%s958 + $0x938] sm:$0xff]
  %v1255 = vld [vmem:[%s958 + $0x940] sm:$0xff]
  %v1256 = vld [vmem:[%s958 + $0x948] sm:$0xff]
  %v1257 = vld [vmem:[%s958 + $0x950] sm:$0xff]
  %v1258 = vld [vmem:[%s958 + $0x958] sm:$0xff]
  %v1259 = vld [vmem:[%s958 + $0x960] sm:$0xff]
  %v1260 = vld [vmem:[%s958 + $0x968] sm:$0xff]
  %v1261 = vld [vmem:[%s958 + $0x970] sm:$0xff]
  %v1262 = vld [vmem:[%s958 + $0x978] sm:$0xff]
  %v1263 = vld [vmem:[%s958 + $0x980] sm:$0xff]
  %v1264 = vld [vmem:[%s958 + $0x988] sm:$0xff]
  %v1265 = vld [vmem:[%s958 + $0x990] sm:$0xff]
  %v1266 = vld [vmem:[%s958 + $0x998] sm:$0xff]
  %v1267 = vld [vmem:[%s958 + $0x9a0] sm:$0xff]
  %v1268 = vld [vmem:[%s958 + $0x9a8] sm:$0xff]
  %v1269 = vld [vmem:[%s958 + $0x9b0] sm:$0xff]
  %v1270 = vld [vmem:[%s958 + $0x9b8] sm:$0xff]
  %v1271 = vld [vmem:[%s958 + $0x9c0] sm:$0xff]
  %v1272 = vld [vmem:[%s958 + $0x9c8] sm:$0xff]
  %v1273 = vld [vmem:[%s958 + $0x9d0] sm:$0xff]
  %v1274 = vld [vmem:[%s958 + $0x9d8] sm:$0xff]
  %v1275 = vld [vmem:[%s958 + $0x9e0] sm:$0xff]
  %v1276 = vld [vmem:[%s958 + $0x9e8] sm:$0xff]
  %v1277 = vld [vmem:[%s958 + $0x9f0] sm:$0xff]
  %v1278 = vld [vmem:[%s958 + $0x9f8] sm:$0xff]
  %v1279 = vld [vmem:[%s958 + $0xa00] sm:$0xff]
  %v1280 = vld [vmem:[%s958 + $0xa08] sm:$0xff]
  %v1281 = vld [vmem:[%s958 + $0xa10] sm:$0xff]
  %v1282 = vld [vmem:[%s958 + $0xa18] sm:$0xff]
  %v1283 = vld [vmem:[%s958 + $0xa20] sm:$0xff]
  %v1284 = vld [vmem:[%s958 + $0xa28] sm:$0xff]
  %v1285 = vld [vmem:[%s958 + $0xa30] sm:$0xff]
  %v1286 = vld [vmem:[%s958 + $0xa38] sm:$0xff]
  %v1287 = vld [vmem:[%s958 + $0xa40] sm:$0xff]
  %v1288 = vld [vmem:[%s958 + $0xa48] sm:$0xff]
  %v1289 = vld [vmem:[%s958 + $0xa50] sm:$0xff]
  %v1290 = vld [vmem:[%s958 + $0xa58] sm:$0xff]
  %v1291 = vld [vmem:[%s958 + $0xa60] sm:$0xff]
  %v1292 = vld [vmem:[%s958 + $0xa68] sm:$0xff]
  %v1293 = vld [vmem:[%s958 + $0xa70] sm:$0xff]
  %v1294 = vld [vmem:[%s958 + $0xa78] sm:$0xff]
  %v1295 = vld [vmem:[%s958 + $0xa80] sm:$0xff]
  %v1296 = vld [vmem:[%s958 + $0xa88] sm:$0xff]
  %v1297 = vld [vmem:[%s958 + $0xa90] sm:$0xff]
  %v1298 = vld [vmem:[%s958 + $0xa98] sm:$0xff]
  %v1299 = vld [vmem:[%s958 + $0xaa0] sm:$0xff]
  %v1300 = vld [vmem:[%s958 + $0xaa8] sm:$0xff]
  %v1301 = vld [vmem:[%s958 + $0xab0] sm:$0xff]
  %v1302 = vld [vmem:[%s958 + $0xab8] sm:$0xff]
  %v1303 = vld [vmem:[%s958 + $0xac0] sm:$0xff]
  %v1304 = vld [vmem:[%s958 + $0xac8] sm:$0xff]
  %v1305 = vld [vmem:[%s958 + $0xad0] sm:$0xff]
  %v1306 = vld [vmem:[%s958 + $0xad8] sm:$0xff]
  %v1307 = vld [vmem:[%s958 + $0xae0] sm:$0xff]
  %v1308 = vld [vmem:[%s958 + $0xae8] sm:$0xff]
  %v1309 = vld [vmem:[%s958 + $0xaf0] sm:$0xff]
  %v1310 = vld [vmem:[%s958 + $0xaf8] sm:$0xff]
  %v1311 = vld [vmem:[%s958 + $0xb00] sm:$0xff]
  %v1312 = vld [vmem:[%s958 + $0xb08] sm:$0xff]
  %v1313 = vld [vmem:[%s958 + $0xb10] sm:$0xff]
  %v1314 = vld [vmem:[%s958 + $0xb18] sm:$0xff]
  %v1315 = vld [vmem:[%s958 + $0xb20] sm:$0xff]
  %v1316 = vld [vmem:[%s958 + $0xb28] sm:$0xff]
  %v1317 = vld [vmem:[%s958 + $0xb30] sm:$0xff]
  %v1318 = vld [vmem:[%s958 + $0xb38] sm:$0xff]
  %v1319 = vld [vmem:[%s958 + $0xb40] sm:$0xff]
  %v1320 = vld [vmem:[%s958 + $0xb48] sm:$0xff]
  %v1321 = vld [vmem:[%s958 + $0xb50] sm:$0xff]
  %v1322 = vld [vmem:[%s958 + $0xb58] sm:$0xff]
  %v1323 = vld [vmem:[%s958 + $0xb60] sm:$0xff]
  %v1324 = vld [vmem:[%s958 + $0xb68] sm:$0xff]
  %v1325 = vld [vmem:[%s958 + $0xb70] sm:$0xff]
  %v1326 = vld [vmem:[%s958 + $0xb78] sm:$0xff]
  %v1327 = vld [vmem:[%s958 + $0xb80] sm:$0xff]
  %v1328 = vld [vmem:[%s958 + $0xb88] sm:$0xff]
  %v1329 = vld [vmem:[%s958 + $0xb90] sm:$0xff]
  %v1330 = vld [vmem:[%s958 + $0xb98] sm:$0xff]
  %v1331 = vld [vmem:[%s958 + $0xba0] sm:$0xff]
  %v1332 = vld [vmem:[%s958 + $0xba8] sm:$0xff]
  %v1333 = vld [vmem:[%s958 + $0xbb0] sm:$0xff]
  %v1334 = vld [vmem:[%s958 + $0xbb8] sm:$0xff]
  %v1335 = vld [vmem:[%s958 + $0xbc0] sm:$0xff]
  %v1336 = vld [vmem:[%s958 + $0xbc8] sm:$0xff]
  %v1337 = vld [vmem:[%s958 + $0xbd0] sm:$0xff]
  %v1338 = vld [vmem:[%s958 + $0xbd8] sm:$0xff]
  %v1339 = vld [vmem:[%s958 + $0xbe0] sm:$0xff]
  %v1340 = vld [vmem:[%s958 + $0xbe8] sm:$0xff]
  %v1341 = vld [vmem:[%s958 + $0xbf0] sm:$0xff]
  %v1342 = vld [vmem:[%s958 + $0xbf8] sm:$0xff]
  %v1343 = vld [vmem:[%s958 + $0xc00] sm:$0xff]
  %v1344 = vld [vmem:[%s958 + $0xc08] sm:$0xff]
  %v1345 = vld [vmem:[%s958 + $0xc10] sm:$0xff]
  %v1346 = vld [vmem:[%s958 + $0xc18] sm:$0xff]
  %v1347 = vld [vmem:[%s958 + $0xc20] sm:$0xff]
  %v1348 = vld [vmem:[%s958 + $0xc28] sm:$0xff]
  %v1349 = vld [vmem:[%s958 + $0xc30] sm:$0xff]
  %v1350 = vld [vmem:[%s958 + $0xc38] sm:$0xff]
  %v1351 = vld [vmem:[%s958 + $0xc40] sm:$0xff]
  %v1352 = vld [vmem:[%s958 + $0xc48] sm:$0xff]
  %v1353 = vld [vmem:[%s958 + $0xc50] sm:$0xff]
  %v1354 = vld [vmem:[%s958 + $0xc58] sm:$0xff]
  %v1355 = vld [vmem:[%s958 + $0xc60] sm:$0xff]
  %v1356 = vld [vmem:[%s958 + $0xc68] sm:$0xff]
  %v1357 = vld [vmem:[%s958 + $0xc70] sm:$0xff]
  %v1358 = vld [vmem:[%s958 + $0xc78] sm:$0xff]
  %v1359 = vld [vmem:[%s958 + $0xc80] sm:$0xff]
  %v1360 = vld [vmem:[%s958 + $0xc88] sm:$0xff]
  %v1361 = vld [vmem:[%s958 + $0xc90] sm:$0xff]
  %v1362 = vld [vmem:[%s958 + $0xc98] sm:$0xff]
  %v1363 = vld [vmem:[%s958 + $0xca0] sm:$0xff]
  %v1364 = vld [vmem:[%s958 + $0xca8] sm:$0xff]
  %v1365 = vld [vmem:[%s958 + $0xcb0] sm:$0xff]
  %v1366 = vld [vmem:[%s958 + $0xcb8] sm:$0xff]
  %v1367 = vld [vmem:[%s958 + $0xcc0] sm:$0xff]
  %v1368 = vld [vmem:[%s958 + $0xcc8] sm:$0xff]
  %v1369 = vld [vmem:[%s958 + $0xcd0] sm:$0xff]
  %v1370 = vld [vmem:[%s958 + $0xcd8] sm:$0xff]
  %v1371 = vld [vmem:[%s958 + $0xce0] sm:$0xff]
  %v1372 = vld [vmem:[%s958 + $0xce8] sm:$0xff]
  %v1373 = vld [vmem:[%s958 + $0xcf0] sm:$0xff]
  %v1374 = vld [vmem:[%s958 + $0xcf8] sm:$0xff]
  %1375 = vmatpush.msra.mxu0 %v1154
  %1376 = vmatpush.msra.mxu0 %v1141
  %1377 = vmatpush.msra.mxu0 %v1128
  %1378 = vmatpush.msra.mxu0 %v1115
  %1379 = vmatpush.msra.mxu0 %v1102
  %1380 = vmatpush.msra.mxu0 %v1089
  %1381 = vmatpush.msra.mxu0 %v1076
  %1382 = vmatpush.msra.mxu0 %v1063
  %1383 = vmatpush.msra.mxu0 %v1050
  %1384 = vmatpush.msra.mxu0 %v1037
  %1385 = vmatpush.msra.mxu0 %v1024
  %1386 = vmatpush.msra.mxu0 %v1011
  %1387 = vmatpush.msra.mxu0 %v998
  %1388 = vmatpush.msra.mxu0 %v985
  %1389 = vmatpush.msra.mxu0 %v972
  %1390 = vmatpush.msra.mxu0 %v959
  %1391 = vmatmul.f32.gmra.mxu0 %v20
  %v1392 = vpop.f32.mrf.mxu0
  %v1393 = vadd.f32 0.0, %v1392
  %1394 = vdwg.mxu0
  %1395 = vmatpush.msra.mxu0 %v1362
  %1396 = vmatpush.msra.mxu0 %v1349
  %1397 = vmatpush.msra.mxu0 %v1336
  %1398 = vmatpush.msra.mxu0 %v1323
  %1399 = vmatpush.msra.mxu0 %v1310
  %1400 = vmatpush.msra.mxu0 %v1297
  %1401 = vmatpush.msra.mxu0 %v1284
  %1402 = vmatpush.msra.mxu0 %v1271
  %1403 = vmatpush.msra.mxu0 %v1258
  %1404 = vmatpush.msra.mxu0 %v1245
  %1405 = vmatpush.msra.mxu0 %v1232
  %1406 = vmatpush.msra.mxu0 %v1219
  %1407 = vmatpush.msra.mxu0 %v1206
  %1408 = vmatpush.msra.mxu0 %v1193
  %1409 = vmatpush.msra.mxu0 %v1180
  %1410 = vmatpush.msra.mxu0 %v1167
  %1411 = vmatmul.f32.gmra.mxu0 %v21
  %v1412 = vpop.f32.mrf.mxu0
  %v1413 = vadd.f32 %v1393, %v1412
  %1414 = vdwg.mxu0
  %1415 = vmatpush.msra.mxu0 %v1155
  %1416 = vmatpush.msra.mxu0 %v1142
  %1417 = vmatpush.msra.mxu0 %v1129
  %1418 = vmatpush.msra.mxu0 %v1116
  %1419 = vmatpush.msra.mxu0 %v1103
  %1420 = vmatpush.msra.mxu0 %v1090
  %1421 = vmatpush.msra.mxu0 %v1077
  %1422 = vmatpush.msra.mxu0 %v1064
  %1423 = vmatpush.msra.mxu0 %v1051
  %1424 = vmatpush.msra.mxu0 %v1038
  %1425 = vmatpush.msra.mxu0 %v1025
  %1426 = vmatpush.msra.mxu0 %v1012
  %1427 = vmatpush.msra.mxu0 %v999
  %1428 = vmatpush.msra.mxu0 %v986
  %1429 = vmatpush.msra.mxu0 %v973
  %1430 = vmatpush.msra.mxu0 %v960
  %1431 = vmatmul.f32.gmra.mxu0 %v20
  %v1432 = vpop.f32.mrf.mxu0
  %v1433 = vadd.f32 0.0, %v1432
  %1434 = vdwg.mxu0
  %1435 = vmatpush.msra.mxu0 %v1363
  %1436 = vmatpush.msra.mxu0 %v1350
  %1437 = vmatpush.msra.mxu0 %v1337
  %1438 = vmatpush.msra.mxu0 %v1324
  %1439 = vmatpush.msra.mxu0 %v1311
  %1440 = vmatpush.msra.mxu0 %v1298
  %1441 = vmatpush.msra.mxu0 %v1285
  %1442 = vmatpush.msra.mxu0 %v1272
  %1443 = vmatpush.msra.mxu0 %v1259
  %1444 = vmatpush.msra.mxu0 %v1246
  %1445 = vmatpush.msra.mxu0 %v1233
  %1446 = vmatpush.msra.mxu0 %v1220
  %1447 = vmatpush.msra.mxu0 %v1207
  %1448 = vmatpush.msra.mxu0 %v1194
  %1449 = vmatpush.msra.mxu0 %v1181
  %1450 = vmatpush.msra.mxu0 %v1168
  %1451 = vmatmul.f32.gmra.mxu0 %v21
  %v1452 = vpop.f32.mrf.mxu0
  %v1453 = vadd.f32 %v1433, %v1452
  %1454 = vdwg.mxu0
  %1455 = vmatpush.msra.mxu0 %v1156
  %1456 = vmatpush.msra.mxu0 %v1143
  %1457 = vmatpush.msra.mxu0 %v1130
  %1458 = vmatpush.msra.mxu0 %v1117
  %1459 = vmatpush.msra.mxu0 %v1104
  %1460 = vmatpush.msra.mxu0 %v1091
  %1461 = vmatpush.msra.mxu0 %v1078
  %1462 = vmatpush.msra.mxu0 %v1065
  %1463 = vmatpush.msra.mxu0 %v1052
  %1464 = vmatpush.msra.mxu0 %v1039
  %1465 = vmatpush.msra.mxu0 %v1026
  %1466 = vmatpush.msra.mxu0 %v1013
  %1467 = vmatpush.msra.mxu0 %v1000
  %1468 = vmatpush.msra.mxu0 %v987
  %1469 = vmatpush.msra.mxu0 %v974
  %1470 = vmatpush.msra.mxu0 %v961
  %1471 = vmatmul.f32.gmra.mxu0 %v20
  %v1472 = vpop.f32.mrf.mxu0
  %v1473 = vadd.f32 0.0, %v1472
  %1474 = vdwg.mxu0
  %1475 = vmatpush.msra.mxu0 %v1364
  %1476 = vmatpush.msra.mxu0 %v1351
  %1477 = vmatpush.msra.mxu0 %v1338
  %1478 = vmatpush.msra.mxu0 %v1325
  %1479 = vmatpush.msra.mxu0 %v1312
  %1480 = vmatpush.msra.mxu0 %v1299
  %1481 = vmatpush.msra.mxu0 %v1286
  %1482 = vmatpush.msra.mxu0 %v1273
  %1483 = vmatpush.msra.mxu0 %v1260
  %1484 = vmatpush.msra.mxu0 %v1247
  %1485 = vmatpush.msra.mxu0 %v1234
  %1486 = vmatpush.msra.mxu0 %v1221
  %1487 = vmatpush.msra.mxu0 %v1208
  %1488 = vmatpush.msra.mxu0 %v1195
  %1489 = vmatpush.msra.mxu0 %v1182
  %1490 = vmatpush.msra.mxu0 %v1169
  %1491 = vmatmul.f32.gmra.mxu0 %v21
  %v1492 = vpop.f32.mrf.mxu0
  %v1493 = vadd.f32 %v1473, %v1492
  %1494 = vdwg.mxu0
  %1495 = vmatpush.msra.mxu0 %v1157
  %1496 = vmatpush.msra.mxu0 %v1144
  %1497 = vmatpush.msra.mxu0 %v1131
  %1498 = vmatpush.msra.mxu0 %v1118
  %1499 = vmatpush.msra.mxu0 %v1105
  %1500 = vmatpush.msra.mxu0 %v1092
  %1501 = vmatpush.msra.mxu0 %v1079
  %1502 = vmatpush.msra.mxu0 %v1066
  %1503 = vmatpush.msra.mxu0 %v1053
  %1504 = vmatpush.msra.mxu0 %v1040
  %1505 = vmatpush.msra.mxu0 %v1027
  %1506 = vmatpush.msra.mxu0 %v1014
  %1507 = vmatpush.msra.mxu0 %v1001
  %1508 = vmatpush.msra.mxu0 %v988
  %1509 = vmatpush.msra.mxu0 %v975
  %1510 = vmatpush.msra.mxu0 %v962
  %1511 = vmatmul.f32.gmra.mxu0 %v20
  %v1512 = vpop.f32.mrf.mxu0
  %v1513 = vadd.f32 0.0, %v1512
  %1514 = vdwg.mxu0
  %1515 = vmatpush.msra.mxu0 %v1365
  %1516 = vmatpush.msra.mxu0 %v1352
  %1517 = vmatpush.msra.mxu0 %v1339
  %1518 = vmatpush.msra.mxu0 %v1326
  %1519 = vmatpush.msra.mxu0 %v1313
  %1520 = vmatpush.msra.mxu0 %v1300
  %1521 = vmatpush.msra.mxu0 %v1287
  %1522 = vmatpush.msra.mxu0 %v1274
  %1523 = vmatpush.msra.mxu0 %v1261
  %1524 = vmatpush.msra.mxu0 %v1248
  %1525 = vmatpush.msra.mxu0 %v1235
  %1526 = vmatpush.msra.mxu0 %v1222
  %1527 = vmatpush.msra.mxu0 %v1209
  %1528 = vmatpush.msra.mxu0 %v1196
  %1529 = vmatpush.msra.mxu0 %v1183
  %1530 = vmatpush.msra.mxu0 %v1170
  %1531 = vmatmul.f32.gmra.mxu0 %v21
  %v1532 = vpop.f32.mrf.mxu0
  %v1533 = vadd.f32 %v1513, %v1532
  %1534 = vdwg.mxu0
  %1535 = vmatpush.msra.mxu0 %v1158
  %1536 = vmatpush.msra.mxu0 %v1145
  %1537 = vmatpush.msra.mxu0 %v1132
  %1538 = vmatpush.msra.mxu0 %v1119
  %1539 = vmatpush.msra.mxu0 %v1106
  %1540 = vmatpush.msra.mxu0 %v1093
  %1541 = vmatpush.msra.mxu0 %v1080
  %1542 = vmatpush.msra.mxu0 %v1067
  %1543 = vmatpush.msra.mxu0 %v1054
  %1544 = vmatpush.msra.mxu0 %v1041
  %1545 = vmatpush.msra.mxu0 %v1028
  %1546 = vmatpush.msra.mxu0 %v1015
  %1547 = vmatpush.msra.mxu0 %v1002
  %1548 = vmatpush.msra.mxu0 %v989
  %1549 = vmatpush.msra.mxu0 %v976
  %1550 = vmatpush.msra.mxu0 %v963
  %1551 = vmatmul.f32.gmra.mxu0 %v20
  %v1552 = vpop.f32.mrf.mxu0
  %v1553 = vadd.f32 0.0, %v1552
  %1554 = vdwg.mxu0
  %1555 = vmatpush.msra.mxu0 %v1366
  %1556 = vmatpush.msra.mxu0 %v1353
  %1557 = vmatpush.msra.mxu0 %v1340
  %1558 = vmatpush.msra.mxu0 %v1327
  %1559 = vmatpush.msra.mxu0 %v1314
  %1560 = vmatpush.msra.mxu0 %v1301
  %1561 = vmatpush.msra.mxu0 %v1288
  %1562 = vmatpush.msra.mxu0 %v1275
  %1563 = vmatpush.msra.mxu0 %v1262
  %1564 = vmatpush.msra.mxu0 %v1249
  %1565 = vmatpush.msra.mxu0 %v1236
  %1566 = vmatpush.msra.mxu0 %v1223
  %1567 = vmatpush.msra.mxu0 %v1210
  %1568 = vmatpush.msra.mxu0 %v1197
  %1569 = vmatpush.msra.mxu0 %v1184
  %1570 = vmatpush.msra.mxu0 %v1171
  %1571 = vmatmul.f32.gmra.mxu0 %v21
  %v1572 = vpop.f32.mrf.mxu0
  %v1573 = vadd.f32 %v1553, %v1572
  %1574 = vdwg.mxu0
  %1575 = vmatpush.msra.mxu0 %v1159
  %1576 = vmatpush.msra.mxu0 %v1146
  %1577 = vmatpush.msra.mxu0 %v1133
  %1578 = vmatpush.msra.mxu0 %v1120
  %1579 = vmatpush.msra.mxu0 %v1107
  %1580 = vmatpush.msra.mxu0 %v1094
  %1581 = vmatpush.msra.mxu0 %v1081
  %1582 = vmatpush.msra.mxu0 %v1068
  %1583 = vmatpush.msra.mxu0 %v1055
  %1584 = vmatpush.msra.mxu0 %v1042
  %1585 = vmatpush.msra.mxu0 %v1029
  %1586 = vmatpush.msra.mxu0 %v1016
  %1587 = vmatpush.msra.mxu0 %v1003
  %1588 = vmatpush.msra.mxu0 %v990
  %1589 = vmatpush.msra.mxu0 %v977
  %1590 = vmatpush.msra.mxu0 %v964
  %1591 = vmatmul.f32.gmra.mxu0 %v20
  %v1592 = vpop.f32.mrf.mxu0
  %v1593 = vadd.f32 0.0, %v1592
  %1594 = vdwg.mxu0
  %1595 = vmatpush.msra.mxu0 %v1367
  %1596 = vmatpush.msra.mxu0 %v1354
  %1597 = vmatpush.msra.mxu0 %v1341
  %1598 = vmatpush.msra.mxu0 %v1328
  %1599 = vmatpush.msra.mxu0 %v1315
  %1600 = vmatpush.msra.mxu0 %v1302
  %1601 = vmatpush.msra.mxu0 %v1289
  %1602 = vmatpush.msra.mxu0 %v1276
  %1603 = vmatpush.msra.mxu0 %v1263
  %1604 = vmatpush.msra.mxu0 %v1250
  %1605 = vmatpush.msra.mxu0 %v1237
  %1606 = vmatpush.msra.mxu0 %v1224
  %1607 = vmatpush.msra.mxu0 %v1211
  %1608 = vmatpush.msra.mxu0 %v1198
  %1609 = vmatpush.msra.mxu0 %v1185
  %1610 = vmatpush.msra.mxu0 %v1172
  %1611 = vmatmul.f32.gmra.mxu0 %v21
  %v1612 = vpop.f32.mrf.mxu0
  %v1613 = vadd.f32 %v1593, %v1612
  %1614 = vdwg.mxu0
  %1615 = vmatpush.msra.mxu0 %v1160
  %1616 = vmatpush.msra.mxu0 %v1147
  %1617 = vmatpush.msra.mxu0 %v1134
  %1618 = vmatpush.msra.mxu0 %v1121
  %1619 = vmatpush.msra.mxu0 %v1108
  %1620 = vmatpush.msra.mxu0 %v1095
  %1621 = vmatpush.msra.mxu0 %v1082
  %1622 = vmatpush.msra.mxu0 %v1069
  %1623 = vmatpush.msra.mxu0 %v1056
  %1624 = vmatpush.msra.mxu0 %v1043
  %1625 = vmatpush.msra.mxu0 %v1030
  %1626 = vmatpush.msra.mxu0 %v1017
  %1627 = vmatpush.msra.mxu0 %v1004
  %1628 = vmatpush.msra.mxu0 %v991
  %1629 = vmatpush.msra.mxu0 %v978
  %1630 = vmatpush.msra.mxu0 %v965
  %1631 = vmatmul.f32.gmra.mxu0 %v20
  %v1632 = vpop.f32.mrf.mxu0
  %v1633 = vadd.f32 0.0, %v1632
  %1634 = vdwg.mxu0
  %1635 = vmatpush.msra.mxu0 %v1368
  %1636 = vmatpush.msra.mxu0 %v1355
  %1637 = vmatpush.msra.mxu0 %v1342
  %1638 = vmatpush.msra.mxu0 %v1329
  %1639 = vmatpush.msra.mxu0 %v1316
  %1640 = vmatpush.msra.mxu0 %v1303
  %1641 = vmatpush.msra.mxu0 %v1290
  %1642 = vmatpush.msra.mxu0 %v1277
  %1643 = vmatpush.msra.mxu0 %v1264
  %1644 = vmatpush.msra.mxu0 %v1251
  %1645 = vmatpush.msra.mxu0 %v1238
  %1646 = vmatpush.msra.mxu0 %v1225
  %1647 = vmatpush.msra.mxu0 %v1212
  %1648 = vmatpush.msra.mxu0 %v1199
  %1649 = vmatpush.msra.mxu0 %v1186
  %1650 = vmatpush.msra.mxu0 %v1173
  %1651 = vmatmul.f32.gmra.mxu0 %v21
  %v1652 = vpop.f32.mrf.mxu0
  %v1653 = vadd.f32 %v1633, %v1652
  %1654 = vdwg.mxu0
  %1655 = vmatpush.msra.mxu0 %v1161
  %1656 = vmatpush.msra.mxu0 %v1148
  %1657 = vmatpush.msra.mxu0 %v1135
  %1658 = vmatpush.msra.mxu0 %v1122
  %1659 = vmatpush.msra.mxu0 %v1109
  %1660 = vmatpush.msra.mxu0 %v1096
  %1661 = vmatpush.msra.mxu0 %v1083
  %1662 = vmatpush.msra.mxu0 %v1070
  %1663 = vmatpush.msra.mxu0 %v1057
  %1664 = vmatpush.msra.mxu0 %v1044
  %1665 = vmatpush.msra.mxu0 %v1031
  %1666 = vmatpush.msra.mxu0 %v1018
  %1667 = vmatpush.msra.mxu0 %v1005
  %1668 = vmatpush.msra.mxu0 %v992
  %1669 = vmatpush.msra.mxu0 %v979
  %1670 = vmatpush.msra.mxu0 %v966
  %1671 = vmatmul.f32.gmra.mxu0 %v20
  %v1672 = vpop.f32.mrf.mxu0
  %v1673 = vadd.f32 0.0, %v1672
  %1674 = vdwg.mxu0
  %1675 = vmatpush.msra.mxu0 %v1369
  %1676 = vmatpush.msra.mxu0 %v1356
  %1677 = vmatpush.msra.mxu0 %v1343
  %1678 = vmatpush.msra.mxu0 %v1330
  %1679 = vmatpush.msra.mxu0 %v1317
  %1680 = vmatpush.msra.mxu0 %v1304
  %1681 = vmatpush.msra.mxu0 %v1291
  %1682 = vmatpush.msra.mxu0 %v1278
  %1683 = vmatpush.msra.mxu0 %v1265
  %1684 = vmatpush.msra.mxu0 %v1252
  %1685 = vmatpush.msra.mxu0 %v1239
  %1686 = vmatpush.msra.mxu0 %v1226
  %1687 = vmatpush.msra.mxu0 %v1213
  %1688 = vmatpush.msra.mxu0 %v1200
  %1689 = vmatpush.msra.mxu0 %v1187
  %1690 = vmatpush.msra.mxu0 %v1174
  %1691 = vmatmul.f32.gmra.mxu0 %v21
  %v1692 = vpop.f32.mrf.mxu0
  %v1693 = vadd.f32 %v1673, %v1692
  %1694 = vdwg.mxu0
  %1695 = vmatpush.msra.mxu0 %v1162
  %1696 = vmatpush.msra.mxu0 %v1149
  %1697 = vmatpush.msra.mxu0 %v1136
  %1698 = vmatpush.msra.mxu0 %v1123
  %1699 = vmatpush.msra.mxu0 %v1110
  %1700 = vmatpush.msra.mxu0 %v1097
  %1701 = vmatpush.msra.mxu0 %v1084
  %1702 = vmatpush.msra.mxu0 %v1071
  %1703 = vmatpush.msra.mxu0 %v1058
  %1704 = vmatpush.msra.mxu0 %v1045
  %1705 = vmatpush.msra.mxu0 %v1032
  %1706 = vmatpush.msra.mxu0 %v1019
  %1707 = vmatpush.msra.mxu0 %v1006
  %1708 = vmatpush.msra.mxu0 %v993
  %1709 = vmatpush.msra.mxu0 %v980
  %1710 = vmatpush.msra.mxu0 %v967
  %1711 = vmatmul.f32.gmra.mxu0 %v20
  %v1712 = vpop.f32.mrf.mxu0
  %v1713 = vadd.f32 0.0, %v1712
  %1714 = vdwg.mxu0
  %1715 = vmatpush.msra.mxu0 %v1370
  %1716 = vmatpush.msra.mxu0 %v1357
  %1717 = vmatpush.msra.mxu0 %v1344
  %1718 = vmatpush.msra.mxu0 %v1331
  %1719 = vmatpush.msra.mxu0 %v1318
  %1720 = vmatpush.msra.mxu0 %v1305
  %1721 = vmatpush.msra.mxu0 %v1292
  %1722 = vmatpush.msra.mxu0 %v1279
  %1723 = vmatpush.msra.mxu0 %v1266
  %1724 = vmatpush.msra.mxu0 %v1253
  %1725 = vmatpush.msra.mxu0 %v1240
  %1726 = vmatpush.msra.mxu0 %v1227
  %1727 = vmatpush.msra.mxu0 %v1214
  %1728 = vmatpush.msra.mxu0 %v1201
  %1729 = vmatpush.msra.mxu0 %v1188
  %1730 = vmatpush.msra.mxu0 %v1175
  %1731 = vmatmul.f32.gmra.mxu0 %v21
  %v1732 = vpop.f32.mrf.mxu0
  %v1733 = vadd.f32 %v1713, %v1732
  %1734 = vdwg.mxu0
  %1735 = vmatpush.msra.mxu0 %v1163
  %1736 = vmatpush.msra.mxu0 %v1150
  %1737 = vmatpush.msra.mxu0 %v1137
  %1738 = vmatpush.msra.mxu0 %v1124
  %1739 = vmatpush.msra.mxu0 %v1111
  %1740 = vmatpush.msra.mxu0 %v1098
  %1741 = vmatpush.msra.mxu0 %v1085
  %1742 = vmatpush.msra.mxu0 %v1072
  %1743 = vmatpush.msra.mxu0 %v1059
  %1744 = vmatpush.msra.mxu0 %v1046
  %1745 = vmatpush.msra.mxu0 %v1033
  %1746 = vmatpush.msra.mxu0 %v1020
  %1747 = vmatpush.msra.mxu0 %v1007
  %1748 = vmatpush.msra.mxu0 %v994
  %1749 = vmatpush.msra.mxu0 %v981
  %1750 = vmatpush.msra.mxu0 %v968
  %1751 = vmatmul.f32.gmra.mxu0 %v20
  %v1752 = vpop.f32.mrf.mxu0
  %v1753 = vadd.f32 0.0, %v1752
  %1754 = vdwg.mxu0
  %1755 = vmatpush.msra.mxu0 %v1371
  %1756 = vmatpush.msra.mxu0 %v1358
  %1757 = vmatpush.msra.mxu0 %v1345
  %1758 = vmatpush.msra.mxu0 %v1332
  %1759 = vmatpush.msra.mxu0 %v1319
  %1760 = vmatpush.msra.mxu0 %v1306
  %1761 = vmatpush.msra.mxu0 %v1293
  %1762 = vmatpush.msra.mxu0 %v1280
  %1763 = vmatpush.msra.mxu0 %v1267
  %1764 = vmatpush.msra.mxu0 %v1254
  %1765 = vmatpush.msra.mxu0 %v1241
  %1766 = vmatpush.msra.mxu0 %v1228
  %1767 = vmatpush.msra.mxu0 %v1215
  %1768 = vmatpush.msra.mxu0 %v1202
  %1769 = vmatpush.msra.mxu0 %v1189
  %1770 = vmatpush.msra.mxu0 %v1176
  %1771 = vmatmul.f32.gmra.mxu0 %v21
  %v1772 = vpop.f32.mrf.mxu0
  %v1773 = vadd.f32 %v1753, %v1772
  %1774 = vdwg.mxu0
  %1775 = vmatpush.msra.mxu0 %v1164
  %1776 = vmatpush.msra.mxu0 %v1151
  %1777 = vmatpush.msra.mxu0 %v1138
  %1778 = vmatpush.msra.mxu0 %v1125
  %1779 = vmatpush.msra.mxu0 %v1112
  %1780 = vmatpush.msra.mxu0 %v1099
  %1781 = vmatpush.msra.mxu0 %v1086
  %1782 = vmatpush.msra.mxu0 %v1073
  %1783 = vmatpush.msra.mxu0 %v1060
  %1784 = vmatpush.msra.mxu0 %v1047
  %1785 = vmatpush.msra.mxu0 %v1034
  %1786 = vmatpush.msra.mxu0 %v1021
  %1787 = vmatpush.msra.mxu0 %v1008
  %1788 = vmatpush.msra.mxu0 %v995
  %1789 = vmatpush.msra.mxu0 %v982
  %1790 = vmatpush.msra.mxu0 %v969
  %1791 = vmatmul.f32.gmra.mxu0 %v20
  %v1792 = vpop.f32.mrf.mxu0
  %v1793 = vadd.f32 0.0, %v1792
  %1794 = vdwg.mxu0
  %1795 = vmatpush.msra.mxu0 %v1372
  %1796 = vmatpush.msra.mxu0 %v1359
  %1797 = vmatpush.msra.mxu0 %v1346
  %1798 = vmatpush.msra.mxu0 %v1333
  %1799 = vmatpush.msra.mxu0 %v1320
  %1800 = vmatpush.msra.mxu0 %v1307
  %1801 = vmatpush.msra.mxu0 %v1294
  %1802 = vmatpush.msra.mxu0 %v1281
  %1803 = vmatpush.msra.mxu0 %v1268
  %1804 = vmatpush.msra.mxu0 %v1255
  %1805 = vmatpush.msra.mxu0 %v1242
  %1806 = vmatpush.msra.mxu0 %v1229
  %1807 = vmatpush.msra.mxu0 %v1216
  %1808 = vmatpush.msra.mxu0 %v1203
  %1809 = vmatpush.msra.mxu0 %v1190
  %1810 = vmatpush.msra.mxu0 %v1177
  %1811 = vmatmul.f32.gmra.mxu0 %v21
  %v1812 = vpop.f32.mrf.mxu0
  %v1813 = vadd.f32 %v1793, %v1812
  %1814 = vdwg.mxu0
  %1815 = vmatpush.msra.mxu0 %v1165
  %1816 = vmatpush.msra.mxu0 %v1152
  %1817 = vmatpush.msra.mxu0 %v1139
  %1818 = vmatpush.msra.mxu0 %v1126
  %1819 = vmatpush.msra.mxu0 %v1113
  %1820 = vmatpush.msra.mxu0 %v1100
  %1821 = vmatpush.msra.mxu0 %v1087
  %1822 = vmatpush.msra.mxu0 %v1074
  %1823 = vmatpush.msra.mxu0 %v1061
  %1824 = vmatpush.msra.mxu0 %v1048
  %1825 = vmatpush.msra.mxu0 %v1035
  %1826 = vmatpush.msra.mxu0 %v1022
  %1827 = vmatpush.msra.mxu0 %v1009
  %1828 = vmatpush.msra.mxu0 %v996
  %1829 = vmatpush.msra.mxu0 %v983
  %1830 = vmatpush.msra.mxu0 %v970
  %1831 = vmatmul.f32.gmra.mxu0 %v20
  %v1832 = vpop.f32.mrf.mxu0
  %v1833 = vadd.f32 0.0, %v1832
  %1834 = vdwg.mxu0
  %1835 = vmatpush.msra.mxu0 %v1373
  %1836 = vmatpush.msra.mxu0 %v1360
  %1837 = vmatpush.msra.mxu0 %v1347
  %1838 = vmatpush.msra.mxu0 %v1334
  %1839 = vmatpush.msra.mxu0 %v1321
  %1840 = vmatpush.msra.mxu0 %v1308
  %1841 = vmatpush.msra.mxu0 %v1295
  %1842 = vmatpush.msra.mxu0 %v1282
  %1843 = vmatpush.msra.mxu0 %v1269
  %1844 = vmatpush.msra.mxu0 %v1256
  %1845 = vmatpush.msra.mxu0 %v1243
  %1846 = vmatpush.msra.mxu0 %v1230
  %1847 = vmatpush.msra.mxu0 %v1217
  %1848 = vmatpush.msra.mxu0 %v1204
  %1849 = vmatpush.msra.mxu0 %v1191
  %1850 = vmatpush.msra.mxu0 %v1178
  %1851 = vmatmul.f32.gmra.mxu0 %v21
  %v1852 = vpop.f32.mrf.mxu0
  %v1853 = vadd.f32 %v1833, %v1852
  %1854 = vdwg.mxu0
  %1855 = vmatpush.msra.mxu0 %v1166
  %1856 = vmatpush.msra.mxu0 %v1153
  %1857 = vmatpush.msra.mxu0 %v1140
  %1858 = vmatpush.msra.mxu0 %v1127
  %1859 = vmatpush.msra.mxu0 %v1114
  %1860 = vmatpush.msra.mxu0 %v1101
  %1861 = vmatpush.msra.mxu0 %v1088
  %1862 = vmatpush.msra.mxu0 %v1075
  %1863 = vmatpush.msra.mxu0 %v1062
  %1864 = vmatpush.msra.mxu0 %v1049
  %1865 = vmatpush.msra.mxu0 %v1036
  %1866 = vmatpush.msra.mxu0 %v1023
  %1867 = vmatpush.msra.mxu0 %v1010
  %1868 = vmatpush.msra.mxu0 %v997
  %1869 = vmatpush.msra.mxu0 %v984
  %1870 = vmatpush.msra.mxu0 %v971
  %1871 = vmatmul.f32.gmra.mxu0 %v20
  %v1872 = vpop.f32.mrf.mxu0
  %v1873 = vadd.f32 0.0, %v1872
  %1874 = vdwg.mxu0
  %1875 = vmatpush.msra.mxu0 %v1374
  %1876 = vmatpush.msra.mxu0 %v1361
  %1877 = vmatpush.msra.mxu0 %v1348
  %1878 = vmatpush.msra.mxu0 %v1335
  %1879 = vmatpush.msra.mxu0 %v1322
  %1880 = vmatpush.msra.mxu0 %v1309
  %1881 = vmatpush.msra.mxu0 %v1296
  %1882 = vmatpush.msra.mxu0 %v1283
  %1883 = vmatpush.msra.mxu0 %v1270
  %1884 = vmatpush.msra.mxu0 %v1257
  %1885 = vmatpush.msra.mxu0 %v1244
  %1886 = vmatpush.msra.mxu0 %v1231
  %1887 = vmatpush.msra.mxu0 %v1218
  %1888 = vmatpush.msra.mxu0 %v1205
  %1889 = vmatpush.msra.mxu0 %v1192
  %1890 = vmatpush.msra.mxu0 %v1179
  %1891 = vmatmul.f32.gmra.mxu0 %v21
  %v1892 = vpop.f32.mrf.mxu0
  %v1893 = vadd.f32 %v1873, %v1892
  %1894 = vdwg.mxu0
  %v1895 = vmax.f32 %v476, %v1413
  %v1896 = vmax.f32 %v516, %v1453
  %v1897 = vmax.f32 %v556, %v1493
  %v1898 = vmax.f32 %v596, %v1533
  %v1899 = vmax.f32 %v636, %v1573
  %v1900 = vmax.f32 %v676, %v1613
  %v1901 = vmax.f32 %v716, %v1653
  %v1902 = vmax.f32 %v756, %v1693
  %v1903 = vmax.f32 %v796, %v1733
  %v1904 = vmax.f32 %v836, %v1773
  %v1905 = vmax.f32 %v876, %v1813
  %v1906 = vmax.f32 %v916, %v1853
  %v1907 = vmax.f32 %v956, %v1893
  %s1908 = scalar_lea.vmem %s1, 6656
  %v1909 = vld [vmem:[%s1908] sm:$0xff]
  %v1910 = vld [vmem:[%s1908 + $0x8] sm:$0xff]
  %v1911 = vld [vmem:[%s1908 + $0x10] sm:$0xff]
  %v1912 = vld [vmem:[%s1908 + $0x18] sm:$0xff]
  %v1913 = vld [vmem:[%s1908 + $0x20] sm:$0xff]
  %v1914 = vld [vmem:[%s1908 + $0x28] sm:$0xff]
  %v1915 = vld [vmem:[%s1908 + $0x30] sm:$0xff]
  %v1916 = vld [vmem:[%s1908 + $0x38] sm:$0xff]
  %v1917 = vld [vmem:[%s1908 + $0x40] sm:$0xff]
  %v1918 = vld [vmem:[%s1908 + $0x48] sm:$0xff]
  %v1919 = vld [vmem:[%s1908 + $0x50] sm:$0xff]
  %v1920 = vld [vmem:[%s1908 + $0x58] sm:$0xff]
  %v1921 = vld [vmem:[%s1908 + $0x60] sm:$0xff]
  %v1922 = vld [vmem:[%s1908 + $0x68] sm:$0xff]
  %v1923 = vld [vmem:[%s1908 + $0x70] sm:$0xff]
  %v1924 = vld [vmem:[%s1908 + $0x78] sm:$0xff]
  %v1925 = vld [vmem:[%s1908 + $0x80] sm:$0xff]
  %v1926 = vld [vmem:[%s1908 + $0x88] sm:$0xff]
  %v1927 = vld [vmem:[%s1908 + $0x90] sm:$0xff]
  %v1928 = vld [vmem:[%s1908 + $0x98] sm:$0xff]
  %v1929 = vld [vmem:[%s1908 + $0xa0] sm:$0xff]
  %v1930 = vld [vmem:[%s1908 + $0xa8] sm:$0xff]
  %v1931 = vld [vmem:[%s1908 + $0xb0] sm:$0xff]
  %v1932 = vld [vmem:[%s1908 + $0xb8] sm:$0xff]
  %v1933 = vld [vmem:[%s1908 + $0xc0] sm:$0xff]
  %v1934 = vld [vmem:[%s1908 + $0xc8] sm:$0xff]
  %v1935 = vld [vmem:[%s1908 + $0xd0] sm:$0xff]
  %v1936 = vld [vmem:[%s1908 + $0xd8] sm:$0xff]
  %v1937 = vld [vmem:[%s1908 + $0xe0] sm:$0xff]
  %v1938 = vld [vmem:[%s1908 + $0xe8] sm:$0xff]
  %v1939 = vld [vmem:[%s1908 + $0xf0] sm:$0xff]
  %v1940 = vld [vmem:[%s1908 + $0xf8] sm:$0xff]
  %v1941 = vld [vmem:[%s1908 + $0x100] sm:$0xff]
  %v1942 = vld [vmem:[%s1908 + $0x108] sm:$0xff]
  %v1943 = vld [vmem:[%s1908 + $0x110] sm:$0xff]
  %v1944 = vld [vmem:[%s1908 + $0x118] sm:$0xff]
  %v1945 = vld [vmem:[%s1908 + $0x120] sm:$0xff]
  %v1946 = vld [vmem:[%s1908 + $0x128] sm:$0xff]
  %v1947 = vld [vmem:[%s1908 + $0x130] sm:$0xff]
  %v1948 = vld [vmem:[%s1908 + $0x138] sm:$0xff]
  %v1949 = vld [vmem:[%s1908 + $0x140] sm:$0xff]
  %v1950 = vld [vmem:[%s1908 + $0x148] sm:$0xff]
  %v1951 = vld [vmem:[%s1908 + $0x150] sm:$0xff]
  %v1952 = vld [vmem:[%s1908 + $0x158] sm:$0xff]
  %v1953 = vld [vmem:[%s1908 + $0x160] sm:$0xff]
  %v1954 = vld [vmem:[%s1908 + $0x168] sm:$0xff]
  %v1955 = vld [vmem:[%s1908 + $0x170] sm:$0xff]
  %v1956 = vld [vmem:[%s1908 + $0x178] sm:$0xff]
  %v1957 = vld [vmem:[%s1908 + $0x180] sm:$0xff]
  %v1958 = vld [vmem:[%s1908 + $0x188] sm:$0xff]
  %v1959 = vld [vmem:[%s1908 + $0x190] sm:$0xff]
  %v1960 = vld [vmem:[%s1908 + $0x198] sm:$0xff]
  %v1961 = vld [vmem:[%s1908 + $0x1a0] sm:$0xff]
  %v1962 = vld [vmem:[%s1908 + $0x1a8] sm:$0xff]
  %v1963 = vld [vmem:[%s1908 + $0x1b0] sm:$0xff]
  %v1964 = vld [vmem:[%s1908 + $0x1b8] sm:$0xff]
  %v1965 = vld [vmem:[%s1908 + $0x1c0] sm:$0xff]
  %v1966 = vld [vmem:[%s1908 + $0x1c8] sm:$0xff]
  %v1967 = vld [vmem:[%s1908 + $0x1d0] sm:$0xff]
  %v1968 = vld [vmem:[%s1908 + $0x1d8] sm:$0xff]
  %v1969 = vld [vmem:[%s1908 + $0x1e0] sm:$0xff]
  %v1970 = vld [vmem:[%s1908 + $0x1e8] sm:$0xff]
  %v1971 = vld [vmem:[%s1908 + $0x1f0] sm:$0xff]
  %v1972 = vld [vmem:[%s1908 + $0x1f8] sm:$0xff]
  %v1973 = vld [vmem:[%s1908 + $0x200] sm:$0xff]
  %v1974 = vld [vmem:[%s1908 + $0x208] sm:$0xff]
  %v1975 = vld [vmem:[%s1908 + $0x210] sm:$0xff]
  %v1976 = vld [vmem:[%s1908 + $0x218] sm:$0xff]
  %v1977 = vld [vmem:[%s1908 + $0x220] sm:$0xff]
  %v1978 = vld [vmem:[%s1908 + $0x228] sm:$0xff]
  %v1979 = vld [vmem:[%s1908 + $0x230] sm:$0xff]
  %v1980 = vld [vmem:[%s1908 + $0x238] sm:$0xff]
  %v1981 = vld [vmem:[%s1908 + $0x240] sm:$0xff]
  %v1982 = vld [vmem:[%s1908 + $0x248] sm:$0xff]
  %v1983 = vld [vmem:[%s1908 + $0x250] sm:$0xff]
  %v1984 = vld [vmem:[%s1908 + $0x258] sm:$0xff]
  %v1985 = vld [vmem:[%s1908 + $0x260] sm:$0xff]
  %v1986 = vld [vmem:[%s1908 + $0x268] sm:$0xff]
  %v1987 = vld [vmem:[%s1908 + $0x270] sm:$0xff]
  %v1988 = vld [vmem:[%s1908 + $0x278] sm:$0xff]
  %v1989 = vld [vmem:[%s1908 + $0x280] sm:$0xff]
  %v1990 = vld [vmem:[%s1908 + $0x288] sm:$0xff]
  %v1991 = vld [vmem:[%s1908 + $0x290] sm:$0xff]
  %v1992 = vld [vmem:[%s1908 + $0x298] sm:$0xff]
  %v1993 = vld [vmem:[%s1908 + $0x2a0] sm:$0xff]
  %v1994 = vld [vmem:[%s1908 + $0x2a8] sm:$0xff]
  %v1995 = vld [vmem:[%s1908 + $0x2b0] sm:$0xff]
  %v1996 = vld [vmem:[%s1908 + $0x2b8] sm:$0xff]
  %v1997 = vld [vmem:[%s1908 + $0x2c0] sm:$0xff]
  %v1998 = vld [vmem:[%s1908 + $0x2c8] sm:$0xff]
  %v1999 = vld [vmem:[%s1908 + $0x2d0] sm:$0xff]
  %v2000 = vld [vmem:[%s1908 + $0x2d8] sm:$0xff]
  %v2001 = vld [vmem:[%s1908 + $0x2e0] sm:$0xff]
  %v2002 = vld [vmem:[%s1908 + $0x2e8] sm:$0xff]
  %v2003 = vld [vmem:[%s1908 + $0x2f0] sm:$0xff]
  %v2004 = vld [vmem:[%s1908 + $0x2f8] sm:$0xff]
  %v2005 = vld [vmem:[%s1908 + $0x300] sm:$0xff]
  %v2006 = vld [vmem:[%s1908 + $0x308] sm:$0xff]
  %v2007 = vld [vmem:[%s1908 + $0x310] sm:$0xff]
  %v2008 = vld [vmem:[%s1908 + $0x318] sm:$0xff]
  %v2009 = vld [vmem:[%s1908 + $0x320] sm:$0xff]
  %v2010 = vld [vmem:[%s1908 + $0x328] sm:$0xff]
  %v2011 = vld [vmem:[%s1908 + $0x330] sm:$0xff]
  %v2012 = vld [vmem:[%s1908 + $0x338] sm:$0xff]
  %v2013 = vld [vmem:[%s1908 + $0x340] sm:$0xff]
  %v2014 = vld [vmem:[%s1908 + $0x348] sm:$0xff]
  %v2015 = vld [vmem:[%s1908 + $0x350] sm:$0xff]
  %v2016 = vld [vmem:[%s1908 + $0x358] sm:$0xff]
  %v2017 = vld [vmem:[%s1908 + $0x360] sm:$0xff]
  %v2018 = vld [vmem:[%s1908 + $0x368] sm:$0xff]
  %v2019 = vld [vmem:[%s1908 + $0x370] sm:$0xff]
  %v2020 = vld [vmem:[%s1908 + $0x378] sm:$0xff]
  %v2021 = vld [vmem:[%s1908 + $0x380] sm:$0xff]
  %v2022 = vld [vmem:[%s1908 + $0x388] sm:$0xff]
  %v2023 = vld [vmem:[%s1908 + $0x390] sm:$0xff]
  %v2024 = vld [vmem:[%s1908 + $0x398] sm:$0xff]
  %v2025 = vld [vmem:[%s1908 + $0x3a0] sm:$0xff]
  %v2026 = vld [vmem:[%s1908 + $0x3a8] sm:$0xff]
  %v2027 = vld [vmem:[%s1908 + $0x3b0] sm:$0xff]
  %v2028 = vld [vmem:[%s1908 + $0x3b8] sm:$0xff]
  %v2029 = vld [vmem:[%s1908 + $0x3c0] sm:$0xff]
  %v2030 = vld [vmem:[%s1908 + $0x3c8] sm:$0xff]
  %v2031 = vld [vmem:[%s1908 + $0x3d0] sm:$0xff]
  %v2032 = vld [vmem:[%s1908 + $0x3d8] sm:$0xff]
  %v2033 = vld [vmem:[%s1908 + $0x3e0] sm:$0xff]
  %v2034 = vld [vmem:[%s1908 + $0x3e8] sm:$0xff]
  %v2035 = vld [vmem:[%s1908 + $0x3f0] sm:$0xff]
  %v2036 = vld [vmem:[%s1908 + $0x3f8] sm:$0xff]
  %v2037 = vld [vmem:[%s1908 + $0x400] sm:$0xff]
  %v2038 = vld [vmem:[%s1908 + $0x408] sm:$0xff]
  %v2039 = vld [vmem:[%s1908 + $0x410] sm:$0xff]
  %v2040 = vld [vmem:[%s1908 + $0x418] sm:$0xff]
  %v2041 = vld [vmem:[%s1908 + $0x420] sm:$0xff]
  %v2042 = vld [vmem:[%s1908 + $0x428] sm:$0xff]
  %v2043 = vld [vmem:[%s1908 + $0x430] sm:$0xff]
  %v2044 = vld [vmem:[%s1908 + $0x438] sm:$0xff]
  %v2045 = vld [vmem:[%s1908 + $0x440] sm:$0xff]
  %v2046 = vld [vmem:[%s1908 + $0x448] sm:$0xff]
  %v2047 = vld [vmem:[%s1908 + $0x450] sm:$0xff]
  %v2048 = vld [vmem:[%s1908 + $0x458] sm:$0xff]
  %v2049 = vld [vmem:[%s1908 + $0x460] sm:$0xff]
  %v2050 = vld [vmem:[%s1908 + $0x468] sm:$0xff]
  %v2051 = vld [vmem:[%s1908 + $0x470] sm:$0xff]
  %v2052 = vld [vmem:[%s1908 + $0x478] sm:$0xff]
  %v2053 = vld [vmem:[%s1908 + $0x480] sm:$0xff]
  %v2054 = vld [vmem:[%s1908 + $0x488] sm:$0xff]
  %v2055 = vld [vmem:[%s1908 + $0x490] sm:$0xff]
  %v2056 = vld [vmem:[%s1908 + $0x498] sm:$0xff]
  %v2057 = vld [vmem:[%s1908 + $0x4a0] sm:$0xff]
  %v2058 = vld [vmem:[%s1908 + $0x4a8] sm:$0xff]
  %v2059 = vld [vmem:[%s1908 + $0x4b0] sm:$0xff]
  %v2060 = vld [vmem:[%s1908 + $0x4b8] sm:$0xff]
  %v2061 = vld [vmem:[%s1908 + $0x4c0] sm:$0xff]
  %v2062 = vld [vmem:[%s1908 + $0x4c8] sm:$0xff]
  %v2063 = vld [vmem:[%s1908 + $0x4d0] sm:$0xff]
  %v2064 = vld [vmem:[%s1908 + $0x4d8] sm:$0xff]
  %v2065 = vld [vmem:[%s1908 + $0x4e0] sm:$0xff]
  %v2066 = vld [vmem:[%s1908 + $0x4e8] sm:$0xff]
  %v2067 = vld [vmem:[%s1908 + $0x4f0] sm:$0xff]
  %v2068 = vld [vmem:[%s1908 + $0x4f8] sm:$0xff]
  %v2069 = vld [vmem:[%s1908 + $0x500] sm:$0xff]
  %v2070 = vld [vmem:[%s1908 + $0x508] sm:$0xff]
  %v2071 = vld [vmem:[%s1908 + $0x510] sm:$0xff]
  %v2072 = vld [vmem:[%s1908 + $0x518] sm:$0xff]
  %v2073 = vld [vmem:[%s1908 + $0x520] sm:$0xff]
  %v2074 = vld [vmem:[%s1908 + $0x528] sm:$0xff]
  %v2075 = vld [vmem:[%s1908 + $0x530] sm:$0xff]
  %v2076 = vld [vmem:[%s1908 + $0x538] sm:$0xff]
  %v2077 = vld [vmem:[%s1908 + $0x540] sm:$0xff]
  %v2078 = vld [vmem:[%s1908 + $0x548] sm:$0xff]
  %v2079 = vld [vmem:[%s1908 + $0x550] sm:$0xff]
  %v2080 = vld [vmem:[%s1908 + $0x558] sm:$0xff]
  %v2081 = vld [vmem:[%s1908 + $0x560] sm:$0xff]
  %v2082 = vld [vmem:[%s1908 + $0x568] sm:$0xff]
  %v2083 = vld [vmem:[%s1908 + $0x570] sm:$0xff]
  %v2084 = vld [vmem:[%s1908 + $0x578] sm:$0xff]
  %v2085 = vld [vmem:[%s1908 + $0x580] sm:$0xff]
  %v2086 = vld [vmem:[%s1908 + $0x588] sm:$0xff]
  %v2087 = vld [vmem:[%s1908 + $0x590] sm:$0xff]
  %v2088 = vld [vmem:[%s1908 + $0x598] sm:$0xff]
  %v2089 = vld [vmem:[%s1908 + $0x5a0] sm:$0xff]
  %v2090 = vld [vmem:[%s1908 + $0x5a8] sm:$0xff]
  %v2091 = vld [vmem:[%s1908 + $0x5b0] sm:$0xff]
  %v2092 = vld [vmem:[%s1908 + $0x5b8] sm:$0xff]
  %v2093 = vld [vmem:[%s1908 + $0x5c0] sm:$0xff]
  %v2094 = vld [vmem:[%s1908 + $0x5c8] sm:$0xff]
  %v2095 = vld [vmem:[%s1908 + $0x5d0] sm:$0xff]
  %v2096 = vld [vmem:[%s1908 + $0x5d8] sm:$0xff]
  %v2097 = vld [vmem:[%s1908 + $0x5e0] sm:$0xff]
  %v2098 = vld [vmem:[%s1908 + $0x5e8] sm:$0xff]
  %v2099 = vld [vmem:[%s1908 + $0x5f0] sm:$0xff]
  %v2100 = vld [vmem:[%s1908 + $0x5f8] sm:$0xff]
  %v2101 = vld [vmem:[%s1908 + $0x600] sm:$0xff]
  %v2102 = vld [vmem:[%s1908 + $0x608] sm:$0xff]
  %v2103 = vld [vmem:[%s1908 + $0x610] sm:$0xff]
  %v2104 = vld [vmem:[%s1908 + $0x618] sm:$0xff]
  %v2105 = vld [vmem:[%s1908 + $0x620] sm:$0xff]
  %v2106 = vld [vmem:[%s1908 + $0x628] sm:$0xff]
  %v2107 = vld [vmem:[%s1908 + $0x630] sm:$0xff]
  %v2108 = vld [vmem:[%s1908 + $0x638] sm:$0xff]
  %v2109 = vld [vmem:[%s1908 + $0x640] sm:$0xff]
  %v2110 = vld [vmem:[%s1908 + $0x648] sm:$0xff]
  %v2111 = vld [vmem:[%s1908 + $0x650] sm:$0xff]
  %v2112 = vld [vmem:[%s1908 + $0x658] sm:$0xff]
  %v2113 = vld [vmem:[%s1908 + $0x660] sm:$0xff]
  %v2114 = vld [vmem:[%s1908 + $0x668] sm:$0xff]
  %v2115 = vld [vmem:[%s1908 + $0x670] sm:$0xff]
  %v2116 = vld [vmem:[%s1908 + $0x678] sm:$0xff]
  %v2117 = vld [vmem:[%s1908 + $0x680] sm:$0xff]
  %v2118 = vld [vmem:[%s1908 + $0x688] sm:$0xff]
  %v2119 = vld [vmem:[%s1908 + $0x690] sm:$0xff]
  %v2120 = vld [vmem:[%s1908 + $0x698] sm:$0xff]
  %v2121 = vld [vmem:[%s1908 + $0x6a0] sm:$0xff]
  %v2122 = vld [vmem:[%s1908 + $0x6a8] sm:$0xff]
  %v2123 = vld [vmem:[%s1908 + $0x6b0] sm:$0xff]
  %v2124 = vld [vmem:[%s1908 + $0x6b8] sm:$0xff]
  %v2125 = vld [vmem:[%s1908 + $0x6c0] sm:$0xff]
  %v2126 = vld [vmem:[%s1908 + $0x6c8] sm:$0xff]
  %v2127 = vld [vmem:[%s1908 + $0x6d0] sm:$0xff]
  %v2128 = vld [vmem:[%s1908 + $0x6d8] sm:$0xff]
  %v2129 = vld [vmem:[%s1908 + $0x6e0] sm:$0xff]
  %v2130 = vld [vmem:[%s1908 + $0x6e8] sm:$0xff]
  %v2131 = vld [vmem:[%s1908 + $0x6f0] sm:$0xff]
  %v2132 = vld [vmem:[%s1908 + $0x6f8] sm:$0xff]
  %v2133 = vld [vmem:[%s1908 + $0x700] sm:$0xff]
  %v2134 = vld [vmem:[%s1908 + $0x708] sm:$0xff]
  %v2135 = vld [vmem:[%s1908 + $0x710] sm:$0xff]
  %v2136 = vld [vmem:[%s1908 + $0x718] sm:$0xff]
  %v2137 = vld [vmem:[%s1908 + $0x720] sm:$0xff]
  %v2138 = vld [vmem:[%s1908 + $0x728] sm:$0xff]
  %v2139 = vld [vmem:[%s1908 + $0x730] sm:$0xff]
  %v2140 = vld [vmem:[%s1908 + $0x738] sm:$0xff]
  %v2141 = vld [vmem:[%s1908 + $0x740] sm:$0xff]
  %v2142 = vld [vmem:[%s1908 + $0x748] sm:$0xff]
  %v2143 = vld [vmem:[%s1908 + $0x750] sm:$0xff]
  %v2144 = vld [vmem:[%s1908 + $0x758] sm:$0xff]
  %v2145 = vld [vmem:[%s1908 + $0x760] sm:$0xff]
  %v2146 = vld [vmem:[%s1908 + $0x768] sm:$0xff]
  %v2147 = vld [vmem:[%s1908 + $0x770] sm:$0xff]
  %v2148 = vld [vmem:[%s1908 + $0x778] sm:$0xff]
  %v2149 = vld [vmem:[%s1908 + $0x780] sm:$0xff]
  %v2150 = vld [vmem:[%s1908 + $0x788] sm:$0xff]
  %v2151 = vld [vmem:[%s1908 + $0x790] sm:$0xff]
  %v2152 = vld [vmem:[%s1908 + $0x798] sm:$0xff]
  %v2153 = vld [vmem:[%s1908 + $0x7a0] sm:$0xff]
  %v2154 = vld [vmem:[%s1908 + $0x7a8] sm:$0xff]
  %v2155 = vld [vmem:[%s1908 + $0x7b0] sm:$0xff]
  %v2156 = vld [vmem:[%s1908 + $0x7b8] sm:$0xff]
  %v2157 = vld [vmem:[%s1908 + $0x7c0] sm:$0xff]
  %v2158 = vld [vmem:[%s1908 + $0x7c8] sm:$0xff]
  %v2159 = vld [vmem:[%s1908 + $0x7d0] sm:$0xff]
  %v2160 = vld [vmem:[%s1908 + $0x7d8] sm:$0xff]
  %v2161 = vld [vmem:[%s1908 + $0x7e0] sm:$0xff]
  %v2162 = vld [vmem:[%s1908 + $0x7e8] sm:$0xff]
  %v2163 = vld [vmem:[%s1908 + $0x7f0] sm:$0xff]
  %v2164 = vld [vmem:[%s1908 + $0x7f8] sm:$0xff]
  %v2165 = vld [vmem:[%s1908 + $0x800] sm:$0xff]
  %v2166 = vld [vmem:[%s1908 + $0x808] sm:$0xff]
  %v2167 = vld [vmem:[%s1908 + $0x810] sm:$0xff]
  %v2168 = vld [vmem:[%s1908 + $0x818] sm:$0xff]
  %v2169 = vld [vmem:[%s1908 + $0x820] sm:$0xff]
  %v2170 = vld [vmem:[%s1908 + $0x828] sm:$0xff]
  %v2171 = vld [vmem:[%s1908 + $0x830] sm:$0xff]
  %v2172 = vld [vmem:[%s1908 + $0x838] sm:$0xff]
  %v2173 = vld [vmem:[%s1908 + $0x840] sm:$0xff]
  %v2174 = vld [vmem:[%s1908 + $0x848] sm:$0xff]
  %v2175 = vld [vmem:[%s1908 + $0x850] sm:$0xff]
  %v2176 = vld [vmem:[%s1908 + $0x858] sm:$0xff]
  %v2177 = vld [vmem:[%s1908 + $0x860] sm:$0xff]
  %v2178 = vld [vmem:[%s1908 + $0x868] sm:$0xff]
  %v2179 = vld [vmem:[%s1908 + $0x870] sm:$0xff]
  %v2180 = vld [vmem:[%s1908 + $0x878] sm:$0xff]
  %v2181 = vld [vmem:[%s1908 + $0x880] sm:$0xff]
  %v2182 = vld [vmem:[%s1908 + $0x888] sm:$0xff]
  %v2183 = vld [vmem:[%s1908 + $0x890] sm:$0xff]
  %v2184 = vld [vmem:[%s1908 + $0x898] sm:$0xff]
  %v2185 = vld [vmem:[%s1908 + $0x8a0] sm:$0xff]
  %v2186 = vld [vmem:[%s1908 + $0x8a8] sm:$0xff]
  %v2187 = vld [vmem:[%s1908 + $0x8b0] sm:$0xff]
  %v2188 = vld [vmem:[%s1908 + $0x8b8] sm:$0xff]
  %v2189 = vld [vmem:[%s1908 + $0x8c0] sm:$0xff]
  %v2190 = vld [vmem:[%s1908 + $0x8c8] sm:$0xff]
  %v2191 = vld [vmem:[%s1908 + $0x8d0] sm:$0xff]
  %v2192 = vld [vmem:[%s1908 + $0x8d8] sm:$0xff]
  %v2193 = vld [vmem:[%s1908 + $0x8e0] sm:$0xff]
  %v2194 = vld [vmem:[%s1908 + $0x8e8] sm:$0xff]
  %v2195 = vld [vmem:[%s1908 + $0x8f0] sm:$0xff]
  %v2196 = vld [vmem:[%s1908 + $0x8f8] sm:$0xff]
  %v2197 = vld [vmem:[%s1908 + $0x900] sm:$0xff]
  %v2198 = vld [vmem:[%s1908 + $0x908] sm:$0xff]
  %v2199 = vld [vmem:[%s1908 + $0x910] sm:$0xff]
  %v2200 = vld [vmem:[%s1908 + $0x918] sm:$0xff]
  %v2201 = vld [vmem:[%s1908 + $0x920] sm:$0xff]
  %v2202 = vld [vmem:[%s1908 + $0x928] sm:$0xff]
  %v2203 = vld [vmem:[%s1908 + $0x930] sm:$0xff]
  %v2204 = vld [vmem:[%s1908 + $0x938] sm:$0xff]
  %v2205 = vld [vmem:[%s1908 + $0x940] sm:$0xff]
  %v2206 = vld [vmem:[%s1908 + $0x948] sm:$0xff]
  %v2207 = vld [vmem:[%s1908 + $0x950] sm:$0xff]
  %v2208 = vld [vmem:[%s1908 + $0x958] sm:$0xff]
  %v2209 = vld [vmem:[%s1908 + $0x960] sm:$0xff]
  %v2210 = vld [vmem:[%s1908 + $0x968] sm:$0xff]
  %v2211 = vld [vmem:[%s1908 + $0x970] sm:$0xff]
  %v2212 = vld [vmem:[%s1908 + $0x978] sm:$0xff]
  %v2213 = vld [vmem:[%s1908 + $0x980] sm:$0xff]
  %v2214 = vld [vmem:[%s1908 + $0x988] sm:$0xff]
  %v2215 = vld [vmem:[%s1908 + $0x990] sm:$0xff]
  %v2216 = vld [vmem:[%s1908 + $0x998] sm:$0xff]
  %v2217 = vld [vmem:[%s1908 + $0x9a0] sm:$0xff]
  %v2218 = vld [vmem:[%s1908 + $0x9a8] sm:$0xff]
  %v2219 = vld [vmem:[%s1908 + $0x9b0] sm:$0xff]
  %v2220 = vld [vmem:[%s1908 + $0x9b8] sm:$0xff]
  %v2221 = vld [vmem:[%s1908 + $0x9c0] sm:$0xff]
  %v2222 = vld [vmem:[%s1908 + $0x9c8] sm:$0xff]
  %v2223 = vld [vmem:[%s1908 + $0x9d0] sm:$0xff]
  %v2224 = vld [vmem:[%s1908 + $0x9d8] sm:$0xff]
  %v2225 = vld [vmem:[%s1908 + $0x9e0] sm:$0xff]
  %v2226 = vld [vmem:[%s1908 + $0x9e8] sm:$0xff]
  %v2227 = vld [vmem:[%s1908 + $0x9f0] sm:$0xff]
  %v2228 = vld [vmem:[%s1908 + $0x9f8] sm:$0xff]
  %v2229 = vld [vmem:[%s1908 + $0xa00] sm:$0xff]
  %v2230 = vld [vmem:[%s1908 + $0xa08] sm:$0xff]
  %v2231 = vld [vmem:[%s1908 + $0xa10] sm:$0xff]
  %v2232 = vld [vmem:[%s1908 + $0xa18] sm:$0xff]
  %v2233 = vld [vmem:[%s1908 + $0xa20] sm:$0xff]
  %v2234 = vld [vmem:[%s1908 + $0xa28] sm:$0xff]
  %v2235 = vld [vmem:[%s1908 + $0xa30] sm:$0xff]
  %v2236 = vld [vmem:[%s1908 + $0xa38] sm:$0xff]
  %v2237 = vld [vmem:[%s1908 + $0xa40] sm:$0xff]
  %v2238 = vld [vmem:[%s1908 + $0xa48] sm:$0xff]
  %v2239 = vld [vmem:[%s1908 + $0xa50] sm:$0xff]
  %v2240 = vld [vmem:[%s1908 + $0xa58] sm:$0xff]
  %v2241 = vld [vmem:[%s1908 + $0xa60] sm:$0xff]
  %v2242 = vld [vmem:[%s1908 + $0xa68] sm:$0xff]
  %v2243 = vld [vmem:[%s1908 + $0xa70] sm:$0xff]
  %v2244 = vld [vmem:[%s1908 + $0xa78] sm:$0xff]
  %v2245 = vld [vmem:[%s1908 + $0xa80] sm:$0xff]
  %v2246 = vld [vmem:[%s1908 + $0xa88] sm:$0xff]
  %v2247 = vld [vmem:[%s1908 + $0xa90] sm:$0xff]
  %v2248 = vld [vmem:[%s1908 + $0xa98] sm:$0xff]
  %v2249 = vld [vmem:[%s1908 + $0xaa0] sm:$0xff]
  %v2250 = vld [vmem:[%s1908 + $0xaa8] sm:$0xff]
  %v2251 = vld [vmem:[%s1908 + $0xab0] sm:$0xff]
  %v2252 = vld [vmem:[%s1908 + $0xab8] sm:$0xff]
  %v2253 = vld [vmem:[%s1908 + $0xac0] sm:$0xff]
  %v2254 = vld [vmem:[%s1908 + $0xac8] sm:$0xff]
  %v2255 = vld [vmem:[%s1908 + $0xad0] sm:$0xff]
  %v2256 = vld [vmem:[%s1908 + $0xad8] sm:$0xff]
  %v2257 = vld [vmem:[%s1908 + $0xae0] sm:$0xff]
  %v2258 = vld [vmem:[%s1908 + $0xae8] sm:$0xff]
  %v2259 = vld [vmem:[%s1908 + $0xaf0] sm:$0xff]
  %v2260 = vld [vmem:[%s1908 + $0xaf8] sm:$0xff]
  %v2261 = vld [vmem:[%s1908 + $0xb00] sm:$0xff]
  %v2262 = vld [vmem:[%s1908 + $0xb08] sm:$0xff]
  %v2263 = vld [vmem:[%s1908 + $0xb10] sm:$0xff]
  %v2264 = vld [vmem:[%s1908 + $0xb18] sm:$0xff]
  %v2265 = vld [vmem:[%s1908 + $0xb20] sm:$0xff]
  %v2266 = vld [vmem:[%s1908 + $0xb28] sm:$0xff]
  %v2267 = vld [vmem:[%s1908 + $0xb30] sm:$0xff]
  %v2268 = vld [vmem:[%s1908 + $0xb38] sm:$0xff]
  %v2269 = vld [vmem:[%s1908 + $0xb40] sm:$0xff]
  %v2270 = vld [vmem:[%s1908 + $0xb48] sm:$0xff]
  %v2271 = vld [vmem:[%s1908 + $0xb50] sm:$0xff]
  %v2272 = vld [vmem:[%s1908 + $0xb58] sm:$0xff]
  %v2273 = vld [vmem:[%s1908 + $0xb60] sm:$0xff]
  %v2274 = vld [vmem:[%s1908 + $0xb68] sm:$0xff]
  %v2275 = vld [vmem:[%s1908 + $0xb70] sm:$0xff]
  %v2276 = vld [vmem:[%s1908 + $0xb78] sm:$0xff]
  %v2277 = vld [vmem:[%s1908 + $0xb80] sm:$0xff]
  %v2278 = vld [vmem:[%s1908 + $0xb88] sm:$0xff]
  %v2279 = vld [vmem:[%s1908 + $0xb90] sm:$0xff]
  %v2280 = vld [vmem:[%s1908 + $0xb98] sm:$0xff]
  %v2281 = vld [vmem:[%s1908 + $0xba0] sm:$0xff]
  %v2282 = vld [vmem:[%s1908 + $0xba8] sm:$0xff]
  %v2283 = vld [vmem:[%s1908 + $0xbb0] sm:$0xff]
  %v2284 = vld [vmem:[%s1908 + $0xbb8] sm:$0xff]
  %v2285 = vld [vmem:[%s1908 + $0xbc0] sm:$0xff]
  %v2286 = vld [vmem:[%s1908 + $0xbc8] sm:$0xff]
  %v2287 = vld [vmem:[%s1908 + $0xbd0] sm:$0xff]
  %v2288 = vld [vmem:[%s1908 + $0xbd8] sm:$0xff]
  %v2289 = vld [vmem:[%s1908 + $0xbe0] sm:$0xff]
  %v2290 = vld [vmem:[%s1908 + $0xbe8] sm:$0xff]
  %v2291 = vld [vmem:[%s1908 + $0xbf0] sm:$0xff]
  %v2292 = vld [vmem:[%s1908 + $0xbf8] sm:$0xff]
  %v2293 = vld [vmem:[%s1908 + $0xc00] sm:$0xff]
  %v2294 = vld [vmem:[%s1908 + $0xc08] sm:$0xff]
  %v2295 = vld [vmem:[%s1908 + $0xc10] sm:$0xff]
  %v2296 = vld [vmem:[%s1908 + $0xc18] sm:$0xff]
  %v2297 = vld [vmem:[%s1908 + $0xc20] sm:$0xff]
  %v2298 = vld [vmem:[%s1908 + $0xc28] sm:$0xff]
  %v2299 = vld [vmem:[%s1908 + $0xc30] sm:$0xff]
  %v2300 = vld [vmem:[%s1908 + $0xc38] sm:$0xff]
  %v2301 = vld [vmem:[%s1908 + $0xc40] sm:$0xff]
  %v2302 = vld [vmem:[%s1908 + $0xc48] sm:$0xff]
  %v2303 = vld [vmem:[%s1908 + $0xc50] sm:$0xff]
  %v2304 = vld [vmem:[%s1908 + $0xc58] sm:$0xff]
  %v2305 = vld [vmem:[%s1908 + $0xc60] sm:$0xff]
  %v2306 = vld [vmem:[%s1908 + $0xc68] sm:$0xff]
  %v2307 = vld [vmem:[%s1908 + $0xc70] sm:$0xff]
  %v2308 = vld [vmem:[%s1908 + $0xc78] sm:$0xff]
  %v2309 = vld [vmem:[%s1908 + $0xc80] sm:$0xff]
  %v2310 = vld [vmem:[%s1908 + $0xc88] sm:$0xff]
  %v2311 = vld [vmem:[%s1908 + $0xc90] sm:$0xff]
  %v2312 = vld [vmem:[%s1908 + $0xc98] sm:$0xff]
  %v2313 = vld [vmem:[%s1908 + $0xca0] sm:$0xff]
  %v2314 = vld [vmem:[%s1908 + $0xca8] sm:$0xff]
  %v2315 = vld [vmem:[%s1908 + $0xcb0] sm:$0xff]
  %v2316 = vld [vmem:[%s1908 + $0xcb8] sm:$0xff]
  %v2317 = vld [vmem:[%s1908 + $0xcc0] sm:$0xff]
  %v2318 = vld [vmem:[%s1908 + $0xcc8] sm:$0xff]
  %v2319 = vld [vmem:[%s1908 + $0xcd0] sm:$0xff]
  %v2320 = vld [vmem:[%s1908 + $0xcd8] sm:$0xff]
  %v2321 = vld [vmem:[%s1908 + $0xce0] sm:$0xff]
  %v2322 = vld [vmem:[%s1908 + $0xce8] sm:$0xff]
  %v2323 = vld [vmem:[%s1908 + $0xcf0] sm:$0xff]
  %v2324 = vld [vmem:[%s1908 + $0xcf8] sm:$0xff]
  %2325 = vmatpush.msra.mxu0 %v2104
  %2326 = vmatpush.msra.mxu0 %v2091
  %2327 = vmatpush.msra.mxu0 %v2078
  %2328 = vmatpush.msra.mxu0 %v2065
  %2329 = vmatpush.msra.mxu0 %v2052
  %2330 = vmatpush.msra.mxu0 %v2039
  %2331 = vmatpush.msra.mxu0 %v2026
  %2332 = vmatpush.msra.mxu0 %v2013
  %2333 = vmatpush.msra.mxu0 %v2000
  %2334 = vmatpush.msra.mxu0 %v1987
  %2335 = vmatpush.msra.mxu0 %v1974
  %2336 = vmatpush.msra.mxu0 %v1961
  %2337 = vmatpush.msra.mxu0 %v1948
  %2338 = vmatpush.msra.mxu0 %v1935
  %2339 = vmatpush.msra.mxu0 %v1922
  %2340 = vmatpush.msra.mxu0 %v1909
  %2341 = vmatmul.f32.gmra.mxu0 %v20
  %v2342 = vpop.f32.mrf.mxu0
  %v2343 = vadd.f32 0.0, %v2342
  %2344 = vdwg.mxu0
  %2345 = vmatpush.msra.mxu0 %v2312
  %2346 = vmatpush.msra.mxu0 %v2299
  %2347 = vmatpush.msra.mxu0 %v2286
  %2348 = vmatpush.msra.mxu0 %v2273
  %2349 = vmatpush.msra.mxu0 %v2260
  %2350 = vmatpush.msra.mxu0 %v2247
  %2351 = vmatpush.msra.mxu0 %v2234
  %2352 = vmatpush.msra.mxu0 %v2221
  %2353 = vmatpush.msra.mxu0 %v2208
  %2354 = vmatpush.msra.mxu0 %v2195
  %2355 = vmatpush.msra.mxu0 %v2182
  %2356 = vmatpush.msra.mxu0 %v2169
  %2357 = vmatpush.msra.mxu0 %v2156
  %2358 = vmatpush.msra.mxu0 %v2143
  %2359 = vmatpush.msra.mxu0 %v2130
  %2360 = vmatpush.msra.mxu0 %v2117
  %2361 = vmatmul.f32.gmra.mxu0 %v21
  %v2362 = vpop.f32.mrf.mxu0
  %v2363 = vadd.f32 %v2343, %v2362
  %2364 = vdwg.mxu0
  %2365 = vmatpush.msra.mxu0 %v2105
  %2366 = vmatpush.msra.mxu0 %v2092
  %2367 = vmatpush.msra.mxu0 %v2079
  %2368 = vmatpush.msra.mxu0 %v2066
  %2369 = vmatpush.msra.mxu0 %v2053
  %2370 = vmatpush.msra.mxu0 %v2040
  %2371 = vmatpush.msra.mxu0 %v2027
  %2372 = vmatpush.msra.mxu0 %v2014
  %2373 = vmatpush.msra.mxu0 %v2001
  %2374 = vmatpush.msra.mxu0 %v1988
  %2375 = vmatpush.msra.mxu0 %v1975
  %2376 = vmatpush.msra.mxu0 %v1962
  %2377 = vmatpush.msra.mxu0 %v1949
  %2378 = vmatpush.msra.mxu0 %v1936
  %2379 = vmatpush.msra.mxu0 %v1923
  %2380 = vmatpush.msra.mxu0 %v1910
  %2381 = vmatmul.f32.gmra.mxu0 %v20
  %v2382 = vpop.f32.mrf.mxu0
  %v2383 = vadd.f32 0.0, %v2382
  %2384 = vdwg.mxu0
  %2385 = vmatpush.msra.mxu0 %v2313
  %2386 = vmatpush.msra.mxu0 %v2300
  %2387 = vmatpush.msra.mxu0 %v2287
  %2388 = vmatpush.msra.mxu0 %v2274
  %2389 = vmatpush.msra.mxu0 %v2261
  %2390 = vmatpush.msra.mxu0 %v2248
  %2391 = vmatpush.msra.mxu0 %v2235
  %2392 = vmatpush.msra.mxu0 %v2222
  %2393 = vmatpush.msra.mxu0 %v2209
  %2394 = vmatpush.msra.mxu0 %v2196
  %2395 = vmatpush.msra.mxu0 %v2183
  %2396 = vmatpush.msra.mxu0 %v2170
  %2397 = vmatpush.msra.mxu0 %v2157
  %2398 = vmatpush.msra.mxu0 %v2144
  %2399 = vmatpush.msra.mxu0 %v2131
  %2400 = vmatpush.msra.mxu0 %v2118
  %2401 = vmatmul.f32.gmra.mxu0 %v21
  %v2402 = vpop.f32.mrf.mxu0
  %v2403 = vadd.f32 %v2383, %v2402
  %2404 = vdwg.mxu0
  %2405 = vmatpush.msra.mxu0 %v2106
  %2406 = vmatpush.msra.mxu0 %v2093
  %2407 = vmatpush.msra.mxu0 %v2080
  %2408 = vmatpush.msra.mxu0 %v2067
  %2409 = vmatpush.msra.mxu0 %v2054
  %2410 = vmatpush.msra.mxu0 %v2041
  %2411 = vmatpush.msra.mxu0 %v2028
  %2412 = vmatpush.msra.mxu0 %v2015
  %2413 = vmatpush.msra.mxu0 %v2002
  %2414 = vmatpush.msra.mxu0 %v1989
  %2415 = vmatpush.msra.mxu0 %v1976
  %2416 = vmatpush.msra.mxu0 %v1963
  %2417 = vmatpush.msra.mxu0 %v1950
  %2418 = vmatpush.msra.mxu0 %v1937
  %2419 = vmatpush.msra.mxu0 %v1924
  %2420 = vmatpush.msra.mxu0 %v1911
  %2421 = vmatmul.f32.gmra.mxu0 %v20
  %v2422 = vpop.f32.mrf.mxu0
  %v2423 = vadd.f32 0.0, %v2422
  %2424 = vdwg.mxu0
  %2425 = vmatpush.msra.mxu0 %v2314
  %2426 = vmatpush.msra.mxu0 %v2301
  %2427 = vmatpush.msra.mxu0 %v2288
  %2428 = vmatpush.msra.mxu0 %v2275
  %2429 = vmatpush.msra.mxu0 %v2262
  %2430 = vmatpush.msra.mxu0 %v2249
  %2431 = vmatpush.msra.mxu0 %v2236
  %2432 = vmatpush.msra.mxu0 %v2223
  %2433 = vmatpush.msra.mxu0 %v2210
  %2434 = vmatpush.msra.mxu0 %v2197
  %2435 = vmatpush.msra.mxu0 %v2184
  %2436 = vmatpush.msra.mxu0 %v2171
  %2437 = vmatpush.msra.mxu0 %v2158
  %2438 = vmatpush.msra.mxu0 %v2145
  %2439 = vmatpush.msra.mxu0 %v2132
  %2440 = vmatpush.msra.mxu0 %v2119
  %2441 = vmatmul.f32.gmra.mxu0 %v21
  %v2442 = vpop.f32.mrf.mxu0
  %v2443 = vadd.f32 %v2423, %v2442
  %2444 = vdwg.mxu0
  %2445 = vmatpush.msra.mxu0 %v2107
  %2446 = vmatpush.msra.mxu0 %v2094
  %2447 = vmatpush.msra.mxu0 %v2081
  %2448 = vmatpush.msra.mxu0 %v2068
  %2449 = vmatpush.msra.mxu0 %v2055
  %2450 = vmatpush.msra.mxu0 %v2042
  %2451 = vmatpush.msra.mxu0 %v2029
  %2452 = vmatpush.msra.mxu0 %v2016
  %2453 = vmatpush.msra.mxu0 %v2003
  %2454 = vmatpush.msra.mxu0 %v1990
  %2455 = vmatpush.msra.mxu0 %v1977
  %2456 = vmatpush.msra.mxu0 %v1964
  %2457 = vmatpush.msra.mxu0 %v1951
  %2458 = vmatpush.msra.mxu0 %v1938
  %2459 = vmatpush.msra.mxu0 %v1925
  %2460 = vmatpush.msra.mxu0 %v1912
  %2461 = vmatmul.f32.gmra.mxu0 %v20
  %v2462 = vpop.f32.mrf.mxu0
  %v2463 = vadd.f32 0.0, %v2462
  %2464 = vdwg.mxu0
  %2465 = vmatpush.msra.mxu0 %v2315
  %2466 = vmatpush.msra.mxu0 %v2302
  %2467 = vmatpush.msra.mxu0 %v2289
  %2468 = vmatpush.msra.mxu0 %v2276
  %2469 = vmatpush.msra.mxu0 %v2263
  %2470 = vmatpush.msra.mxu0 %v2250
  %2471 = vmatpush.msra.mxu0 %v2237
  %2472 = vmatpush.msra.mxu0 %v2224
  %2473 = vmatpush.msra.mxu0 %v2211
  %2474 = vmatpush.msra.mxu0 %v2198
  %2475 = vmatpush.msra.mxu0 %v2185
  %2476 = vmatpush.msra.mxu0 %v2172
  %2477 = vmatpush.msra.mxu0 %v2159
  %2478 = vmatpush.msra.mxu0 %v2146
  %2479 = vmatpush.msra.mxu0 %v2133
  %2480 = vmatpush.msra.mxu0 %v2120
  %2481 = vmatmul.f32.gmra.mxu0 %v21
  %v2482 = vpop.f32.mrf.mxu0
  %v2483 = vadd.f32 %v2463, %v2482
  %2484 = vdwg.mxu0
  %2485 = vmatpush.msra.mxu0 %v2108
  %2486 = vmatpush.msra.mxu0 %v2095
  %2487 = vmatpush.msra.mxu0 %v2082
  %2488 = vmatpush.msra.mxu0 %v2069
  %2489 = vmatpush.msra.mxu0 %v2056
  %2490 = vmatpush.msra.mxu0 %v2043
  %2491 = vmatpush.msra.mxu0 %v2030
  %2492 = vmatpush.msra.mxu0 %v2017
  %2493 = vmatpush.msra.mxu0 %v2004
  %2494 = vmatpush.msra.mxu0 %v1991
  %2495 = vmatpush.msra.mxu0 %v1978
  %2496 = vmatpush.msra.mxu0 %v1965
  %2497 = vmatpush.msra.mxu0 %v1952
  %2498 = vmatpush.msra.mxu0 %v1939
  %2499 = vmatpush.msra.mxu0 %v1926
  %2500 = vmatpush.msra.mxu0 %v1913
  %2501 = vmatmul.f32.gmra.mxu0 %v20
  %v2502 = vpop.f32.mrf.mxu0
  %v2503 = vadd.f32 0.0, %v2502
  %2504 = vdwg.mxu0
  %2505 = vmatpush.msra.mxu0 %v2316
  %2506 = vmatpush.msra.mxu0 %v2303
  %2507 = vmatpush.msra.mxu0 %v2290
  %2508 = vmatpush.msra.mxu0 %v2277
  %2509 = vmatpush.msra.mxu0 %v2264
  %2510 = vmatpush.msra.mxu0 %v2251
  %2511 = vmatpush.msra.mxu0 %v2238
  %2512 = vmatpush.msra.mxu0 %v2225
  %2513 = vmatpush.msra.mxu0 %v2212
  %2514 = vmatpush.msra.mxu0 %v2199
  %2515 = vmatpush.msra.mxu0 %v2186
  %2516 = vmatpush.msra.mxu0 %v2173
  %2517 = vmatpush.msra.mxu0 %v2160
  %2518 = vmatpush.msra.mxu0 %v2147
  %2519 = vmatpush.msra.mxu0 %v2134
  %2520 = vmatpush.msra.mxu0 %v2121
  %2521 = vmatmul.f32.gmra.mxu0 %v21
  %v2522 = vpop.f32.mrf.mxu0
  %v2523 = vadd.f32 %v2503, %v2522
  %2524 = vdwg.mxu0
  %2525 = vmatpush.msra.mxu0 %v2109
  %2526 = vmatpush.msra.mxu0 %v2096
  %2527 = vmatpush.msra.mxu0 %v2083
  %2528 = vmatpush.msra.mxu0 %v2070
  %2529 = vmatpush.msra.mxu0 %v2057
  %2530 = vmatpush.msra.mxu0 %v2044
  %2531 = vmatpush.msra.mxu0 %v2031
  %2532 = vmatpush.msra.mxu0 %v2018
  %2533 = vmatpush.msra.mxu0 %v2005
  %2534 = vmatpush.msra.mxu0 %v1992
  %2535 = vmatpush.msra.mxu0 %v1979
  %2536 = vmatpush.msra.mxu0 %v1966
  %2537 = vmatpush.msra.mxu0 %v1953
  %2538 = vmatpush.msra.mxu0 %v1940
  %2539 = vmatpush.msra.mxu0 %v1927
  %2540 = vmatpush.msra.mxu0 %v1914
  %2541 = vmatmul.f32.gmra.mxu0 %v20
  %v2542 = vpop.f32.mrf.mxu0
  %v2543 = vadd.f32 0.0, %v2542
  %2544 = vdwg.mxu0
  %2545 = vmatpush.msra.mxu0 %v2317
  %2546 = vmatpush.msra.mxu0 %v2304
  %2547 = vmatpush.msra.mxu0 %v2291
  %2548 = vmatpush.msra.mxu0 %v2278
  %2549 = vmatpush.msra.mxu0 %v2265
  %2550 = vmatpush.msra.mxu0 %v2252
  %2551 = vmatpush.msra.mxu0 %v2239
  %2552 = vmatpush.msra.mxu0 %v2226
  %2553 = vmatpush.msra.mxu0 %v2213
  %2554 = vmatpush.msra.mxu0 %v2200
  %2555 = vmatpush.msra.mxu0 %v2187
  %2556 = vmatpush.msra.mxu0 %v2174
  %2557 = vmatpush.msra.mxu0 %v2161
  %2558 = vmatpush.msra.mxu0 %v2148
  %2559 = vmatpush.msra.mxu0 %v2135
  %2560 = vmatpush.msra.mxu0 %v2122
  %2561 = vmatmul.f32.gmra.mxu0 %v21
  %v2562 = vpop.f32.mrf.mxu0
  %v2563 = vadd.f32 %v2543, %v2562
  %2564 = vdwg.mxu0
  %2565 = vmatpush.msra.mxu0 %v2110
  %2566 = vmatpush.msra.mxu0 %v2097
  %2567 = vmatpush.msra.mxu0 %v2084
  %2568 = vmatpush.msra.mxu0 %v2071
  %2569 = vmatpush.msra.mxu0 %v2058
  %2570 = vmatpush.msra.mxu0 %v2045
  %2571 = vmatpush.msra.mxu0 %v2032
  %2572 = vmatpush.msra.mxu0 %v2019
  %2573 = vmatpush.msra.mxu0 %v2006
  %2574 = vmatpush.msra.mxu0 %v1993
  %2575 = vmatpush.msra.mxu0 %v1980
  %2576 = vmatpush.msra.mxu0 %v1967
  %2577 = vmatpush.msra.mxu0 %v1954
  %2578 = vmatpush.msra.mxu0 %v1941
  %2579 = vmatpush.msra.mxu0 %v1928
  %2580 = vmatpush.msra.mxu0 %v1915
  %2581 = vmatmul.f32.gmra.mxu0 %v20
  %v2582 = vpop.f32.mrf.mxu0
  %v2583 = vadd.f32 0.0, %v2582
  %2584 = vdwg.mxu0
  %2585 = vmatpush.msra.mxu0 %v2318
  %2586 = vmatpush.msra.mxu0 %v2305
  %2587 = vmatpush.msra.mxu0 %v2292
  %2588 = vmatpush.msra.mxu0 %v2279
  %2589 = vmatpush.msra.mxu0 %v2266
  %2590 = vmatpush.msra.mxu0 %v2253
  %2591 = vmatpush.msra.mxu0 %v2240
  %2592 = vmatpush.msra.mxu0 %v2227
  %2593 = vmatpush.msra.mxu0 %v2214
  %2594 = vmatpush.msra.mxu0 %v2201
  %2595 = vmatpush.msra.mxu0 %v2188
  %2596 = vmatpush.msra.mxu0 %v2175
  %2597 = vmatpush.msra.mxu0 %v2162
  %2598 = vmatpush.msra.mxu0 %v2149
  %2599 = vmatpush.msra.mxu0 %v2136
  %2600 = vmatpush.msra.mxu0 %v2123
  %2601 = vmatmul.f32.gmra.mxu0 %v21
  %v2602 = vpop.f32.mrf.mxu0
  %v2603 = vadd.f32 %v2583, %v2602
  %2604 = vdwg.mxu0
  %2605 = vmatpush.msra.mxu0 %v2111
  %2606 = vmatpush.msra.mxu0 %v2098
  %2607 = vmatpush.msra.mxu0 %v2085
  %2608 = vmatpush.msra.mxu0 %v2072
  %2609 = vmatpush.msra.mxu0 %v2059
  %2610 = vmatpush.msra.mxu0 %v2046
  %2611 = vmatpush.msra.mxu0 %v2033
  %2612 = vmatpush.msra.mxu0 %v2020
  %2613 = vmatpush.msra.mxu0 %v2007
  %2614 = vmatpush.msra.mxu0 %v1994
  %2615 = vmatpush.msra.mxu0 %v1981
  %2616 = vmatpush.msra.mxu0 %v1968
  %2617 = vmatpush.msra.mxu0 %v1955
  %2618 = vmatpush.msra.mxu0 %v1942
  %2619 = vmatpush.msra.mxu0 %v1929
  %2620 = vmatpush.msra.mxu0 %v1916
  %2621 = vmatmul.f32.gmra.mxu0 %v20
  %v2622 = vpop.f32.mrf.mxu0
  %v2623 = vadd.f32 0.0, %v2622
  %2624 = vdwg.mxu0
  %2625 = vmatpush.msra.mxu0 %v2319
  %2626 = vmatpush.msra.mxu0 %v2306
  %2627 = vmatpush.msra.mxu0 %v2293
  %2628 = vmatpush.msra.mxu0 %v2280
  %2629 = vmatpush.msra.mxu0 %v2267
  %2630 = vmatpush.msra.mxu0 %v2254
  %2631 = vmatpush.msra.mxu0 %v2241
  %2632 = vmatpush.msra.mxu0 %v2228
  %2633 = vmatpush.msra.mxu0 %v2215
  %2634 = vmatpush.msra.mxu0 %v2202
  %2635 = vmatpush.msra.mxu0 %v2189
  %2636 = vmatpush.msra.mxu0 %v2176
  %2637 = vmatpush.msra.mxu0 %v2163
  %2638 = vmatpush.msra.mxu0 %v2150
  %2639 = vmatpush.msra.mxu0 %v2137
  %2640 = vmatpush.msra.mxu0 %v2124
  %2641 = vmatmul.f32.gmra.mxu0 %v21
  %v2642 = vpop.f32.mrf.mxu0
  %v2643 = vadd.f32 %v2623, %v2642
  %2644 = vdwg.mxu0
  %2645 = vmatpush.msra.mxu0 %v2112
  %2646 = vmatpush.msra.mxu0 %v2099
  %2647 = vmatpush.msra.mxu0 %v2086
  %2648 = vmatpush.msra.mxu0 %v2073
  %2649 = vmatpush.msra.mxu0 %v2060
  %2650 = vmatpush.msra.mxu0 %v2047
  %2651 = vmatpush.msra.mxu0 %v2034
  %2652 = vmatpush.msra.mxu0 %v2021
  %2653 = vmatpush.msra.mxu0 %v2008
  %2654 = vmatpush.msra.mxu0 %v1995
  %2655 = vmatpush.msra.mxu0 %v1982
  %2656 = vmatpush.msra.mxu0 %v1969
  %2657 = vmatpush.msra.mxu0 %v1956
  %2658 = vmatpush.msra.mxu0 %v1943
  %2659 = vmatpush.msra.mxu0 %v1930
  %2660 = vmatpush.msra.mxu0 %v1917
  %2661 = vmatmul.f32.gmra.mxu0 %v20
  %v2662 = vpop.f32.mrf.mxu0
  %v2663 = vadd.f32 0.0, %v2662
  %2664 = vdwg.mxu0
  %2665 = vmatpush.msra.mxu0 %v2320
  %2666 = vmatpush.msra.mxu0 %v2307
  %2667 = vmatpush.msra.mxu0 %v2294
  %2668 = vmatpush.msra.mxu0 %v2281
  %2669 = vmatpush.msra.mxu0 %v2268
  %2670 = vmatpush.msra.mxu0 %v2255
  %2671 = vmatpush.msra.mxu0 %v2242
  %2672 = vmatpush.msra.mxu0 %v2229
  %2673 = vmatpush.msra.mxu0 %v2216
  %2674 = vmatpush.msra.mxu0 %v2203
  %2675 = vmatpush.msra.mxu0 %v2190
  %2676 = vmatpush.msra.mxu0 %v2177
  %2677 = vmatpush.msra.mxu0 %v2164
  %2678 = vmatpush.msra.mxu0 %v2151
  %2679 = vmatpush.msra.mxu0 %v2138
  %2680 = vmatpush.msra.mxu0 %v2125
  %2681 = vmatmul.f32.gmra.mxu0 %v21
  %v2682 = vpop.f32.mrf.mxu0
  %v2683 = vadd.f32 %v2663, %v2682
  %2684 = vdwg.mxu0
  %2685 = vmatpush.msra.mxu0 %v2113
  %2686 = vmatpush.msra.mxu0 %v2100
  %2687 = vmatpush.msra.mxu0 %v2087
  %2688 = vmatpush.msra.mxu0 %v2074
  %2689 = vmatpush.msra.mxu0 %v2061
  %2690 = vmatpush.msra.mxu0 %v2048
  %2691 = vmatpush.msra.mxu0 %v2035
  %2692 = vmatpush.msra.mxu0 %v2022
  %2693 = vmatpush.msra.mxu0 %v2009
  %2694 = vmatpush.msra.mxu0 %v1996
  %2695 = vmatpush.msra.mxu0 %v1983
  %2696 = vmatpush.msra.mxu0 %v1970
  %2697 = vmatpush.msra.mxu0 %v1957
  %2698 = vmatpush.msra.mxu0 %v1944
  %2699 = vmatpush.msra.mxu0 %v1931
  %2700 = vmatpush.msra.mxu0 %v1918
  %2701 = vmatmul.f32.gmra.mxu0 %v20
  %v2702 = vpop.f32.mrf.mxu0
  %v2703 = vadd.f32 0.0, %v2702
  %2704 = vdwg.mxu0
  %2705 = vmatpush.msra.mxu0 %v2321
  %2706 = vmatpush.msra.mxu0 %v2308
  %2707 = vmatpush.msra.mxu0 %v2295
  %2708 = vmatpush.msra.mxu0 %v2282
  %2709 = vmatpush.msra.mxu0 %v2269
  %2710 = vmatpush.msra.mxu0 %v2256
  %2711 = vmatpush.msra.mxu0 %v2243
  %2712 = vmatpush.msra.mxu0 %v2230
  %2713 = vmatpush.msra.mxu0 %v2217
  %2714 = vmatpush.msra.mxu0 %v2204
  %2715 = vmatpush.msra.mxu0 %v2191
  %2716 = vmatpush.msra.mxu0 %v2178
  %2717 = vmatpush.msra.mxu0 %v2165
  %2718 = vmatpush.msra.mxu0 %v2152
  %2719 = vmatpush.msra.mxu0 %v2139
  %2720 = vmatpush.msra.mxu0 %v2126
  %2721 = vmatmul.f32.gmra.mxu0 %v21
  %v2722 = vpop.f32.mrf.mxu0
  %v2723 = vadd.f32 %v2703, %v2722
  %2724 = vdwg.mxu0
  %2725 = vmatpush.msra.mxu0 %v2114
  %2726 = vmatpush.msra.mxu0 %v2101
  %2727 = vmatpush.msra.mxu0 %v2088
  %2728 = vmatpush.msra.mxu0 %v2075
  %2729 = vmatpush.msra.mxu0 %v2062
  %2730 = vmatpush.msra.mxu0 %v2049
  %2731 = vmatpush.msra.mxu0 %v2036
  %2732 = vmatpush.msra.mxu0 %v2023
  %2733 = vmatpush.msra.mxu0 %v2010
  %2734 = vmatpush.msra.mxu0 %v1997
  %2735 = vmatpush.msra.mxu0 %v1984
  %2736 = vmatpush.msra.mxu0 %v1971
  %2737 = vmatpush.msra.mxu0 %v1958
  %2738 = vmatpush.msra.mxu0 %v1945
  %2739 = vmatpush.msra.mxu0 %v1932
  %2740 = vmatpush.msra.mxu0 %v1919
  %2741 = vmatmul.f32.gmra.mxu0 %v20
  %v2742 = vpop.f32.mrf.mxu0
  %v2743 = vadd.f32 0.0, %v2742
  %2744 = vdwg.mxu0
  %2745 = vmatpush.msra.mxu0 %v2322
  %2746 = vmatpush.msra.mxu0 %v2309
  %2747 = vmatpush.msra.mxu0 %v2296
  %2748 = vmatpush.msra.mxu0 %v2283
  %2749 = vmatpush.msra.mxu0 %v2270
  %2750 = vmatpush.msra.mxu0 %v2257
  %2751 = vmatpush.msra.mxu0 %v2244
  %2752 = vmatpush.msra.mxu0 %v2231
  %2753 = vmatpush.msra.mxu0 %v2218
  %2754 = vmatpush.msra.mxu0 %v2205
  %2755 = vmatpush.msra.mxu0 %v2192
  %2756 = vmatpush.msra.mxu0 %v2179
  %2757 = vmatpush.msra.mxu0 %v2166
  %2758 = vmatpush.msra.mxu0 %v2153
  %2759 = vmatpush.msra.mxu0 %v2140
  %2760 = vmatpush.msra.mxu0 %v2127
  %2761 = vmatmul.f32.gmra.mxu0 %v21
  %v2762 = vpop.f32.mrf.mxu0
  %v2763 = vadd.f32 %v2743, %v2762
  %2764 = vdwg.mxu0
  %2765 = vmatpush.msra.mxu0 %v2115
  %2766 = vmatpush.msra.mxu0 %v2102
  %2767 = vmatpush.msra.mxu0 %v2089
  %2768 = vmatpush.msra.mxu0 %v2076
  %2769 = vmatpush.msra.mxu0 %v2063
  %2770 = vmatpush.msra.mxu0 %v2050
  %2771 = vmatpush.msra.mxu0 %v2037
  %2772 = vmatpush.msra.mxu0 %v2024
  %2773 = vmatpush.msra.mxu0 %v2011
  %2774 = vmatpush.msra.mxu0 %v1998
  %2775 = vmatpush.msra.mxu0 %v1985
  %2776 = vmatpush.msra.mxu0 %v1972
  %2777 = vmatpush.msra.mxu0 %v1959
  %2778 = vmatpush.msra.mxu0 %v1946
  %2779 = vmatpush.msra.mxu0 %v1933
  %2780 = vmatpush.msra.mxu0 %v1920
  %2781 = vmatmul.f32.gmra.mxu0 %v20
  %v2782 = vpop.f32.mrf.mxu0
  %v2783 = vadd.f32 0.0, %v2782
  %2784 = vdwg.mxu0
  %2785 = vmatpush.msra.mxu0 %v2323
  %2786 = vmatpush.msra.mxu0 %v2310
  %2787 = vmatpush.msra.mxu0 %v2297
  %2788 = vmatpush.msra.mxu0 %v2284
  %2789 = vmatpush.msra.mxu0 %v2271
  %2790 = vmatpush.msra.mxu0 %v2258
  %2791 = vmatpush.msra.mxu0 %v2245
  %2792 = vmatpush.msra.mxu0 %v2232
  %2793 = vmatpush.msra.mxu0 %v2219
  %2794 = vmatpush.msra.mxu0 %v2206
  %2795 = vmatpush.msra.mxu0 %v2193
  %2796 = vmatpush.msra.mxu0 %v2180
  %2797 = vmatpush.msra.mxu0 %v2167
  %2798 = vmatpush.msra.mxu0 %v2154
  %2799 = vmatpush.msra.mxu0 %v2141
  %2800 = vmatpush.msra.mxu0 %v2128
  %2801 = vmatmul.f32.gmra.mxu0 %v21
  %v2802 = vpop.f32.mrf.mxu0
  %v2803 = vadd.f32 %v2783, %v2802
  %2804 = vdwg.mxu0
  %2805 = vmatpush.msra.mxu0 %v2116
  %2806 = vmatpush.msra.mxu0 %v2103
  %2807 = vmatpush.msra.mxu0 %v2090
  %2808 = vmatpush.msra.mxu0 %v2077
  %2809 = vmatpush.msra.mxu0 %v2064
  %2810 = vmatpush.msra.mxu0 %v2051
  %2811 = vmatpush.msra.mxu0 %v2038
  %2812 = vmatpush.msra.mxu0 %v2025
  %2813 = vmatpush.msra.mxu0 %v2012
  %2814 = vmatpush.msra.mxu0 %v1999
  %2815 = vmatpush.msra.mxu0 %v1986
  %2816 = vmatpush.msra.mxu0 %v1973
  %2817 = vmatpush.msra.mxu0 %v1960
  %2818 = vmatpush.msra.mxu0 %v1947
  %2819 = vmatpush.msra.mxu0 %v1934
  %2820 = vmatpush.msra.mxu0 %v1921
  %2821 = vmatmul.f32.gmra.mxu0 %v20
  %v2822 = vpop.f32.mrf.mxu0
  %v2823 = vadd.f32 0.0, %v2822
  %2824 = vdwg.mxu0
  %2825 = vmatpush.msra.mxu0 %v2324
  %2826 = vmatpush.msra.mxu0 %v2311
  %2827 = vmatpush.msra.mxu0 %v2298
  %2828 = vmatpush.msra.mxu0 %v2285
  %2829 = vmatpush.msra.mxu0 %v2272
  %2830 = vmatpush.msra.mxu0 %v2259
  %2831 = vmatpush.msra.mxu0 %v2246
  %2832 = vmatpush.msra.mxu0 %v2233
  %2833 = vmatpush.msra.mxu0 %v2220
  %2834 = vmatpush.msra.mxu0 %v2207
  %2835 = vmatpush.msra.mxu0 %v2194
  %2836 = vmatpush.msra.mxu0 %v2181
  %2837 = vmatpush.msra.mxu0 %v2168
  %2838 = vmatpush.msra.mxu0 %v2155
  %2839 = vmatpush.msra.mxu0 %v2142
  %2840 = vmatpush.msra.mxu0 %v2129
  %2841 = vmatmul.f32.gmra.mxu0 %v21
  %v2842 = vpop.f32.mrf.mxu0
  %v2843 = vadd.f32 %v2823, %v2842
  %2844 = vdwg.mxu0
  %v2845 = vmax.f32 %v1895, %v2363
  %v2846 = vmax.f32 %v1896, %v2403
  %v2847 = vmax.f32 %v1897, %v2443
  %v2848 = vmax.f32 %v1898, %v2483
  %v2849 = vmax.f32 %v1899, %v2523
  %v2850 = vmax.f32 %v1900, %v2563
  %v2851 = vmax.f32 %v1901, %v2603
  %v2852 = vmax.f32 %v1902, %v2643
  %v2853 = vmax.f32 %v1903, %v2683
  %v2854 = vmax.f32 %v1904, %v2723
  %v2855 = vmax.f32 %v1905, %v2763
  %v2856 = vmax.f32 %v1906, %v2803
  %v2857 = vmax.f32 %v1907, %v2843
  %s2858 = scalar_lea.vmem %s1, 9984
  %v2859 = vld [vmem:[%s2858] sm:$0xff]
  %v2860 = vld [vmem:[%s2858 + $0x8] sm:$0xff]
  %v2861 = vld [vmem:[%s2858 + $0x10] sm:$0xff]
  %v2862 = vld [vmem:[%s2858 + $0x18] sm:$0xff]
  %v2863 = vld [vmem:[%s2858 + $0x20] sm:$0xff]
  %v2864 = vld [vmem:[%s2858 + $0x28] sm:$0xff]
  %v2865 = vld [vmem:[%s2858 + $0x30] sm:$0xff]
  %v2866 = vld [vmem:[%s2858 + $0x38] sm:$0xff]
  %v2867 = vld [vmem:[%s2858 + $0x40] sm:$0xff]
  %v2868 = vld [vmem:[%s2858 + $0x48] sm:$0xff]
  %v2869 = vld [vmem:[%s2858 + $0x50] sm:$0xff]
  %v2870 = vld [vmem:[%s2858 + $0x58] sm:$0xff]
  %v2871 = vld [vmem:[%s2858 + $0x60] sm:$0xff]
  %v2872 = vld [vmem:[%s2858 + $0x68] sm:$0xff]
  %v2873 = vld [vmem:[%s2858 + $0x70] sm:$0xff]
  %v2874 = vld [vmem:[%s2858 + $0x78] sm:$0xff]
  %v2875 = vld [vmem:[%s2858 + $0x80] sm:$0xff]
  %v2876 = vld [vmem:[%s2858 + $0x88] sm:$0xff]
  %v2877 = vld [vmem:[%s2858 + $0x90] sm:$0xff]
  %v2878 = vld [vmem:[%s2858 + $0x98] sm:$0xff]
  %v2879 = vld [vmem:[%s2858 + $0xa0] sm:$0xff]
  %v2880 = vld [vmem:[%s2858 + $0xa8] sm:$0xff]
  %v2881 = vld [vmem:[%s2858 + $0xb0] sm:$0xff]
  %v2882 = vld [vmem:[%s2858 + $0xb8] sm:$0xff]
  %v2883 = vld [vmem:[%s2858 + $0xc0] sm:$0xff]
  %v2884 = vld [vmem:[%s2858 + $0xc8] sm:$0xff]
  %v2885 = vld [vmem:[%s2858 + $0xd0] sm:$0xff]
  %v2886 = vld [vmem:[%s2858 + $0xd8] sm:$0xff]
  %v2887 = vld [vmem:[%s2858 + $0xe0] sm:$0xff]
  %v2888 = vld [vmem:[%s2858 + $0xe8] sm:$0xff]
  %v2889 = vld [vmem:[%s2858 + $0xf0] sm:$0xff]
  %v2890 = vld [vmem:[%s2858 + $0xf8] sm:$0xff]
  %v2891 = vld [vmem:[%s2858 + $0x100] sm:$0xff]
  %v2892 = vld [vmem:[%s2858 + $0x108] sm:$0xff]
  %v2893 = vld [vmem:[%s2858 + $0x110] sm:$0xff]
  %v2894 = vld [vmem:[%s2858 + $0x118] sm:$0xff]
  %v2895 = vld [vmem:[%s2858 + $0x120] sm:$0xff]
  %v2896 = vld [vmem:[%s2858 + $0x128] sm:$0xff]
  %v2897 = vld [vmem:[%s2858 + $0x130] sm:$0xff]
  %v2898 = vld [vmem:[%s2858 + $0x138] sm:$0xff]
  %v2899 = vld [vmem:[%s2858 + $0x140] sm:$0xff]
  %v2900 = vld [vmem:[%s2858 + $0x148] sm:$0xff]
  %v2901 = vld [vmem:[%s2858 + $0x150] sm:$0xff]
  %v2902 = vld [vmem:[%s2858 + $0x158] sm:$0xff]
  %v2903 = vld [vmem:[%s2858 + $0x160] sm:$0xff]
  %v2904 = vld [vmem:[%s2858 + $0x168] sm:$0xff]
  %v2905 = vld [vmem:[%s2858 + $0x170] sm:$0xff]
  %v2906 = vld [vmem:[%s2858 + $0x178] sm:$0xff]
  %v2907 = vld [vmem:[%s2858 + $0x180] sm:$0xff]
  %v2908 = vld [vmem:[%s2858 + $0x188] sm:$0xff]
  %v2909 = vld [vmem:[%s2858 + $0x190] sm:$0xff]
  %v2910 = vld [vmem:[%s2858 + $0x198] sm:$0xff]
  %v2911 = vld [vmem:[%s2858 + $0x1a0] sm:$0xff]
  %v2912 = vld [vmem:[%s2858 + $0x1a8] sm:$0xff]
  %v2913 = vld [vmem:[%s2858 + $0x1b0] sm:$0xff]
  %v2914 = vld [vmem:[%s2858 + $0x1b8] sm:$0xff]
  %v2915 = vld [vmem:[%s2858 + $0x1c0] sm:$0xff]
  %v2916 = vld [vmem:[%s2858 + $0x1c8] sm:$0xff]
  %v2917 = vld [vmem:[%s2858 + $0x1d0] sm:$0xff]
  %v2918 = vld [vmem:[%s2858 + $0x1d8] sm:$0xff]
  %v2919 = vld [vmem:[%s2858 + $0x1e0] sm:$0xff]
  %v2920 = vld [vmem:[%s2858 + $0x1e8] sm:$0xff]
  %v2921 = vld [vmem:[%s2858 + $0x1f0] sm:$0xff]
  %v2922 = vld [vmem:[%s2858 + $0x1f8] sm:$0xff]
  %v2923 = vld [vmem:[%s2858 + $0x200] sm:$0xff]
  %v2924 = vld [vmem:[%s2858 + $0x208] sm:$0xff]
  %v2925 = vld [vmem:[%s2858 + $0x210] sm:$0xff]
  %v2926 = vld [vmem:[%s2858 + $0x218] sm:$0xff]
  %v2927 = vld [vmem:[%s2858 + $0x220] sm:$0xff]
  %v2928 = vld [vmem:[%s2858 + $0x228] sm:$0xff]
  %v2929 = vld [vmem:[%s2858 + $0x230] sm:$0xff]
  %v2930 = vld [vmem:[%s2858 + $0x238] sm:$0xff]
  %v2931 = vld [vmem:[%s2858 + $0x240] sm:$0xff]
  %v2932 = vld [vmem:[%s2858 + $0x248] sm:$0xff]
  %v2933 = vld [vmem:[%s2858 + $0x250] sm:$0xff]
  %v2934 = vld [vmem:[%s2858 + $0x258] sm:$0xff]
  %v2935 = vld [vmem:[%s2858 + $0x260] sm:$0xff]
  %v2936 = vld [vmem:[%s2858 + $0x268] sm:$0xff]
  %v2937 = vld [vmem:[%s2858 + $0x270] sm:$0xff]
  %v2938 = vld [vmem:[%s2858 + $0x278] sm:$0xff]
  %v2939 = vld [vmem:[%s2858 + $0x280] sm:$0xff]
  %v2940 = vld [vmem:[%s2858 + $0x288] sm:$0xff]
  %v2941 = vld [vmem:[%s2858 + $0x290] sm:$0xff]
  %v2942 = vld [vmem:[%s2858 + $0x298] sm:$0xff]
  %v2943 = vld [vmem:[%s2858 + $0x2a0] sm:$0xff]
  %v2944 = vld [vmem:[%s2858 + $0x2a8] sm:$0xff]
  %v2945 = vld [vmem:[%s2858 + $0x2b0] sm:$0xff]
  %v2946 = vld [vmem:[%s2858 + $0x2b8] sm:$0xff]
  %v2947 = vld [vmem:[%s2858 + $0x2c0] sm:$0xff]
  %v2948 = vld [vmem:[%s2858 + $0x2c8] sm:$0xff]
  %v2949 = vld [vmem:[%s2858 + $0x2d0] sm:$0xff]
  %v2950 = vld [vmem:[%s2858 + $0x2d8] sm:$0xff]
  %v2951 = vld [vmem:[%s2858 + $0x2e0] sm:$0xff]
  %v2952 = vld [vmem:[%s2858 + $0x2e8] sm:$0xff]
  %v2953 = vld [vmem:[%s2858 + $0x2f0] sm:$0xff]
  %v2954 = vld [vmem:[%s2858 + $0x2f8] sm:$0xff]
  %v2955 = vld [vmem:[%s2858 + $0x300] sm:$0xff]
  %v2956 = vld [vmem:[%s2858 + $0x308] sm:$0xff]
  %v2957 = vld [vmem:[%s2858 + $0x310] sm:$0xff]
  %v2958 = vld [vmem:[%s2858 + $0x318] sm:$0xff]
  %v2959 = vld [vmem:[%s2858 + $0x320] sm:$0xff]
  %v2960 = vld [vmem:[%s2858 + $0x328] sm:$0xff]
  %v2961 = vld [vmem:[%s2858 + $0x330] sm:$0xff]
  %v2962 = vld [vmem:[%s2858 + $0x338] sm:$0xff]
  %v2963 = vld [vmem:[%s2858 + $0x340] sm:$0xff]
  %v2964 = vld [vmem:[%s2858 + $0x348] sm:$0xff]
  %v2965 = vld [vmem:[%s2858 + $0x350] sm:$0xff]
  %v2966 = vld [vmem:[%s2858 + $0x358] sm:$0xff]
  %v2967 = vld [vmem:[%s2858 + $0x360] sm:$0xff]
  %v2968 = vld [vmem:[%s2858 + $0x368] sm:$0xff]
  %v2969 = vld [vmem:[%s2858 + $0x370] sm:$0xff]
  %v2970 = vld [vmem:[%s2858 + $0x378] sm:$0xff]
  %v2971 = vld [vmem:[%s2858 + $0x380] sm:$0xff]
  %v2972 = vld [vmem:[%s2858 + $0x388] sm:$0xff]
  %v2973 = vld [vmem:[%s2858 + $0x390] sm:$0xff]
  %v2974 = vld [vmem:[%s2858 + $0x398] sm:$0xff]
  %v2975 = vld [vmem:[%s2858 + $0x3a0] sm:$0xff]
  %v2976 = vld [vmem:[%s2858 + $0x3a8] sm:$0xff]
  %v2977 = vld [vmem:[%s2858 + $0x3b0] sm:$0xff]
  %v2978 = vld [vmem:[%s2858 + $0x3b8] sm:$0xff]
  %v2979 = vld [vmem:[%s2858 + $0x3c0] sm:$0xff]
  %v2980 = vld [vmem:[%s2858 + $0x3c8] sm:$0xff]
  %v2981 = vld [vmem:[%s2858 + $0x3d0] sm:$0xff]
  %v2982 = vld [vmem:[%s2858 + $0x3d8] sm:$0xff]
  %v2983 = vld [vmem:[%s2858 + $0x3e0] sm:$0xff]
  %v2984 = vld [vmem:[%s2858 + $0x3e8] sm:$0xff]
  %v2985 = vld [vmem:[%s2858 + $0x3f0] sm:$0xff]
  %v2986 = vld [vmem:[%s2858 + $0x3f8] sm:$0xff]
  %v2987 = vld [vmem:[%s2858 + $0x400] sm:$0xff]
  %v2988 = vld [vmem:[%s2858 + $0x408] sm:$0xff]
  %v2989 = vld [vmem:[%s2858 + $0x410] sm:$0xff]
  %v2990 = vld [vmem:[%s2858 + $0x418] sm:$0xff]
  %v2991 = vld [vmem:[%s2858 + $0x420] sm:$0xff]
  %v2992 = vld [vmem:[%s2858 + $0x428] sm:$0xff]
  %v2993 = vld [vmem:[%s2858 + $0x430] sm:$0xff]
  %v2994 = vld [vmem:[%s2858 + $0x438] sm:$0xff]
  %v2995 = vld [vmem:[%s2858 + $0x440] sm:$0xff]
  %v2996 = vld [vmem:[%s2858 + $0x448] sm:$0xff]
  %v2997 = vld [vmem:[%s2858 + $0x450] sm:$0xff]
  %v2998 = vld [vmem:[%s2858 + $0x458] sm:$0xff]
  %v2999 = vld [vmem:[%s2858 + $0x460] sm:$0xff]
  %v3000 = vld [vmem:[%s2858 + $0x468] sm:$0xff]
  %v3001 = vld [vmem:[%s2858 + $0x470] sm:$0xff]
  %v3002 = vld [vmem:[%s2858 + $0x478] sm:$0xff]
  %v3003 = vld [vmem:[%s2858 + $0x480] sm:$0xff]
  %v3004 = vld [vmem:[%s2858 + $0x488] sm:$0xff]
  %v3005 = vld [vmem:[%s2858 + $0x490] sm:$0xff]
  %v3006 = vld [vmem:[%s2858 + $0x498] sm:$0xff]
  %v3007 = vld [vmem:[%s2858 + $0x4a0] sm:$0xff]
  %v3008 = vld [vmem:[%s2858 + $0x4a8] sm:$0xff]
  %v3009 = vld [vmem:[%s2858 + $0x4b0] sm:$0xff]
  %v3010 = vld [vmem:[%s2858 + $0x4b8] sm:$0xff]
  %v3011 = vld [vmem:[%s2858 + $0x4c0] sm:$0xff]
  %v3012 = vld [vmem:[%s2858 + $0x4c8] sm:$0xff]
  %v3013 = vld [vmem:[%s2858 + $0x4d0] sm:$0xff]
  %v3014 = vld [vmem:[%s2858 + $0x4d8] sm:$0xff]
  %v3015 = vld [vmem:[%s2858 + $0x4e0] sm:$0xff]
  %v3016 = vld [vmem:[%s2858 + $0x4e8] sm:$0xff]
  %v3017 = vld [vmem:[%s2858 + $0x4f0] sm:$0xff]
  %v3018 = vld [vmem:[%s2858 + $0x4f8] sm:$0xff]
  %v3019 = vld [vmem:[%s2858 + $0x500] sm:$0xff]
  %v3020 = vld [vmem:[%s2858 + $0x508] sm:$0xff]
  %v3021 = vld [vmem:[%s2858 + $0x510] sm:$0xff]
  %v3022 = vld [vmem:[%s2858 + $0x518] sm:$0xff]
  %v3023 = vld [vmem:[%s2858 + $0x520] sm:$0xff]
  %v3024 = vld [vmem:[%s2858 + $0x528] sm:$0xff]
  %v3025 = vld [vmem:[%s2858 + $0x530] sm:$0xff]
  %v3026 = vld [vmem:[%s2858 + $0x538] sm:$0xff]
  %v3027 = vld [vmem:[%s2858 + $0x540] sm:$0xff]
  %v3028 = vld [vmem:[%s2858 + $0x548] sm:$0xff]
  %v3029 = vld [vmem:[%s2858 + $0x550] sm:$0xff]
  %v3030 = vld [vmem:[%s2858 + $0x558] sm:$0xff]
  %v3031 = vld [vmem:[%s2858 + $0x560] sm:$0xff]
  %v3032 = vld [vmem:[%s2858 + $0x568] sm:$0xff]
  %v3033 = vld [vmem:[%s2858 + $0x570] sm:$0xff]
  %v3034 = vld [vmem:[%s2858 + $0x578] sm:$0xff]
  %v3035 = vld [vmem:[%s2858 + $0x580] sm:$0xff]
  %v3036 = vld [vmem:[%s2858 + $0x588] sm:$0xff]
  %v3037 = vld [vmem:[%s2858 + $0x590] sm:$0xff]
  %v3038 = vld [vmem:[%s2858 + $0x598] sm:$0xff]
  %v3039 = vld [vmem:[%s2858 + $0x5a0] sm:$0xff]
  %v3040 = vld [vmem:[%s2858 + $0x5a8] sm:$0xff]
  %v3041 = vld [vmem:[%s2858 + $0x5b0] sm:$0xff]
  %v3042 = vld [vmem:[%s2858 + $0x5b8] sm:$0xff]
  %v3043 = vld [vmem:[%s2858 + $0x5c0] sm:$0xff]
  %v3044 = vld [vmem:[%s2858 + $0x5c8] sm:$0xff]
  %v3045 = vld [vmem:[%s2858 + $0x5d0] sm:$0xff]
  %v3046 = vld [vmem:[%s2858 + $0x5d8] sm:$0xff]
  %v3047 = vld [vmem:[%s2858 + $0x5e0] sm:$0xff]
  %v3048 = vld [vmem:[%s2858 + $0x5e8] sm:$0xff]
  %v3049 = vld [vmem:[%s2858 + $0x5f0] sm:$0xff]
  %v3050 = vld [vmem:[%s2858 + $0x5f8] sm:$0xff]
  %v3051 = vld [vmem:[%s2858 + $0x600] sm:$0xff]
  %v3052 = vld [vmem:[%s2858 + $0x608] sm:$0xff]
  %v3053 = vld [vmem:[%s2858 + $0x610] sm:$0xff]
  %v3054 = vld [vmem:[%s2858 + $0x618] sm:$0xff]
  %v3055 = vld [vmem:[%s2858 + $0x620] sm:$0xff]
  %v3056 = vld [vmem:[%s2858 + $0x628] sm:$0xff]
  %v3057 = vld [vmem:[%s2858 + $0x630] sm:$0xff]
  %v3058 = vld [vmem:[%s2858 + $0x638] sm:$0xff]
  %v3059 = vld [vmem:[%s2858 + $0x640] sm:$0xff]
  %v3060 = vld [vmem:[%s2858 + $0x648] sm:$0xff]
  %v3061 = vld [vmem:[%s2858 + $0x650] sm:$0xff]
  %v3062 = vld [vmem:[%s2858 + $0x658] sm:$0xff]
  %v3063 = vld [vmem:[%s2858 + $0x660] sm:$0xff]
  %v3064 = vld [vmem:[%s2858 + $0x668] sm:$0xff]
  %v3065 = vld [vmem:[%s2858 + $0x670] sm:$0xff]
  %v3066 = vld [vmem:[%s2858 + $0x678] sm:$0xff]
  %v3067 = vld [vmem:[%s2858 + $0x680] sm:$0xff]
  %v3068 = vld [vmem:[%s2858 + $0x688] sm:$0xff]
  %v3069 = vld [vmem:[%s2858 + $0x690] sm:$0xff]
  %v3070 = vld [vmem:[%s2858 + $0x698] sm:$0xff]
  %v3071 = vld [vmem:[%s2858 + $0x6a0] sm:$0xff]
  %v3072 = vld [vmem:[%s2858 + $0x6a8] sm:$0xff]
  %v3073 = vld [vmem:[%s2858 + $0x6b0] sm:$0xff]
  %v3074 = vld [vmem:[%s2858 + $0x6b8] sm:$0xff]
  %v3075 = vld [vmem:[%s2858 + $0x6c0] sm:$0xff]
  %v3076 = vld [vmem:[%s2858 + $0x6c8] sm:$0xff]
  %v3077 = vld [vmem:[%s2858 + $0x6d0] sm:$0xff]
  %v3078 = vld [vmem:[%s2858 + $0x6d8] sm:$0xff]
  %v3079 = vld [vmem:[%s2858 + $0x6e0] sm:$0xff]
  %v3080 = vld [vmem:[%s2858 + $0x6e8] sm:$0xff]
  %v3081 = vld [vmem:[%s2858 + $0x6f0] sm:$0xff]
  %v3082 = vld [vmem:[%s2858 + $0x6f8] sm:$0xff]
  %v3083 = vld [vmem:[%s2858 + $0x700] sm:$0xff]
  %v3084 = vld [vmem:[%s2858 + $0x708] sm:$0xff]
  %v3085 = vld [vmem:[%s2858 + $0x710] sm:$0xff]
  %v3086 = vld [vmem:[%s2858 + $0x718] sm:$0xff]
  %v3087 = vld [vmem:[%s2858 + $0x720] sm:$0xff]
  %v3088 = vld [vmem:[%s2858 + $0x728] sm:$0xff]
  %v3089 = vld [vmem:[%s2858 + $0x730] sm:$0xff]
  %v3090 = vld [vmem:[%s2858 + $0x738] sm:$0xff]
  %v3091 = vld [vmem:[%s2858 + $0x740] sm:$0xff]
  %v3092 = vld [vmem:[%s2858 + $0x748] sm:$0xff]
  %v3093 = vld [vmem:[%s2858 + $0x750] sm:$0xff]
  %v3094 = vld [vmem:[%s2858 + $0x758] sm:$0xff]
  %v3095 = vld [vmem:[%s2858 + $0x760] sm:$0xff]
  %v3096 = vld [vmem:[%s2858 + $0x768] sm:$0xff]
  %v3097 = vld [vmem:[%s2858 + $0x770] sm:$0xff]
  %v3098 = vld [vmem:[%s2858 + $0x778] sm:$0xff]
  %v3099 = vld [vmem:[%s2858 + $0x780] sm:$0xff]
  %v3100 = vld [vmem:[%s2858 + $0x788] sm:$0xff]
  %v3101 = vld [vmem:[%s2858 + $0x790] sm:$0xff]
  %v3102 = vld [vmem:[%s2858 + $0x798] sm:$0xff]
  %v3103 = vld [vmem:[%s2858 + $0x7a0] sm:$0xff]
  %v3104 = vld [vmem:[%s2858 + $0x7a8] sm:$0xff]
  %v3105 = vld [vmem:[%s2858 + $0x7b0] sm:$0xff]
  %v3106 = vld [vmem:[%s2858 + $0x7b8] sm:$0xff]
  %v3107 = vld [vmem:[%s2858 + $0x7c0] sm:$0xff]
  %v3108 = vld [vmem:[%s2858 + $0x7c8] sm:$0xff]
  %v3109 = vld [vmem:[%s2858 + $0x7d0] sm:$0xff]
  %v3110 = vld [vmem:[%s2858 + $0x7d8] sm:$0xff]
  %v3111 = vld [vmem:[%s2858 + $0x7e0] sm:$0xff]
  %v3112 = vld [vmem:[%s2858 + $0x7e8] sm:$0xff]
  %v3113 = vld [vmem:[%s2858 + $0x7f0] sm:$0xff]
  %v3114 = vld [vmem:[%s2858 + $0x7f8] sm:$0xff]
  %v3115 = vld [vmem:[%s2858 + $0x800] sm:$0xff]
  %v3116 = vld [vmem:[%s2858 + $0x808] sm:$0xff]
  %v3117 = vld [vmem:[%s2858 + $0x810] sm:$0xff]
  %v3118 = vld [vmem:[%s2858 + $0x818] sm:$0xff]
  %v3119 = vld [vmem:[%s2858 + $0x820] sm:$0xff]
  %v3120 = vld [vmem:[%s2858 + $0x828] sm:$0xff]
  %v3121 = vld [vmem:[%s2858 + $0x830] sm:$0xff]
  %v3122 = vld [vmem:[%s2858 + $0x838] sm:$0xff]
  %v3123 = vld [vmem:[%s2858 + $0x840] sm:$0xff]
  %v3124 = vld [vmem:[%s2858 + $0x848] sm:$0xff]
  %v3125 = vld [vmem:[%s2858 + $0x850] sm:$0xff]
  %v3126 = vld [vmem:[%s2858 + $0x858] sm:$0xff]
  %v3127 = vld [vmem:[%s2858 + $0x860] sm:$0xff]
  %v3128 = vld [vmem:[%s2858 + $0x868] sm:$0xff]
  %v3129 = vld [vmem:[%s2858 + $0x870] sm:$0xff]
  %v3130 = vld [vmem:[%s2858 + $0x878] sm:$0xff]
  %v3131 = vld [vmem:[%s2858 + $0x880] sm:$0xff]
  %v3132 = vld [vmem:[%s2858 + $0x888] sm:$0xff]
  %v3133 = vld [vmem:[%s2858 + $0x890] sm:$0xff]
  %v3134 = vld [vmem:[%s2858 + $0x898] sm:$0xff]
  %v3135 = vld [vmem:[%s2858 + $0x8a0] sm:$0xff]
  %v3136 = vld [vmem:[%s2858 + $0x8a8] sm:$0xff]
  %v3137 = vld [vmem:[%s2858 + $0x8b0] sm:$0xff]
  %v3138 = vld [vmem:[%s2858 + $0x8b8] sm:$0xff]
  %v3139 = vld [vmem:[%s2858 + $0x8c0] sm:$0xff]
  %v3140 = vld [vmem:[%s2858 + $0x8c8] sm:$0xff]
  %v3141 = vld [vmem:[%s2858 + $0x8d0] sm:$0xff]
  %v3142 = vld [vmem:[%s2858 + $0x8d8] sm:$0xff]
  %v3143 = vld [vmem:[%s2858 + $0x8e0] sm:$0xff]
  %v3144 = vld [vmem:[%s2858 + $0x8e8] sm:$0xff]
  %v3145 = vld [vmem:[%s2858 + $0x8f0] sm:$0xff]
  %v3146 = vld [vmem:[%s2858 + $0x8f8] sm:$0xff]
  %v3147 = vld [vmem:[%s2858 + $0x900] sm:$0xff]
  %v3148 = vld [vmem:[%s2858 + $0x908] sm:$0xff]
  %v3149 = vld [vmem:[%s2858 + $0x910] sm:$0xff]
  %v3150 = vld [vmem:[%s2858 + $0x918] sm:$0xff]
  %v3151 = vld [vmem:[%s2858 + $0x920] sm:$0xff]
  %v3152 = vld [vmem:[%s2858 + $0x928] sm:$0xff]
  %v3153 = vld [vmem:[%s2858 + $0x930] sm:$0xff]
  %v3154 = vld [vmem:[%s2858 + $0x938] sm:$0xff]
  %v3155 = vld [vmem:[%s2858 + $0x940] sm:$0xff]
  %v3156 = vld [vmem:[%s2858 + $0x948] sm:$0xff]
  %v3157 = vld [vmem:[%s2858 + $0x950] sm:$0xff]
  %v3158 = vld [vmem:[%s2858 + $0x958] sm:$0xff]
  %v3159 = vld [vmem:[%s2858 + $0x960] sm:$0xff]
  %v3160 = vld [vmem:[%s2858 + $0x968] sm:$0xff]
  %v3161 = vld [vmem:[%s2858 + $0x970] sm:$0xff]
  %v3162 = vld [vmem:[%s2858 + $0x978] sm:$0xff]
  %v3163 = vld [vmem:[%s2858 + $0x980] sm:$0xff]
  %v3164 = vld [vmem:[%s2858 + $0x988] sm:$0xff]
  %v3165 = vld [vmem:[%s2858 + $0x990] sm:$0xff]
  %v3166 = vld [vmem:[%s2858 + $0x998] sm:$0xff]
  %v3167 = vld [vmem:[%s2858 + $0x9a0] sm:$0xff]
  %v3168 = vld [vmem:[%s2858 + $0x9a8] sm:$0xff]
  %v3169 = vld [vmem:[%s2858 + $0x9b0] sm:$0xff]
  %v3170 = vld [vmem:[%s2858 + $0x9b8] sm:$0xff]
  %v3171 = vld [vmem:[%s2858 + $0x9c0] sm:$0xff]
  %v3172 = vld [vmem:[%s2858 + $0x9c8] sm:$0xff]
  %v3173 = vld [vmem:[%s2858 + $0x9d0] sm:$0xff]
  %v3174 = vld [vmem:[%s2858 + $0x9d8] sm:$0xff]
  %v3175 = vld [vmem:[%s2858 + $0x9e0] sm:$0xff]
  %v3176 = vld [vmem:[%s2858 + $0x9e8] sm:$0xff]
  %v3177 = vld [vmem:[%s2858 + $0x9f0] sm:$0xff]
  %v3178 = vld [vmem:[%s2858 + $0x9f8] sm:$0xff]
  %v3179 = vld [vmem:[%s2858 + $0xa00] sm:$0xff]
  %v3180 = vld [vmem:[%s2858 + $0xa08] sm:$0xff]
  %v3181 = vld [vmem:[%s2858 + $0xa10] sm:$0xff]
  %v3182 = vld [vmem:[%s2858 + $0xa18] sm:$0xff]
  %v3183 = vld [vmem:[%s2858 + $0xa20] sm:$0xff]
  %v3184 = vld [vmem:[%s2858 + $0xa28] sm:$0xff]
  %v3185 = vld [vmem:[%s2858 + $0xa30] sm:$0xff]
  %v3186 = vld [vmem:[%s2858 + $0xa38] sm:$0xff]
  %v3187 = vld [vmem:[%s2858 + $0xa40] sm:$0xff]
  %v3188 = vld [vmem:[%s2858 + $0xa48] sm:$0xff]
  %v3189 = vld [vmem:[%s2858 + $0xa50] sm:$0xff]
  %v3190 = vld [vmem:[%s2858 + $0xa58] sm:$0xff]
  %v3191 = vld [vmem:[%s2858 + $0xa60] sm:$0xff]
  %v3192 = vld [vmem:[%s2858 + $0xa68] sm:$0xff]
  %v3193 = vld [vmem:[%s2858 + $0xa70] sm:$0xff]
  %v3194 = vld [vmem:[%s2858 + $0xa78] sm:$0xff]
  %v3195 = vld [vmem:[%s2858 + $0xa80] sm:$0xff]
  %v3196 = vld [vmem:[%s2858 + $0xa88] sm:$0xff]
  %v3197 = vld [vmem:[%s2858 + $0xa90] sm:$0xff]
  %v3198 = vld [vmem:[%s2858 + $0xa98] sm:$0xff]
  %v3199 = vld [vmem:[%s2858 + $0xaa0] sm:$0xff]
  %v3200 = vld [vmem:[%s2858 + $0xaa8] sm:$0xff]
  %v3201 = vld [vmem:[%s2858 + $0xab0] sm:$0xff]
  %v3202 = vld [vmem:[%s2858 + $0xab8] sm:$0xff]
  %v3203 = vld [vmem:[%s2858 + $0xac0] sm:$0xff]
  %v3204 = vld [vmem:[%s2858 + $0xac8] sm:$0xff]
  %v3205 = vld [vmem:[%s2858 + $0xad0] sm:$0xff]
  %v3206 = vld [vmem:[%s2858 + $0xad8] sm:$0xff]
  %v3207 = vld [vmem:[%s2858 + $0xae0] sm:$0xff]
  %v3208 = vld [vmem:[%s2858 + $0xae8] sm:$0xff]
  %v3209 = vld [vmem:[%s2858 + $0xaf0] sm:$0xff]
  %v3210 = vld [vmem:[%s2858 + $0xaf8] sm:$0xff]
  %v3211 = vld [vmem:[%s2858 + $0xb00] sm:$0xff]
  %v3212 = vld [vmem:[%s2858 + $0xb08] sm:$0xff]
  %v3213 = vld [vmem:[%s2858 + $0xb10] sm:$0xff]
  %v3214 = vld [vmem:[%s2858 + $0xb18] sm:$0xff]
  %v3215 = vld [vmem:[%s2858 + $0xb20] sm:$0xff]
  %v3216 = vld [vmem:[%s2858 + $0xb28] sm:$0xff]
  %v3217 = vld [vmem:[%s2858 + $0xb30] sm:$0xff]
  %v3218 = vld [vmem:[%s2858 + $0xb38] sm:$0xff]
  %v3219 = vld [vmem:[%s2858 + $0xb40] sm:$0xff]
  %v3220 = vld [vmem:[%s2858 + $0xb48] sm:$0xff]
  %v3221 = vld [vmem:[%s2858 + $0xb50] sm:$0xff]
  %v3222 = vld [vmem:[%s2858 + $0xb58] sm:$0xff]
  %v3223 = vld [vmem:[%s2858 + $0xb60] sm:$0xff]
  %v3224 = vld [vmem:[%s2858 + $0xb68] sm:$0xff]
  %v3225 = vld [vmem:[%s2858 + $0xb70] sm:$0xff]
  %v3226 = vld [vmem:[%s2858 + $0xb78] sm:$0xff]
  %v3227 = vld [vmem:[%s2858 + $0xb80] sm:$0xff]
  %v3228 = vld [vmem:[%s2858 + $0xb88] sm:$0xff]
  %v3229 = vld [vmem:[%s2858 + $0xb90] sm:$0xff]
  %v3230 = vld [vmem:[%s2858 + $0xb98] sm:$0xff]
  %v3231 = vld [vmem:[%s2858 + $0xba0] sm:$0xff]
  %v3232 = vld [vmem:[%s2858 + $0xba8] sm:$0xff]
  %v3233 = vld [vmem:[%s2858 + $0xbb0] sm:$0xff]
  %v3234 = vld [vmem:[%s2858 + $0xbb8] sm:$0xff]
  %v3235 = vld [vmem:[%s2858 + $0xbc0] sm:$0xff]
  %v3236 = vld [vmem:[%s2858 + $0xbc8] sm:$0xff]
  %v3237 = vld [vmem:[%s2858 + $0xbd0] sm:$0xff]
  %v3238 = vld [vmem:[%s2858 + $0xbd8] sm:$0xff]
  %v3239 = vld [vmem:[%s2858 + $0xbe0] sm:$0xff]
  %v3240 = vld [vmem:[%s2858 + $0xbe8] sm:$0xff]
  %v3241 = vld [vmem:[%s2858 + $0xbf0] sm:$0xff]
  %v3242 = vld [vmem:[%s2858 + $0xbf8] sm:$0xff]
  %v3243 = vld [vmem:[%s2858 + $0xc00] sm:$0xff]
  %v3244 = vld [vmem:[%s2858 + $0xc08] sm:$0xff]
  %v3245 = vld [vmem:[%s2858 + $0xc10] sm:$0xff]
  %v3246 = vld [vmem:[%s2858 + $0xc18] sm:$0xff]
  %v3247 = vld [vmem:[%s2858 + $0xc20] sm:$0xff]
  %v3248 = vld [vmem:[%s2858 + $0xc28] sm:$0xff]
  %v3249 = vld [vmem:[%s2858 + $0xc30] sm:$0xff]
  %v3250 = vld [vmem:[%s2858 + $0xc38] sm:$0xff]
  %v3251 = vld [vmem:[%s2858 + $0xc40] sm:$0xff]
  %v3252 = vld [vmem:[%s2858 + $0xc48] sm:$0xff]
  %v3253 = vld [vmem:[%s2858 + $0xc50] sm:$0xff]
  %v3254 = vld [vmem:[%s2858 + $0xc58] sm:$0xff]
  %v3255 = vld [vmem:[%s2858 + $0xc60] sm:$0xff]
  %v3256 = vld [vmem:[%s2858 + $0xc68] sm:$0xff]
  %v3257 = vld [vmem:[%s2858 + $0xc70] sm:$0xff]
  %v3258 = vld [vmem:[%s2858 + $0xc78] sm:$0xff]
  %v3259 = vld [vmem:[%s2858 + $0xc80] sm:$0xff]
  %v3260 = vld [vmem:[%s2858 + $0xc88] sm:$0xff]
  %v3261 = vld [vmem:[%s2858 + $0xc90] sm:$0xff]
  %v3262 = vld [vmem:[%s2858 + $0xc98] sm:$0xff]
  %v3263 = vld [vmem:[%s2858 + $0xca0] sm:$0xff]
  %v3264 = vld [vmem:[%s2858 + $0xca8] sm:$0xff]
  %v3265 = vld [vmem:[%s2858 + $0xcb0] sm:$0xff]
  %v3266 = vld [vmem:[%s2858 + $0xcb8] sm:$0xff]
  %v3267 = vld [vmem:[%s2858 + $0xcc0] sm:$0xff]
  %v3268 = vld [vmem:[%s2858 + $0xcc8] sm:$0xff]
  %v3269 = vld [vmem:[%s2858 + $0xcd0] sm:$0xff]
  %v3270 = vld [vmem:[%s2858 + $0xcd8] sm:$0xff]
  %v3271 = vld [vmem:[%s2858 + $0xce0] sm:$0xff]
  %v3272 = vld [vmem:[%s2858 + $0xce8] sm:$0xff]
  %v3273 = vld [vmem:[%s2858 + $0xcf0] sm:$0xff]
  %v3274 = vld [vmem:[%s2858 + $0xcf8] sm:$0xff]
  %3275 = vmatpush.msra.mxu0 %v3054
  %3276 = vmatpush.msra.mxu0 %v3041
  %3277 = vmatpush.msra.mxu0 %v3028
  %3278 = vmatpush.msra.mxu0 %v3015
  %3279 = vmatpush.msra.mxu0 %v3002
  %3280 = vmatpush.msra.mxu0 %v2989
  %3281 = vmatpush.msra.mxu0 %v2976
  %3282 = vmatpush.msra.mxu0 %v2963
  %3283 = vmatpush.msra.mxu0 %v2950
  %3284 = vmatpush.msra.mxu0 %v2937
  %3285 = vmatpush.msra.mxu0 %v2924
  %3286 = vmatpush.msra.mxu0 %v2911
  %3287 = vmatpush.msra.mxu0 %v2898
  %3288 = vmatpush.msra.mxu0 %v2885
  %3289 = vmatpush.msra.mxu0 %v2872
  %3290 = vmatpush.msra.mxu0 %v2859
  %3291 = vmatmul.f32.gmra.mxu0 %v20
  %v3292 = vpop.f32.mrf.mxu0
  %v3293 = vadd.f32 0.0, %v3292
  %3294 = vdwg.mxu0
  %3295 = vmatpush.msra.mxu0 %v3262
  %3296 = vmatpush.msra.mxu0 %v3249
  %3297 = vmatpush.msra.mxu0 %v3236
  %3298 = vmatpush.msra.mxu0 %v3223
  %3299 = vmatpush.msra.mxu0 %v3210
  %3300 = vmatpush.msra.mxu0 %v3197
  %3301 = vmatpush.msra.mxu0 %v3184
  %3302 = vmatpush.msra.mxu0 %v3171
  %3303 = vmatpush.msra.mxu0 %v3158
  %3304 = vmatpush.msra.mxu0 %v3145
  %3305 = vmatpush.msra.mxu0 %v3132
  %3306 = vmatpush.msra.mxu0 %v3119
  %3307 = vmatpush.msra.mxu0 %v3106
  %3308 = vmatpush.msra.mxu0 %v3093
  %3309 = vmatpush.msra.mxu0 %v3080
  %3310 = vmatpush.msra.mxu0 %v3067
  %3311 = vmatmul.f32.gmra.mxu0 %v21
  %v3312 = vpop.f32.mrf.mxu0
  %v3313 = vadd.f32 %v3293, %v3312
  %3314 = vdwg.mxu0
  %3315 = vmatpush.msra.mxu0 %v3055
  %3316 = vmatpush.msra.mxu0 %v3042
  %3317 = vmatpush.msra.mxu0 %v3029
  %3318 = vmatpush.msra.mxu0 %v3016
  %3319 = vmatpush.msra.mxu0 %v3003
  %3320 = vmatpush.msra.mxu0 %v2990
  %3321 = vmatpush.msra.mxu0 %v2977
  %3322 = vmatpush.msra.mxu0 %v2964
  %3323 = vmatpush.msra.mxu0 %v2951
  %3324 = vmatpush.msra.mxu0 %v2938
  %3325 = vmatpush.msra.mxu0 %v2925
  %3326 = vmatpush.msra.mxu0 %v2912
  %3327 = vmatpush.msra.mxu0 %v2899
  %3328 = vmatpush.msra.mxu0 %v2886
  %3329 = vmatpush.msra.mxu0 %v2873
  %3330 = vmatpush.msra.mxu0 %v2860
  %3331 = vmatmul.f32.gmra.mxu0 %v20
  %v3332 = vpop.f32.mrf.mxu0
  %v3333 = vadd.f32 0.0, %v3332
  %3334 = vdwg.mxu0
  %3335 = vmatpush.msra.mxu0 %v3263
  %3336 = vmatpush.msra.mxu0 %v3250
  %3337 = vmatpush.msra.mxu0 %v3237
  %3338 = vmatpush.msra.mxu0 %v3224
  %3339 = vmatpush.msra.mxu0 %v3211
  %3340 = vmatpush.msra.mxu0 %v3198
  %3341 = vmatpush.msra.mxu0 %v3185
  %3342 = vmatpush.msra.mxu0 %v3172
  %3343 = vmatpush.msra.mxu0 %v3159
  %3344 = vmatpush.msra.mxu0 %v3146
  %3345 = vmatpush.msra.mxu0 %v3133
  %3346 = vmatpush.msra.mxu0 %v3120
  %3347 = vmatpush.msra.mxu0 %v3107
  %3348 = vmatpush.msra.mxu0 %v3094
  %3349 = vmatpush.msra.mxu0 %v3081
  %3350 = vmatpush.msra.mxu0 %v3068
  %3351 = vmatmul.f32.gmra.mxu0 %v21
  %v3352 = vpop.f32.mrf.mxu0
  %v3353 = vadd.f32 %v3333, %v3352
  %3354 = vdwg.mxu0
  %3355 = vmatpush.msra.mxu0 %v3056
  %3356 = vmatpush.msra.mxu0 %v3043
  %3357 = vmatpush.msra.mxu0 %v3030
  %3358 = vmatpush.msra.mxu0 %v3017
  %3359 = vmatpush.msra.mxu0 %v3004
  %3360 = vmatpush.msra.mxu0 %v2991
  %3361 = vmatpush.msra.mxu0 %v2978
  %3362 = vmatpush.msra.mxu0 %v2965
  %3363 = vmatpush.msra.mxu0 %v2952
  %3364 = vmatpush.msra.mxu0 %v2939
  %3365 = vmatpush.msra.mxu0 %v2926
  %3366 = vmatpush.msra.mxu0 %v2913
  %3367 = vmatpush.msra.mxu0 %v2900
  %3368 = vmatpush.msra.mxu0 %v2887
  %3369 = vmatpush.msra.mxu0 %v2874
  %3370 = vmatpush.msra.mxu0 %v2861
  %3371 = vmatmul.f32.gmra.mxu0 %v20
  %v3372 = vpop.f32.mrf.mxu0
  %v3373 = vadd.f32 0.0, %v3372
  %3374 = vdwg.mxu0
  %3375 = vmatpush.msra.mxu0 %v3264
  %3376 = vmatpush.msra.mxu0 %v3251
  %3377 = vmatpush.msra.mxu0 %v3238
  %3378 = vmatpush.msra.mxu0 %v3225
  %3379 = vmatpush.msra.mxu0 %v3212
  %3380 = vmatpush.msra.mxu0 %v3199
  %3381 = vmatpush.msra.mxu0 %v3186
  %3382 = vmatpush.msra.mxu0 %v3173
  %3383 = vmatpush.msra.mxu0 %v3160
  %3384 = vmatpush.msra.mxu0 %v3147
  %3385 = vmatpush.msra.mxu0 %v3134
  %3386 = vmatpush.msra.mxu0 %v3121
  %3387 = vmatpush.msra.mxu0 %v3108
  %3388 = vmatpush.msra.mxu0 %v3095
  %3389 = vmatpush.msra.mxu0 %v3082
  %3390 = vmatpush.msra.mxu0 %v3069
  %3391 = vmatmul.f32.gmra.mxu0 %v21
  %v3392 = vpop.f32.mrf.mxu0
  %v3393 = vadd.f32 %v3373, %v3392
  %3394 = vdwg.mxu0
  %3395 = vmatpush.msra.mxu0 %v3057
  %3396 = vmatpush.msra.mxu0 %v3044
  %3397 = vmatpush.msra.mxu0 %v3031
  %3398 = vmatpush.msra.mxu0 %v3018
  %3399 = vmatpush.msra.mxu0 %v3005
  %3400 = vmatpush.msra.mxu0 %v2992
  %3401 = vmatpush.msra.mxu0 %v2979
  %3402 = vmatpush.msra.mxu0 %v2966
  %3403 = vmatpush.msra.mxu0 %v2953
  %3404 = vmatpush.msra.mxu0 %v2940
  %3405 = vmatpush.msra.mxu0 %v2927
  %3406 = vmatpush.msra.mxu0 %v2914
  %3407 = vmatpush.msra.mxu0 %v2901
  %3408 = vmatpush.msra.mxu0 %v2888
  %3409 = vmatpush.msra.mxu0 %v2875
  %3410 = vmatpush.msra.mxu0 %v2862
  %3411 = vmatmul.f32.gmra.mxu0 %v20
  %v3412 = vpop.f32.mrf.mxu0
  %v3413 = vadd.f32 0.0, %v3412
  %3414 = vdwg.mxu0
  %3415 = vmatpush.msra.mxu0 %v3265
  %3416 = vmatpush.msra.mxu0 %v3252
  %3417 = vmatpush.msra.mxu0 %v3239
  %3418 = vmatpush.msra.mxu0 %v3226
  %3419 = vmatpush.msra.mxu0 %v3213
  %3420 = vmatpush.msra.mxu0 %v3200
  %3421 = vmatpush.msra.mxu0 %v3187
  %3422 = vmatpush.msra.mxu0 %v3174
  %3423 = vmatpush.msra.mxu0 %v3161
  %3424 = vmatpush.msra.mxu0 %v3148
  %3425 = vmatpush.msra.mxu0 %v3135
  %3426 = vmatpush.msra.mxu0 %v3122
  %3427 = vmatpush.msra.mxu0 %v3109
  %3428 = vmatpush.msra.mxu0 %v3096
  %3429 = vmatpush.msra.mxu0 %v3083
  %3430 = vmatpush.msra.mxu0 %v3070
  %3431 = vmatmul.f32.gmra.mxu0 %v21
  %v3432 = vpop.f32.mrf.mxu0
  %v3433 = vadd.f32 %v3413, %v3432
  %3434 = vdwg.mxu0
  %3435 = vmatpush.msra.mxu0 %v3058
  %3436 = vmatpush.msra.mxu0 %v3045
  %3437 = vmatpush.msra.mxu0 %v3032
  %3438 = vmatpush.msra.mxu0 %v3019
  %3439 = vmatpush.msra.mxu0 %v3006
  %3440 = vmatpush.msra.mxu0 %v2993
  %3441 = vmatpush.msra.mxu0 %v2980
  %3442 = vmatpush.msra.mxu0 %v2967
  %3443 = vmatpush.msra.mxu0 %v2954
  %3444 = vmatpush.msra.mxu0 %v2941
  %3445 = vmatpush.msra.mxu0 %v2928
  %3446 = vmatpush.msra.mxu0 %v2915
  %3447 = vmatpush.msra.mxu0 %v2902
  %3448 = vmatpush.msra.mxu0 %v2889
  %3449 = vmatpush.msra.mxu0 %v2876
  %3450 = vmatpush.msra.mxu0 %v2863
  %3451 = vmatmul.f32.gmra.mxu0 %v20
  %v3452 = vpop.f32.mrf.mxu0
  %v3453 = vadd.f32 0.0, %v3452
  %3454 = vdwg.mxu0
  %3455 = vmatpush.msra.mxu0 %v3266
  %3456 = vmatpush.msra.mxu0 %v3253
  %3457 = vmatpush.msra.mxu0 %v3240
  %3458 = vmatpush.msra.mxu0 %v3227
  %3459 = vmatpush.msra.mxu0 %v3214
  %3460 = vmatpush.msra.mxu0 %v3201
  %3461 = vmatpush.msra.mxu0 %v3188
  %3462 = vmatpush.msra.mxu0 %v3175
  %3463 = vmatpush.msra.mxu0 %v3162
  %3464 = vmatpush.msra.mxu0 %v3149
  %3465 = vmatpush.msra.mxu0 %v3136
  %3466 = vmatpush.msra.mxu0 %v3123
  %3467 = vmatpush.msra.mxu0 %v3110
  %3468 = vmatpush.msra.mxu0 %v3097
  %3469 = vmatpush.msra.mxu0 %v3084
  %3470 = vmatpush.msra.mxu0 %v3071
  %3471 = vmatmul.f32.gmra.mxu0 %v21
  %v3472 = vpop.f32.mrf.mxu0
  %v3473 = vadd.f32 %v3453, %v3472
  %3474 = vdwg.mxu0
  %3475 = vmatpush.msra.mxu0 %v3059
  %3476 = vmatpush.msra.mxu0 %v3046
  %3477 = vmatpush.msra.mxu0 %v3033
  %3478 = vmatpush.msra.mxu0 %v3020
  %3479 = vmatpush.msra.mxu0 %v3007
  %3480 = vmatpush.msra.mxu0 %v2994
  %3481 = vmatpush.msra.mxu0 %v2981
  %3482 = vmatpush.msra.mxu0 %v2968
  %3483 = vmatpush.msra.mxu0 %v2955
  %3484 = vmatpush.msra.mxu0 %v2942
  %3485 = vmatpush.msra.mxu0 %v2929
  %3486 = vmatpush.msra.mxu0 %v2916
  %3487 = vmatpush.msra.mxu0 %v2903
  %3488 = vmatpush.msra.mxu0 %v2890
  %3489 = vmatpush.msra.mxu0 %v2877
  %3490 = vmatpush.msra.mxu0 %v2864
  %3491 = vmatmul.f32.gmra.mxu0 %v20
  %v3492 = vpop.f32.mrf.mxu0
  %v3493 = vadd.f32 0.0, %v3492
  %3494 = vdwg.mxu0
  %3495 = vmatpush.msra.mxu0 %v3267
  %3496 = vmatpush.msra.mxu0 %v3254
  %3497 = vmatpush.msra.mxu0 %v3241
  %3498 = vmatpush.msra.mxu0 %v3228
  %3499 = vmatpush.msra.mxu0 %v3215
  %3500 = vmatpush.msra.mxu0 %v3202
  %3501 = vmatpush.msra.mxu0 %v3189
  %3502 = vmatpush.msra.mxu0 %v3176
  %3503 = vmatpush.msra.mxu0 %v3163
  %3504 = vmatpush.msra.mxu0 %v3150
  %3505 = vmatpush.msra.mxu0 %v3137
  %3506 = vmatpush.msra.mxu0 %v3124
  %3507 = vmatpush.msra.mxu0 %v3111
  %3508 = vmatpush.msra.mxu0 %v3098
  %3509 = vmatpush.msra.mxu0 %v3085
  %3510 = vmatpush.msra.mxu0 %v3072
  %3511 = vmatmul.f32.gmra.mxu0 %v21
  %v3512 = vpop.f32.mrf.mxu0
  %v3513 = vadd.f32 %v3493, %v3512
  %3514 = vdwg.mxu0
  %3515 = vmatpush.msra.mxu0 %v3060
  %3516 = vmatpush.msra.mxu0 %v3047
  %3517 = vmatpush.msra.mxu0 %v3034
  %3518 = vmatpush.msra.mxu0 %v3021
  %3519 = vmatpush.msra.mxu0 %v3008
  %3520 = vmatpush.msra.mxu0 %v2995
  %3521 = vmatpush.msra.mxu0 %v2982
  %3522 = vmatpush.msra.mxu0 %v2969
  %3523 = vmatpush.msra.mxu0 %v2956
  %3524 = vmatpush.msra.mxu0 %v2943
  %3525 = vmatpush.msra.mxu0 %v2930
  %3526 = vmatpush.msra.mxu0 %v2917
  %3527 = vmatpush.msra.mxu0 %v2904
  %3528 = vmatpush.msra.mxu0 %v2891
  %3529 = vmatpush.msra.mxu0 %v2878
  %3530 = vmatpush.msra.mxu0 %v2865
  %3531 = vmatmul.f32.gmra.mxu0 %v20
  %v3532 = vpop.f32.mrf.mxu0
  %v3533 = vadd.f32 0.0, %v3532
  %3534 = vdwg.mxu0
  %3535 = vmatpush.msra.mxu0 %v3268
  %3536 = vmatpush.msra.mxu0 %v3255
  %3537 = vmatpush.msra.mxu0 %v3242
  %3538 = vmatpush.msra.mxu0 %v3229
  %3539 = vmatpush.msra.mxu0 %v3216
  %3540 = vmatpush.msra.mxu0 %v3203
  %3541 = vmatpush.msra.mxu0 %v3190
  %3542 = vmatpush.msra.mxu0 %v3177
  %3543 = vmatpush.msra.mxu0 %v3164
  %3544 = vmatpush.msra.mxu0 %v3151
  %3545 = vmatpush.msra.mxu0 %v3138
  %3546 = vmatpush.msra.mxu0 %v3125
  %3547 = vmatpush.msra.mxu0 %v3112
  %3548 = vmatpush.msra.mxu0 %v3099
  %3549 = vmatpush.msra.mxu0 %v3086
  %3550 = vmatpush.msra.mxu0 %v3073
  %3551 = vmatmul.f32.gmra.mxu0 %v21
  %v3552 = vpop.f32.mrf.mxu0
  %v3553 = vadd.f32 %v3533, %v3552
  %3554 = vdwg.mxu0
  %3555 = vmatpush.msra.mxu0 %v3061
  %3556 = vmatpush.msra.mxu0 %v3048
  %3557 = vmatpush.msra.mxu0 %v3035
  %3558 = vmatpush.msra.mxu0 %v3022
  %3559 = vmatpush.msra.mxu0 %v3009
  %3560 = vmatpush.msra.mxu0 %v2996
  %3561 = vmatpush.msra.mxu0 %v2983
  %3562 = vmatpush.msra.mxu0 %v2970
  %3563 = vmatpush.msra.mxu0 %v2957
  %3564 = vmatpush.msra.mxu0 %v2944
  %3565 = vmatpush.msra.mxu0 %v2931
  %3566 = vmatpush.msra.mxu0 %v2918
  %3567 = vmatpush.msra.mxu0 %v2905
  %3568 = vmatpush.msra.mxu0 %v2892
  %3569 = vmatpush.msra.mxu0 %v2879
  %3570 = vmatpush.msra.mxu0 %v2866
  %3571 = vmatmul.f32.gmra.mxu0 %v20
  %v3572 = vpop.f32.mrf.mxu0
  %v3573 = vadd.f32 0.0, %v3572
  %3574 = vdwg.mxu0
  %3575 = vmatpush.msra.mxu0 %v3269
  %3576 = vmatpush.msra.mxu0 %v3256
  %3577 = vmatpush.msra.mxu0 %v3243
  %3578 = vmatpush.msra.mxu0 %v3230
  %3579 = vmatpush.msra.mxu0 %v3217
  %3580 = vmatpush.msra.mxu0 %v3204
  %3581 = vmatpush.msra.mxu0 %v3191
  %3582 = vmatpush.msra.mxu0 %v3178
  %3583 = vmatpush.msra.mxu0 %v3165
  %3584 = vmatpush.msra.mxu0 %v3152
  %3585 = vmatpush.msra.mxu0 %v3139
  %3586 = vmatpush.msra.mxu0 %v3126
  %3587 = vmatpush.msra.mxu0 %v3113
  %3588 = vmatpush.msra.mxu0 %v3100
  %3589 = vmatpush.msra.mxu0 %v3087
  %3590 = vmatpush.msra.mxu0 %v3074
  %3591 = vmatmul.f32.gmra.mxu0 %v21
  %v3592 = vpop.f32.mrf.mxu0
  %v3593 = vadd.f32 %v3573, %v3592
  %3594 = vdwg.mxu0
  %3595 = vmatpush.msra.mxu0 %v3062
  %3596 = vmatpush.msra.mxu0 %v3049
  %3597 = vmatpush.msra.mxu0 %v3036
  %3598 = vmatpush.msra.mxu0 %v3023
  %3599 = vmatpush.msra.mxu0 %v3010
  %3600 = vmatpush.msra.mxu0 %v2997
  %3601 = vmatpush.msra.mxu0 %v2984
  %3602 = vmatpush.msra.mxu0 %v2971
  %3603 = vmatpush.msra.mxu0 %v2958
  %3604 = vmatpush.msra.mxu0 %v2945
  %3605 = vmatpush.msra.mxu0 %v2932
  %3606 = vmatpush.msra.mxu0 %v2919
  %3607 = vmatpush.msra.mxu0 %v2906
  %3608 = vmatpush.msra.mxu0 %v2893
  %3609 = vmatpush.msra.mxu0 %v2880
  %3610 = vmatpush.msra.mxu0 %v2867
  %3611 = vmatmul.f32.gmra.mxu0 %v20
  %v3612 = vpop.f32.mrf.mxu0
  %v3613 = vadd.f32 0.0, %v3612
  %3614 = vdwg.mxu0
  %3615 = vmatpush.msra.mxu0 %v3270
  %3616 = vmatpush.msra.mxu0 %v3257
  %3617 = vmatpush.msra.mxu0 %v3244
  %3618 = vmatpush.msra.mxu0 %v3231
  %3619 = vmatpush.msra.mxu0 %v3218
  %3620 = vmatpush.msra.mxu0 %v3205
  %3621 = vmatpush.msra.mxu0 %v3192
  %3622 = vmatpush.msra.mxu0 %v3179
  %3623 = vmatpush.msra.mxu0 %v3166
  %3624 = vmatpush.msra.mxu0 %v3153
  %3625 = vmatpush.msra.mxu0 %v3140
  %3626 = vmatpush.msra.mxu0 %v3127
  %3627 = vmatpush.msra.mxu0 %v3114
  %3628 = vmatpush.msra.mxu0 %v3101
  %3629 = vmatpush.msra.mxu0 %v3088
  %3630 = vmatpush.msra.mxu0 %v3075
  %3631 = vmatmul.f32.gmra.mxu0 %v21
  %v3632 = vpop.f32.mrf.mxu0
  %v3633 = vadd.f32 %v3613, %v3632
  %3634 = vdwg.mxu0
  %3635 = vmatpush.msra.mxu0 %v3063
  %3636 = vmatpush.msra.mxu0 %v3050
  %3637 = vmatpush.msra.mxu0 %v3037
  %3638 = vmatpush.msra.mxu0 %v3024
  %3639 = vmatpush.msra.mxu0 %v3011
  %3640 = vmatpush.msra.mxu0 %v2998
  %3641 = vmatpush.msra.mxu0 %v2985
  %3642 = vmatpush.msra.mxu0 %v2972
  %3643 = vmatpush.msra.mxu0 %v2959
  %3644 = vmatpush.msra.mxu0 %v2946
  %3645 = vmatpush.msra.mxu0 %v2933
  %3646 = vmatpush.msra.mxu0 %v2920
  %3647 = vmatpush.msra.mxu0 %v2907
  %3648 = vmatpush.msra.mxu0 %v2894
  %3649 = vmatpush.msra.mxu0 %v2881
  %3650 = vmatpush.msra.mxu0 %v2868
  %3651 = vmatmul.f32.gmra.mxu0 %v20
  %v3652 = vpop.f32.mrf.mxu0
  %v3653 = vadd.f32 0.0, %v3652
  %3654 = vdwg.mxu0
  %3655 = vmatpush.msra.mxu0 %v3271
  %3656 = vmatpush.msra.mxu0 %v3258
  %3657 = vmatpush.msra.mxu0 %v3245
  %3658 = vmatpush.msra.mxu0 %v3232
  %3659 = vmatpush.msra.mxu0 %v3219
  %3660 = vmatpush.msra.mxu0 %v3206
  %3661 = vmatpush.msra.mxu0 %v3193
  %3662 = vmatpush.msra.mxu0 %v3180
  %3663 = vmatpush.msra.mxu0 %v3167
  %3664 = vmatpush.msra.mxu0 %v3154
  %3665 = vmatpush.msra.mxu0 %v3141
  %3666 = vmatpush.msra.mxu0 %v3128
  %3667 = vmatpush.msra.mxu0 %v3115
  %3668 = vmatpush.msra.mxu0 %v3102
  %3669 = vmatpush.msra.mxu0 %v3089
  %3670 = vmatpush.msra.mxu0 %v3076
  %3671 = vmatmul.f32.gmra.mxu0 %v21
  %v3672 = vpop.f32.mrf.mxu0
  %v3673 = vadd.f32 %v3653, %v3672
  %3674 = vdwg.mxu0
  %3675 = vmatpush.msra.mxu0 %v3064
  %3676 = vmatpush.msra.mxu0 %v3051
  %3677 = vmatpush.msra.mxu0 %v3038
  %3678 = vmatpush.msra.mxu0 %v3025
  %3679 = vmatpush.msra.mxu0 %v3012
  %3680 = vmatpush.msra.mxu0 %v2999
  %3681 = vmatpush.msra.mxu0 %v2986
  %3682 = vmatpush.msra.mxu0 %v2973
  %3683 = vmatpush.msra.mxu0 %v2960
  %3684 = vmatpush.msra.mxu0 %v2947
  %3685 = vmatpush.msra.mxu0 %v2934
  %3686 = vmatpush.msra.mxu0 %v2921
  %3687 = vmatpush.msra.mxu0 %v2908
  %3688 = vmatpush.msra.mxu0 %v2895
  %3689 = vmatpush.msra.mxu0 %v2882
  %3690 = vmatpush.msra.mxu0 %v2869
  %3691 = vmatmul.f32.gmra.mxu0 %v20
  %v3692 = vpop.f32.mrf.mxu0
  %v3693 = vadd.f32 0.0, %v3692
  %3694 = vdwg.mxu0
  %3695 = vmatpush.msra.mxu0 %v3272
  %3696 = vmatpush.msra.mxu0 %v3259
  %3697 = vmatpush.msra.mxu0 %v3246
  %3698 = vmatpush.msra.mxu0 %v3233
  %3699 = vmatpush.msra.mxu0 %v3220
  %3700 = vmatpush.msra.mxu0 %v3207
  %3701 = vmatpush.msra.mxu0 %v3194
  %3702 = vmatpush.msra.mxu0 %v3181
  %3703 = vmatpush.msra.mxu0 %v3168
  %3704 = vmatpush.msra.mxu0 %v3155
  %3705 = vmatpush.msra.mxu0 %v3142
  %3706 = vmatpush.msra.mxu0 %v3129
  %3707 = vmatpush.msra.mxu0 %v3116
  %3708 = vmatpush.msra.mxu0 %v3103
  %3709 = vmatpush.msra.mxu0 %v3090
  %3710 = vmatpush.msra.mxu0 %v3077
  %3711 = vmatmul.f32.gmra.mxu0 %v21
  %v3712 = vpop.f32.mrf.mxu0
  %v3713 = vadd.f32 %v3693, %v3712
  %3714 = vdwg.mxu0
  %3715 = vmatpush.msra.mxu0 %v3065
  %3716 = vmatpush.msra.mxu0 %v3052
  %3717 = vmatpush.msra.mxu0 %v3039
  %3718 = vmatpush.msra.mxu0 %v3026
  %3719 = vmatpush.msra.mxu0 %v3013
  %3720 = vmatpush.msra.mxu0 %v3000
  %3721 = vmatpush.msra.mxu0 %v2987
  %3722 = vmatpush.msra.mxu0 %v2974
  %3723 = vmatpush.msra.mxu0 %v2961
  %3724 = vmatpush.msra.mxu0 %v2948
  %3725 = vmatpush.msra.mxu0 %v2935
  %3726 = vmatpush.msra.mxu0 %v2922
  %3727 = vmatpush.msra.mxu0 %v2909
  %3728 = vmatpush.msra.mxu0 %v2896
  %3729 = vmatpush.msra.mxu0 %v2883
  %3730 = vmatpush.msra.mxu0 %v2870
  %3731 = vmatmul.f32.gmra.mxu0 %v20
  %v3732 = vpop.f32.mrf.mxu0
  %v3733 = vadd.f32 0.0, %v3732
  %3734 = vdwg.mxu0
  %3735 = vmatpush.msra.mxu0 %v3273
  %3736 = vmatpush.msra.mxu0 %v3260
  %3737 = vmatpush.msra.mxu0 %v3247
  %3738 = vmatpush.msra.mxu0 %v3234
  %3739 = vmatpush.msra.mxu0 %v3221
  %3740 = vmatpush.msra.mxu0 %v3208
  %3741 = vmatpush.msra.mxu0 %v3195
  %3742 = vmatpush.msra.mxu0 %v3182
  %3743 = vmatpush.msra.mxu0 %v3169
  %3744 = vmatpush.msra.mxu0 %v3156
  %3745 = vmatpush.msra.mxu0 %v3143
  %3746 = vmatpush.msra.mxu0 %v3130
  %3747 = vmatpush.msra.mxu0 %v3117
  %3748 = vmatpush.msra.mxu0 %v3104
  %3749 = vmatpush.msra.mxu0 %v3091
  %3750 = vmatpush.msra.mxu0 %v3078
  %3751 = vmatmul.f32.gmra.mxu0 %v21
  %v3752 = vpop.f32.mrf.mxu0
  %v3753 = vadd.f32 %v3733, %v3752
  %3754 = vdwg.mxu0
  %3755 = vmatpush.msra.mxu0 %v3066
  %3756 = vmatpush.msra.mxu0 %v3053
  %3757 = vmatpush.msra.mxu0 %v3040
  %3758 = vmatpush.msra.mxu0 %v3027
  %3759 = vmatpush.msra.mxu0 %v3014
  %3760 = vmatpush.msra.mxu0 %v3001
  %3761 = vmatpush.msra.mxu0 %v2988
  %3762 = vmatpush.msra.mxu0 %v2975
  %3763 = vmatpush.msra.mxu0 %v2962
  %3764 = vmatpush.msra.mxu0 %v2949
  %3765 = vmatpush.msra.mxu0 %v2936
  %3766 = vmatpush.msra.mxu0 %v2923
  %3767 = vmatpush.msra.mxu0 %v2910
  %3768 = vmatpush.msra.mxu0 %v2897
  %3769 = vmatpush.msra.mxu0 %v2884
  %3770 = vmatpush.msra.mxu0 %v2871
  %3771 = vmatmul.f32.gmra.mxu0 %v20
  %v3772 = vpop.f32.mrf.mxu0
  %v3773 = vadd.f32 0.0, %v3772
  %3774 = vdwg.mxu0
  %3775 = vmatpush.msra.mxu0 %v3274
  %3776 = vmatpush.msra.mxu0 %v3261
  %3777 = vmatpush.msra.mxu0 %v3248
  %3778 = vmatpush.msra.mxu0 %v3235
  %3779 = vmatpush.msra.mxu0 %v3222
  %3780 = vmatpush.msra.mxu0 %v3209
  %3781 = vmatpush.msra.mxu0 %v3196
  %3782 = vmatpush.msra.mxu0 %v3183
  %3783 = vmatpush.msra.mxu0 %v3170
  %3784 = vmatpush.msra.mxu0 %v3157
  %3785 = vmatpush.msra.mxu0 %v3144
  %3786 = vmatpush.msra.mxu0 %v3131
  %3787 = vmatpush.msra.mxu0 %v3118
  %3788 = vmatpush.msra.mxu0 %v3105
  %3789 = vmatpush.msra.mxu0 %v3092
  %3790 = vmatpush.msra.mxu0 %v3079
  %3791 = vmatmul.f32.gmra.mxu0 %v21
  %v3792 = vpop.f32.mrf.mxu0
  %v3793 = vadd.f32 %v3773, %v3792
  %3794 = vdwg.mxu0
  %v3795 = vmax.f32 %v2845, %v3313
  %v3796 = vmax.f32 %v2846, %v3353
  %v3797 = vmax.f32 %v2847, %v3393
  %v3798 = vmax.f32 %v2848, %v3433
  %v3799 = vmax.f32 %v2849, %v3473
  %v3800 = vmax.f32 %v2850, %v3513
  %v3801 = vmax.f32 %v2851, %v3553
  %v3802 = vmax.f32 %v2852, %v3593
  %v3803 = vmax.f32 %v2853, %v3633
  %v3804 = vmax.f32 %v2854, %v3673
  %v3805 = vmax.f32 %v2855, %v3713
  %v3806 = vmax.f32 %v2856, %v3753
  %v3807 = vmax.f32 %v2857, %v3793
  %v3808 = vld [vmem:[%s2] sm:$0xff]
  %v3809 = vld [vmem:[%s2 + $0x8] sm:$0x1f]
  %v3812 = vperm.slane %v3808, 0
  %v3813 = vperm.slane %v3808, 1
  %v3814 = vperm.slane %v3808, 2
  %v3815 = vperm.slane %v3808, 3
  %v3816 = vperm.slane %v3808, 4
  %v3817 = vperm.slane %v3808, 5
  %v3818 = vperm.slane %v3808, 6
  %v3819 = vperm.slane %v3808, 7
  %v3820 = vperm.slane %v3809, 0
  %v3821 = vperm.slane %v3809, 1
  %v3822 = vperm.slane %v3809, 2
  %v3823 = vperm.slane %v3809, 3
  %v3824 = vperm.slane %v3809, 4
  %v3838 = vadd.f32 %v3795, %v3812
  %v3839 = vadd.f32 %v3796, %v3813
  %v3840 = vadd.f32 %v3797, %v3814
  %v3841 = vadd.f32 %v3798, %v3815
  %v3842 = vadd.f32 %v3799, %v3816
  %v3843 = vadd.f32 %v3800, %v3817
  %v3844 = vadd.f32 %v3801, %v3818
  %v3845 = vadd.f32 %v3802, %v3819
  %v3846 = vadd.f32 %v3803, %v3820
  %v3847 = vadd.f32 %v3804, %v3821
  %v3848 = vadd.f32 %v3805, %v3822
  %v3849 = vadd.f32 %v3806, %v3823
  %v3850 = vadd.f32 %v3807, %v3824
  %v3851 = vmax.f32 %v3838, 0.0
  %v3852 = vmax.f32 %v3839, 0.0
  %v3853 = vmax.f32 %v3840, 0.0
  %v3854 = vmax.f32 %v3841, 0.0
  %v3855 = vmax.f32 %v3842, 0.0
  %v3856 = vmax.f32 %v3843, 0.0
  %v3857 = vmax.f32 %v3844, 0.0
  %v3858 = vmax.f32 %v3845, 0.0
  %v3859 = vmax.f32 %v3846, 0.0
  %v3860 = vmax.f32 %v3847, 0.0
  %v3861 = vmax.f32 %v3848, 0.0
  %v3862 = vmax.f32 %v3849, 0.0
  %v3863 = vmax.f32 %v3850, 0.0
  %v3864 = vld [vmem:[%s3] sm:$0xff]
  %v3865 = vld [vmem:[%s3 + $0x8] sm:$0xff]
  %v3866 = vld [vmem:[%s3 + $0x10] sm:$0xff]
  %v3867 = vld [vmem:[%s3 + $0x18] sm:$0xff]
  %v3868 = vld [vmem:[%s3 + $0x20] sm:$0xff]
  %v3869 = vld [vmem:[%s3 + $0x28] sm:$0xff]
  %v3870 = vld [vmem:[%s3 + $0x30] sm:$0xff]
  %v3871 = vld [vmem:[%s3 + $0x38] sm:$0xff]
  %v3872 = vld [vmem:[%s3 + $0x40] sm:$0xff]
  %v3873 = vld [vmem:[%s3 + $0x48] sm:$0xff]
  %v3874 = vld [vmem:[%s3 + $0x50] sm:$0xff]
  %v3875 = vld [vmem:[%s3 + $0x58] sm:$0xff]
  %v3876 = vld [vmem:[%s3 + $0x60] sm:$0xff]
  %v3877 = vld [vmem:[%s3 + $0x68] sm:$0xff]
  %v3878 = vld [vmem:[%s3 + $0x70] sm:$0xff]
  %v3879 = vld [vmem:[%s3 + $0x78] sm:$0xff]
  %v3880 = vld [vmem:[%s3 + $0x80] sm:$0xff]
  %v3881 = vld [vmem:[%s3 + $0x88] sm:$0xff]
  %v3882 = vld [vmem:[%s3 + $0x90] sm:$0xff]
  %v3883 = vld [vmem:[%s3 + $0x98] sm:$0xff]
  %v3884 = vld [vmem:[%s3 + $0xa0] sm:$0xff]
  %v3885 = vld [vmem:[%s3 + $0xa8] sm:$0xff]
  %v3886 = vld [vmem:[%s3 + $0xb0] sm:$0xff]
  %v3887 = vld [vmem:[%s3 + $0xb8] sm:$0xff]
  %v3888 = vld [vmem:[%s3 + $0xc0] sm:$0xff]
  %v3889 = vld [vmem:[%s3 + $0xc8] sm:$0xff]
  %v3890 = vld [vmem:[%s3 + $0xd0] sm:$0xff]
  %v3891 = vld [vmem:[%s3 + $0xd8] sm:$0xff]
  %v3892 = vld [vmem:[%s3 + $0xe0] sm:$0xff]
  %v3893 = vld [vmem:[%s3 + $0xe8] sm:$0xff]
  %v3894 = vld [vmem:[%s3 + $0xf0] sm:$0xff]
  %v3895 = vld [vmem:[%s3 + $0xf8] sm:$0xff]
  %v3896 = vld [vmem:[%s3 + $0x100] sm:$0xff]
  %v3897 = vld [vmem:[%s3 + $0x108] sm:$0xff]
  %v3898 = vld [vmem:[%s3 + $0x110] sm:$0xff]
  %v3899 = vld [vmem:[%s3 + $0x118] sm:$0xff]
  %v3900 = vld [vmem:[%s3 + $0x120] sm:$0xff]
  %v3901 = vld [vmem:[%s3 + $0x128] sm:$0xff]
  %v3902 = vld [vmem:[%s3 + $0x130] sm:$0xff]
  %v3903 = vld [vmem:[%s3 + $0x138] sm:$0xff]
  %v3904 = vld [vmem:[%s3 + $0x140] sm:$0xff]
  %v3905 = vld [vmem:[%s3 + $0x148] sm:$0xff]
  %v3906 = vld [vmem:[%s3 + $0x150] sm:$0xff]
  %v3907 = vld [vmem:[%s3 + $0x158] sm:$0xff]
  %v3908 = vld [vmem:[%s3 + $0x160] sm:$0xff]
  %v3909 = vld [vmem:[%s3 + $0x168] sm:$0xff]
  %v3910 = vld [vmem:[%s3 + $0x170] sm:$0xff]
  %v3911 = vld [vmem:[%s3 + $0x178] sm:$0xff]
  %v3912 = vld [vmem:[%s3 + $0x180] sm:$0xff]
  %v3913 = vld [vmem:[%s3 + $0x188] sm:$0xff]
  %v3914 = vld [vmem:[%s3 + $0x190] sm:$0xff]
  %v3915 = vld [vmem:[%s3 + $0x198] sm:$0xff]
  %v3916 = vld [vmem:[%s3 + $0x1a0] sm:$0xff]
  %v3917 = vld [vmem:[%s3 + $0x1a8] sm:$0xff]
  %v3918 = vld [vmem:[%s3 + $0x1b0] sm:$0xff]
  %v3919 = vld [vmem:[%s3 + $0x1b8] sm:$0xff]
  %v3920 = vld [vmem:[%s3 + $0x1c0] sm:$0xff]
  %v3921 = vld [vmem:[%s3 + $0x1c8] sm:$0xff]
  %v3922 = vld [vmem:[%s3 + $0x1d0] sm:$0xff]
  %v3923 = vld [vmem:[%s3 + $0x1d8] sm:$0xff]
  %v3924 = vld [vmem:[%s3 + $0x1e0] sm:$0xff]
  %v3925 = vld [vmem:[%s3 + $0x1e8] sm:$0xff]
  %v3926 = vld [vmem:[%s3 + $0x1f0] sm:$0xff]
  %v3927 = vld [vmem:[%s3 + $0x1f8] sm:$0xff]
  %v3928 = vld [vmem:[%s3 + $0x200] sm:$0xff]
  %v3929 = vld [vmem:[%s3 + $0x208] sm:$0xff]
  %v3930 = vld [vmem:[%s3 + $0x210] sm:$0xff]
  %v3931 = vld [vmem:[%s3 + $0x218] sm:$0xff]
  %v3932 = vld [vmem:[%s3 + $0x220] sm:$0xff]
  %v3933 = vld [vmem:[%s3 + $0x228] sm:$0xff]
  %v3934 = vld [vmem:[%s3 + $0x230] sm:$0xff]
  %v3935 = vld [vmem:[%s3 + $0x238] sm:$0xff]
  %v3936 = vld [vmem:[%s3 + $0x240] sm:$0xff]
  %v3937 = vld [vmem:[%s3 + $0x248] sm:$0xff]
  %v3938 = vld [vmem:[%s3 + $0x250] sm:$0xff]
  %v3939 = vld [vmem:[%s3 + $0x258] sm:$0xff]
  %v3940 = vld [vmem:[%s3 + $0x260] sm:$0xff]
  %v3941 = vld [vmem:[%s3 + $0x268] sm:$0xff]
  %v3942 = vld [vmem:[%s3 + $0x270] sm:$0xff]
  %v3943 = vld [vmem:[%s3 + $0x278] sm:$0xff]
  %v3944 = vld [vmem:[%s3 + $0x280] sm:$0xff]
  %v3945 = vld [vmem:[%s3 + $0x288] sm:$0xff]
  %v3946 = vld [vmem:[%s3 + $0x290] sm:$0xff]
  %v3947 = vld [vmem:[%s3 + $0x298] sm:$0xff]
  %v3948 = vld [vmem:[%s3 + $0x2a0] sm:$0xff]
  %v3949 = vld [vmem:[%s3 + $0x2a8] sm:$0xff]
  %v3950 = vld [vmem:[%s3 + $0x2b0] sm:$0xff]
  %v3951 = vld [vmem:[%s3 + $0x2b8] sm:$0xff]
  %v3952 = vld [vmem:[%s3 + $0x2c0] sm:$0xff]
  %v3953 = vld [vmem:[%s3 + $0x2c8] sm:$0xff]
  %v3954 = vld [vmem:[%s3 + $0x2d0] sm:$0xff]
  %v3955 = vld [vmem:[%s3 + $0x2d8] sm:$0xff]
  %v3956 = vld [vmem:[%s3 + $0x2e0] sm:$0xff]
  %v3957 = vld [vmem:[%s3 + $0x2e8] sm:$0xff]
  %v3958 = vld [vmem:[%s3 + $0x2f0] sm:$0xff]
  %v3959 = vld [vmem:[%s3 + $0x2f8] sm:$0xff]
  %v3960 = vld [vmem:[%s3 + $0x300] sm:$0xff]
  %v3961 = vld [vmem:[%s3 + $0x308] sm:$0xff]
  %v3962 = vld [vmem:[%s3 + $0x310] sm:$0xff]
  %v3963 = vld [vmem:[%s3 + $0x318] sm:$0xff]
  %v3964 = vld [vmem:[%s3 + $0x320] sm:$0xff]
  %v3965 = vld [vmem:[%s3 + $0x328] sm:$0xff]
  %v3966 = vld [vmem:[%s3 + $0x330] sm:$0xff]
  %v3967 = vld [vmem:[%s3 + $0x338] sm:$0xff]
  %v3968 = vld [vmem:[%s3 + $0x340] sm:$0xff]
  %v3969 = vld [vmem:[%s3 + $0x348] sm:$0xff]
  %v3970 = vld [vmem:[%s3 + $0x350] sm:$0xff]
  %v3971 = vld [vmem:[%s3 + $0x358] sm:$0xff]
  %v3972 = vld [vmem:[%s3 + $0x360] sm:$0xff]
  %v3973 = vld [vmem:[%s3 + $0x368] sm:$0xff]
  %v3974 = vld [vmem:[%s3 + $0x370] sm:$0xff]
  %v3975 = vld [vmem:[%s3 + $0x378] sm:$0xff]
  %v3976 = vld [vmem:[%s3 + $0x380] sm:$0xff]
  %v3977 = vld [vmem:[%s3 + $0x388] sm:$0xff]
  %v3978 = vld [vmem:[%s3 + $0x390] sm:$0xff]
  %v3979 = vld [vmem:[%s3 + $0x398] sm:$0xff]
  %v3980 = vld [vmem:[%s3 + $0x3a0] sm:$0xff]
  %v3981 = vld [vmem:[%s3 + $0x3a8] sm:$0xff]
  %v3982 = vld [vmem:[%s3 + $0x3b0] sm:$0xff]
  %v3983 = vld [vmem:[%s3 + $0x3b8] sm:$0xff]
  %v3984 = vld [vmem:[%s3 + $0x3c0] sm:$0xff]
  %v3985 = vld [vmem:[%s3 + $0x3c8] sm:$0xff]
  %v3986 = vld [vmem:[%s3 + $0x3d0] sm:$0xff]
  %v3987 = vld [vmem:[%s3 + $0x3d8] sm:$0xff]
  %v3988 = vld [vmem:[%s3 + $0x3e0] sm:$0xff]
  %v3989 = vld [vmem:[%s3 + $0x3e8] sm:$0xff]
  %v3990 = vld [vmem:[%s3 + $0x3f0] sm:$0xff]
  %v3991 = vld [vmem:[%s3 + $0x3f8] sm:$0xff]
  %v3992 = vld [vmem:[%s3 + $0x400] sm:$0xff]
  %v3993 = vld [vmem:[%s3 + $0x408] sm:$0xff]
  %v3994 = vld [vmem:[%s3 + $0x410] sm:$0xff]
  %v3995 = vld [vmem:[%s3 + $0x418] sm:$0xff]
  %v3996 = vld [vmem:[%s3 + $0x420] sm:$0xff]
  %v3997 = vld [vmem:[%s3 + $0x428] sm:$0xff]
  %v3998 = vld [vmem:[%s3 + $0x430] sm:$0xff]
  %v3999 = vld [vmem:[%s3 + $0x438] sm:$0xff]
  %v4000 = vld [vmem:[%s3 + $0x440] sm:$0xff]
  %v4001 = vld [vmem:[%s3 + $0x448] sm:$0xff]
  %v4002 = vld [vmem:[%s3 + $0x450] sm:$0xff]
  %v4003 = vld [vmem:[%s3 + $0x458] sm:$0xff]
  %v4004 = vld [vmem:[%s3 + $0x460] sm:$0xff]
  %v4005 = vld [vmem:[%s3 + $0x468] sm:$0xff]
  %v4006 = vld [vmem:[%s3 + $0x470] sm:$0xff]
  %v4007 = vld [vmem:[%s3 + $0x478] sm:$0xff]
  %v4008 = vld [vmem:[%s3 + $0x480] sm:$0xff]
  %v4009 = vld [vmem:[%s3 + $0x488] sm:$0xff]
  %v4010 = vld [vmem:[%s3 + $0x490] sm:$0xff]
  %v4011 = vld [vmem:[%s3 + $0x498] sm:$0xff]
  %v4012 = vld [vmem:[%s3 + $0x4a0] sm:$0xff]
  %v4013 = vld [vmem:[%s3 + $0x4a8] sm:$0xff]
  %v4014 = vld [vmem:[%s3 + $0x4b0] sm:$0xff]
  %v4015 = vld [vmem:[%s3 + $0x4b8] sm:$0xff]
  %v4016 = vld [vmem:[%s3 + $0x4c0] sm:$0xff]
  %v4017 = vld [vmem:[%s3 + $0x4c8] sm:$0xff]
  %v4018 = vld [vmem:[%s3 + $0x4d0] sm:$0xff]
  %v4019 = vld [vmem:[%s3 + $0x4d8] sm:$0xff]
  %v4020 = vld [vmem:[%s3 + $0x4e0] sm:$0xff]
  %v4021 = vld [vmem:[%s3 + $0x4e8] sm:$0xff]
  %v4022 = vld [vmem:[%s3 + $0x4f0] sm:$0xff]
  %v4023 = vld [vmem:[%s3 + $0x4f8] sm:$0xff]
  %v4024 = vld [vmem:[%s3 + $0x500] sm:$0xff]
  %v4025 = vld [vmem:[%s3 + $0x508] sm:$0xff]
  %v4026 = vld [vmem:[%s3 + $0x510] sm:$0xff]
  %v4027 = vld [vmem:[%s3 + $0x518] sm:$0xff]
  %v4028 = vld [vmem:[%s3 + $0x520] sm:$0xff]
  %v4029 = vld [vmem:[%s3 + $0x528] sm:$0xff]
  %v4030 = vld [vmem:[%s3 + $0x530] sm:$0xff]
  %v4031 = vld [vmem:[%s3 + $0x538] sm:$0xff]
  %v4032 = vld [vmem:[%s3 + $0x540] sm:$0xff]
  %v4033 = vld [vmem:[%s3 + $0x548] sm:$0xff]
  %v4034 = vld [vmem:[%s3 + $0x550] sm:$0xff]
  %v4035 = vld [vmem:[%s3 + $0x558] sm:$0xff]
  %v4036 = vld [vmem:[%s3 + $0x560] sm:$0xff]
  %v4037 = vld [vmem:[%s3 + $0x568] sm:$0xff]
  %v4038 = vld [vmem:[%s3 + $0x570] sm:$0xff]
  %v4039 = vld [vmem:[%s3 + $0x578] sm:$0xff]
  %v4040 = vld [vmem:[%s3 + $0x580] sm:$0xff]
  %v4041 = vld [vmem:[%s3 + $0x588] sm:$0xff]
  %v4042 = vld [vmem:[%s3 + $0x590] sm:$0xff]
  %v4043 = vld [vmem:[%s3 + $0x598] sm:$0xff]
  %v4044 = vld [vmem:[%s3 + $0x5a0] sm:$0xff]
  %v4045 = vld [vmem:[%s3 + $0x5a8] sm:$0xff]
  %v4046 = vld [vmem:[%s3 + $0x5b0] sm:$0xff]
  %v4047 = vld [vmem:[%s3 + $0x5b8] sm:$0xff]
  %v4048 = vld [vmem:[%s3 + $0x5c0] sm:$0xff]
  %v4049 = vld [vmem:[%s3 + $0x5c8] sm:$0xff]
  %v4050 = vld [vmem:[%s3 + $0x5d0] sm:$0xff]
  %v4051 = vld [vmem:[%s3 + $0x5d8] sm:$0xff]
  %v4052 = vld [vmem:[%s3 + $0x5e0] sm:$0xff]
  %v4053 = vld [vmem:[%s3 + $0x5e8] sm:$0xff]
  %v4054 = vld [vmem:[%s3 + $0x5f0] sm:$0xff]
  %v4055 = vld [vmem:[%s3 + $0x5f8] sm:$0xff]
  %v4056 = vld [vmem:[%s3 + $0x600] sm:$0xff]
  %v4057 = vld [vmem:[%s3 + $0x608] sm:$0xff]
  %v4058 = vld [vmem:[%s3 + $0x610] sm:$0xff]
  %v4059 = vld [vmem:[%s3 + $0x618] sm:$0xff]
  %v4060 = vld [vmem:[%s4] sm:$0x1]
  %v4062 = vperm.slane %v4060, 0
  %vm4064 = vcmask 261120
  %v4066 = vsel %vm4064, %v3863, 0
  %4068 = vmatpush.msra.mxu0 %v3879
  %4069 = vmatpush.msra.mxu0 %v3878
  %4070 = vmatpush.msra.mxu0 %v3877
  %4071 = vmatpush.msra.mxu0 %v3876
  %4072 = vmatpush.msra.mxu0 %v3875
  %4073 = vmatpush.msra.mxu0 %v3874
  %4074 = vmatpush.msra.mxu0 %v3873
  %4075 = vmatpush.msra.mxu0 %v3872
  %4076 = vmatpush.msra.mxu0 %v3871
  %4077 = vmatpush.msra.mxu0 %v3870
  %4078 = vmatpush.msra.mxu0 %v3869
  %4079 = vmatpush.msra.mxu0 %v3868
  %4080 = vmatpush.msra.mxu0 %v3867
  %4081 = vmatpush.msra.mxu0 %v3866
  %4082 = vmatpush.msra.mxu0 %v3865
  %4083 = vmatpush.msra.mxu0 %v3864
  %4084 = vmatmul.f32.gmra.mxu0 %v3851
  %v4085 = vpop.f32.mrf.mxu0
  %v4086 = vadd.f32 %v4062, %v4085
  %4087 = vdwg.mxu0
  %4088 = vmatpush.msra.mxu0 %v3895
  %4089 = vmatpush.msra.mxu0 %v3894
  %4090 = vmatpush.msra.mxu0 %v3893
  %4091 = vmatpush.msra.mxu0 %v3892
  %4092 = vmatpush.msra.mxu0 %v3891
  %4093 = vmatpush.msra.mxu0 %v3890
  %4094 = vmatpush.msra.mxu0 %v3889
  %4095 = vmatpush.msra.mxu0 %v3888
  %4096 = vmatpush.msra.mxu0 %v3887
  %4097 = vmatpush.msra.mxu0 %v3886
  %4098 = vmatpush.msra.mxu0 %v3885
  %4099 = vmatpush.msra.mxu0 %v3884
  %4100 = vmatpush.msra.mxu0 %v3883
  %4101 = vmatpush.msra.mxu0 %v3882
  %4102 = vmatpush.msra.mxu0 %v3881
  %4103 = vmatpush.msra.mxu0 %v3880
  %4104 = vmatmul.f32.gmra.mxu0 %v3852
  %v4105 = vpop.f32.mrf.mxu0
  %v4106 = vadd.f32 %v4086, %v4105
  %4107 = vdwg.mxu0
  %4108 = vmatpush.msra.mxu0 %v3911
  %4109 = vmatpush.msra.mxu0 %v3910
  %4110 = vmatpush.msra.mxu0 %v3909
  %4111 = vmatpush.msra.mxu0 %v3908
  %4112 = vmatpush.msra.mxu0 %v3907
  %4113 = vmatpush.msra.mxu0 %v3906
  %4114 = vmatpush.msra.mxu0 %v3905
  %4115 = vmatpush.msra.mxu0 %v3904
  %4116 = vmatpush.msra.mxu0 %v3903
  %4117 = vmatpush.msra.mxu0 %v3902
  %4118 = vmatpush.msra.mxu0 %v3901
  %4119 = vmatpush.msra.mxu0 %v3900
  %4120 = vmatpush.msra.mxu0 %v3899
  %4121 = vmatpush.msra.mxu0 %v3898
  %4122 = vmatpush.msra.mxu0 %v3897
  %4123 = vmatpush.msra.mxu0 %v3896
  %4124 = vmatmul.f32.gmra.mxu0 %v3853
  %v4125 = vpop.f32.mrf.mxu0
  %v4126 = vadd.f32 %v4106, %v4125
  %4127 = vdwg.mxu0
  %4128 = vmatpush.msra.mxu0 %v3927
  %4129 = vmatpush.msra.mxu0 %v3926
  %4130 = vmatpush.msra.mxu0 %v3925
  %4131 = vmatpush.msra.mxu0 %v3924
  %4132 = vmatpush.msra.mxu0 %v3923
  %4133 = vmatpush.msra.mxu0 %v3922
  %4134 = vmatpush.msra.mxu0 %v3921
  %4135 = vmatpush.msra.mxu0 %v3920
  %4136 = vmatpush.msra.mxu0 %v3919
  %4137 = vmatpush.msra.mxu0 %v3918
  %4138 = vmatpush.msra.mxu0 %v3917
  %4139 = vmatpush.msra.mxu0 %v3916
  %4140 = vmatpush.msra.mxu0 %v3915
  %4141 = vmatpush.msra.mxu0 %v3914
  %4142 = vmatpush.msra.mxu0 %v3913
  %4143 = vmatpush.msra.mxu0 %v3912
  %4144 = vmatmul.f32.gmra.mxu0 %v3854
  %v4145 = vpop.f32.mrf.mxu0
  %v4146 = vadd.f32 %v4126, %v4145
  %4147 = vdwg.mxu0
  %4148 = vmatpush.msra.mxu0 %v3943
  %4149 = vmatpush.msra.mxu0 %v3942
  %4150 = vmatpush.msra.mxu0 %v3941
  %4151 = vmatpush.msra.mxu0 %v3940
  %4152 = vmatpush.msra.mxu0 %v3939
  %4153 = vmatpush.msra.mxu0 %v3938
  %4154 = vmatpush.msra.mxu0 %v3937
  %4155 = vmatpush.msra.mxu0 %v3936
  %4156 = vmatpush.msra.mxu0 %v3935
  %4157 = vmatpush.msra.mxu0 %v3934
  %4158 = vmatpush.msra.mxu0 %v3933
  %4159 = vmatpush.msra.mxu0 %v3932
  %4160 = vmatpush.msra.mxu0 %v3931
  %4161 = vmatpush.msra.mxu0 %v3930
  %4162 = vmatpush.msra.mxu0 %v3929
  %4163 = vmatpush.msra.mxu0 %v3928
  %4164 = vmatmul.f32.gmra.mxu0 %v3855
  %v4165 = vpop.f32.mrf.mxu0
  %v4166 = vadd.f32 %v4146, %v4165
  %4167 = vdwg.mxu0
  %4168 = vmatpush.msra.mxu0 %v3959
  %4169 = vmatpush.msra.mxu0 %v3958
  %4170 = vmatpush.msra.mxu0 %v3957
  %4171 = vmatpush.msra.mxu0 %v3956
  %4172 = vmatpush.msra.mxu0 %v3955
  %4173 = vmatpush.msra.mxu0 %v3954
  %4174 = vmatpush.msra.mxu0 %v3953
  %4175 = vmatpush.msra.mxu0 %v3952
  %4176 = vmatpush.msra.mxu0 %v3951
  %4177 = vmatpush.msra.mxu0 %v3950
  %4178 = vmatpush.msra.mxu0 %v3949
  %4179 = vmatpush.msra.mxu0 %v3948
  %4180 = vmatpush.msra.mxu0 %v3947
  %4181 = vmatpush.msra.mxu0 %v3946
  %4182 = vmatpush.msra.mxu0 %v3945
  %4183 = vmatpush.msra.mxu0 %v3944
  %4184 = vmatmul.f32.gmra.mxu0 %v3856
  %v4185 = vpop.f32.mrf.mxu0
  %v4186 = vadd.f32 %v4166, %v4185
  %4187 = vdwg.mxu0
  %4188 = vmatpush.msra.mxu0 %v3975
  %4189 = vmatpush.msra.mxu0 %v3974
  %4190 = vmatpush.msra.mxu0 %v3973
  %4191 = vmatpush.msra.mxu0 %v3972
  %4192 = vmatpush.msra.mxu0 %v3971
  %4193 = vmatpush.msra.mxu0 %v3970
  %4194 = vmatpush.msra.mxu0 %v3969
  %4195 = vmatpush.msra.mxu0 %v3968
  %4196 = vmatpush.msra.mxu0 %v3967
  %4197 = vmatpush.msra.mxu0 %v3966
  %4198 = vmatpush.msra.mxu0 %v3965
  %4199 = vmatpush.msra.mxu0 %v3964
  %4200 = vmatpush.msra.mxu0 %v3963
  %4201 = vmatpush.msra.mxu0 %v3962
  %4202 = vmatpush.msra.mxu0 %v3961
  %4203 = vmatpush.msra.mxu0 %v3960
  %4204 = vmatmul.f32.gmra.mxu0 %v3857
  %v4205 = vpop.f32.mrf.mxu0
  %v4206 = vadd.f32 %v4186, %v4205
  %4207 = vdwg.mxu0
  %4208 = vmatpush.msra.mxu0 %v3991
  %4209 = vmatpush.msra.mxu0 %v3990
  %4210 = vmatpush.msra.mxu0 %v3989
  %4211 = vmatpush.msra.mxu0 %v3988
  %4212 = vmatpush.msra.mxu0 %v3987
  %4213 = vmatpush.msra.mxu0 %v3986
  %4214 = vmatpush.msra.mxu0 %v3985
  %4215 = vmatpush.msra.mxu0 %v3984
  %4216 = vmatpush.msra.mxu0 %v3983
  %4217 = vmatpush.msra.mxu0 %v3982
  %4218 = vmatpush.msra.mxu0 %v3981
  %4219 = vmatpush.msra.mxu0 %v3980
  %4220 = vmatpush.msra.mxu0 %v3979
  %4221 = vmatpush.msra.mxu0 %v3978
  %4222 = vmatpush.msra.mxu0 %v3977
  %4223 = vmatpush.msra.mxu0 %v3976
  %4224 = vmatmul.f32.gmra.mxu0 %v3858
  %v4225 = vpop.f32.mrf.mxu0
  %v4226 = vadd.f32 %v4206, %v4225
  %4227 = vdwg.mxu0
  %4228 = vmatpush.msra.mxu0 %v4007
  %4229 = vmatpush.msra.mxu0 %v4006
  %4230 = vmatpush.msra.mxu0 %v4005
  %4231 = vmatpush.msra.mxu0 %v4004
  %4232 = vmatpush.msra.mxu0 %v4003
  %4233 = vmatpush.msra.mxu0 %v4002
  %4234 = vmatpush.msra.mxu0 %v4001
  %4235 = vmatpush.msra.mxu0 %v4000
  %4236 = vmatpush.msra.mxu0 %v3999
  %4237 = vmatpush.msra.mxu0 %v3998
  %4238 = vmatpush.msra.mxu0 %v3997
  %4239 = vmatpush.msra.mxu0 %v3996
  %4240 = vmatpush.msra.mxu0 %v3995
  %4241 = vmatpush.msra.mxu0 %v3994
  %4242 = vmatpush.msra.mxu0 %v3993
  %4243 = vmatpush.msra.mxu0 %v3992
  %4244 = vmatmul.f32.gmra.mxu0 %v3859
  %v4245 = vpop.f32.mrf.mxu0
  %v4246 = vadd.f32 %v4226, %v4245
  %4247 = vdwg.mxu0
  %4248 = vmatpush.msra.mxu0 %v4023
  %4249 = vmatpush.msra.mxu0 %v4022
  %4250 = vmatpush.msra.mxu0 %v4021
  %4251 = vmatpush.msra.mxu0 %v4020
  %4252 = vmatpush.msra.mxu0 %v4019
  %4253 = vmatpush.msra.mxu0 %v4018
  %4254 = vmatpush.msra.mxu0 %v4017
  %4255 = vmatpush.msra.mxu0 %v4016
  %4256 = vmatpush.msra.mxu0 %v4015
  %4257 = vmatpush.msra.mxu0 %v4014
  %4258 = vmatpush.msra.mxu0 %v4013
  %4259 = vmatpush.msra.mxu0 %v4012
  %4260 = vmatpush.msra.mxu0 %v4011
  %4261 = vmatpush.msra.mxu0 %v4010
  %4262 = vmatpush.msra.mxu0 %v4009
  %4263 = vmatpush.msra.mxu0 %v4008
  %4264 = vmatmul.f32.gmra.mxu0 %v3860
  %v4265 = vpop.f32.mrf.mxu0
  %v4266 = vadd.f32 %v4246, %v4265
  %4267 = vdwg.mxu0
  %4268 = vmatpush.msra.mxu0 %v4039
  %4269 = vmatpush.msra.mxu0 %v4038
  %4270 = vmatpush.msra.mxu0 %v4037
  %4271 = vmatpush.msra.mxu0 %v4036
  %4272 = vmatpush.msra.mxu0 %v4035
  %4273 = vmatpush.msra.mxu0 %v4034
  %4274 = vmatpush.msra.mxu0 %v4033
  %4275 = vmatpush.msra.mxu0 %v4032
  %4276 = vmatpush.msra.mxu0 %v4031
  %4277 = vmatpush.msra.mxu0 %v4030
  %4278 = vmatpush.msra.mxu0 %v4029
  %4279 = vmatpush.msra.mxu0 %v4028
  %4280 = vmatpush.msra.mxu0 %v4027
  %4281 = vmatpush.msra.mxu0 %v4026
  %4282 = vmatpush.msra.mxu0 %v4025
  %4283 = vmatpush.msra.mxu0 %v4024
  %4284 = vmatmul.f32.gmra.mxu0 %v3861
  %v4285 = vpop.f32.mrf.mxu0
  %v4286 = vadd.f32 %v4266, %v4285
  %4287 = vdwg.mxu0
  %4288 = vmatpush.msra.mxu0 %v4055
  %4289 = vmatpush.msra.mxu0 %v4054
  %4290 = vmatpush.msra.mxu0 %v4053
  %4291 = vmatpush.msra.mxu0 %v4052
  %4292 = vmatpush.msra.mxu0 %v4051
  %4293 = vmatpush.msra.mxu0 %v4050
  %4294 = vmatpush.msra.mxu0 %v4049
  %4295 = vmatpush.msra.mxu0 %v4048
  %4296 = vmatpush.msra.mxu0 %v4047
  %4297 = vmatpush.msra.mxu0 %v4046
  %4298 = vmatpush.msra.mxu0 %v4045
  %4299 = vmatpush.msra.mxu0 %v4044
  %4300 = vmatpush.msra.mxu0 %v4043
  %4301 = vmatpush.msra.mxu0 %v4042
  %4302 = vmatpush.msra.mxu0 %v4041
  %4303 = vmatpush.msra.mxu0 %v4040
  %4304 = vmatmul.f32.gmra.mxu0 %v3862
  %v4305 = vpop.f32.mrf.mxu0
  %v4306 = vadd.f32 %v4286, %v4305
  %4307 = vdwg.mxu0
  %4308 = vmatpush.msra.mxu0 0.0
  %4309 = vmatpush.msra.mxu0 0.0
  %4310 = vmatpush.msra.mxu0 0.0
  %4311 = vmatpush.msra.mxu0 0.0
  %4312 = vmatpush.msra.mxu0 0.0
  %4313 = vmatpush.msra.mxu0 0.0
  %4314 = vmatpush.msra.mxu0 0.0
  %4315 = vmatpush.msra.mxu0 0.0
  %4316 = vmatpush.msra.mxu0 0.0
  %4317 = vmatpush.msra.mxu0 0.0
  %4318 = vmatpush.msra.mxu0 0.0
  %4319 = vmatpush.msra.mxu0 0.0
  %4320 = vmatpush.msra.mxu0 %v4059
  %4321 = vmatpush.msra.mxu0 %v4058
  %4322 = vmatpush.msra.mxu0 %v4057
  %4323 = vmatpush.msra.mxu0 %v4056
  %4324 = vmatmul.f32.gmra.mxu0 %v4066
  %v4325 = vpop.f32.mrf.mxu0
  %v4326 = vadd.f32 %v4306, %v4325
  %4327 = vdwg.mxu0
  %4328 = vst [vmem:[%s5] sm:$0xff] %v4326
  // Predicated region
  $region22: #{cnn_forward.1} parent=0 // pred_check
    _
  $region23: #{cnn_forward.1} parent=0 // pred_check_branch
    %4330 = sbr.rel (0) target = $region25
  $region24: #{cnn_forward.1} parent=0 // pred_region
    _
  $region25: #{cnn_forward.1} parent=0 // pred_fallthru
    _
  // Predicated region
  $region26: #{cnn_forward.1} parent=0 // pred_check
    _
  $region27: #{cnn_forward.1} parent=0 // pred_check_branch
    %4332 = sbr.rel (0) target = $region29
  $region28: #{cnn_forward.1} parent=0 // pred_region
    _
  $region29: #{cnn_forward.1} parent=0 // pred_fallthru
    _

</llo_original>
